<compile_context>
chip_gen: v7x
topology: tpu7x:2x2x1
jax: 0.10.0
libtpu: 0.0.40
codegen_flags: <defaults>
</compile_context>

<pallas_src>
import jax
import jax.numpy as jnp
import numpy as np
from jax import lax
from jax.experimental import pallas as pl
from jax.experimental.pallas import tpu as pltpu


# ----------------------------- fused Pallas kernel -----------------------------

def _make_fused_kernel(N, D, H, W, Cin, Cmid, Cout):
    M = N * D * H                      # rows of every matmul
    WCi, WCm, WCo = W * Cin, W * Cmid, W * Cout
    eps = 1e-5

    def kernel(xp_ref, band1_ref, band2_ref, p1_ref, p2_ref, g1_ref, g2_ref,
               o_ref, y1pad_ref):
        # xp_ref:    (N, D+2, H+2, W*Cin)   pooled input, D/H zero-padded, (W,C) merged on lanes
        # band1_ref: (9, W*Cin,  W*Cmid)    banded conv1 weights, tap t = kd*3 + kh
        # band2_ref: (9, W*Cmid, W*Cout)    banded conv2 weights
        # p1/p2_ref: (3, W*C)               rows: bias, gamma, beta (tiled over W)
        # g1/g2_ref: (W*C, W*C)             per-channel group-average matrix
        # o_ref:     (N, D, H, W*Cout)
        # y1pad_ref: (N, D+2, H+2, W*Cmid)  VMEM scratch for the intermediate activation

        # ---------------- layer 1: conv (9 banded dots) + bias ----------------
        acc = jnp.zeros((M, WCm), jnp.float32)
        for t in range(9):
            kd, kh = t // 3, t % 3
            slab = xp_ref[:, kd:kd + D, kh:kh + H, :].reshape(M, WCi)
            acc = acc + jnp.dot(slab, band1_ref[t],
                                preferred_element_type=jnp.float32)
        acc = acc + p1_ref[0:1, :]

        # BatchNorm3d (training mode, biased var) + ReLU — one pass over acc.
        col_mean = jnp.sum(acc, axis=0, keepdims=True) * (1.0 / M)          # (1, W*Cmid)
        col_msq = jnp.sum(acc * acc, axis=0, keepdims=True) * (1.0 / M)
        mean = jnp.dot(col_mean, g1_ref[...], preferred_element_type=jnp.float32)
        msq = jnp.dot(col_msq, g1_ref[...], preferred_element_type=jnp.float32)
        var = msq - mean * mean
        y1 = (acc - mean) * (p1_ref[1:2, :] * lax.rsqrt(var + eps)) + p1_ref[2:3, :]
        y1 = jnp.maximum(y1, 0.0)

        # Stage the activation into the D/H-padded VMEM scratch (W padding is
        # already folded into the banded weights, so no lane-offset store needed).
        y1pad_ref[...] = jnp.zeros_like(y1pad_ref)
        y1pad_ref[:, 1:1 + D, 1:1 + H, :] = y1.reshape(N, D, H, WCm)

        # ---------------- layer 2: conv (9 banded dots) + bias ----------------
        acc2 = jnp.zeros((M, WCo), jnp.float32)
        for t in range(9):
            kd, kh = t // 3, t % 3
            slab = y1pad_ref[:, kd:kd + D, kh:kh + H, :].reshape(M, WCm)
            acc2 = acc2 + jnp.dot(slab, band2_ref[t],
                                  preferred_element_type=jnp.float32)
        acc2 = acc2 + p2_ref[0:1, :]

        col_mean = jnp.sum(acc2, axis=0, keepdims=True) * (1.0 / M)
        col_msq = jnp.sum(acc2 * acc2, axis=0, keepdims=True) * (1.0 / M)
        mean = jnp.dot(col_mean, g2_ref[...], preferred_element_type=jnp.float32)
        msq = jnp.dot(col_msq, g2_ref[...], preferred_element_type=jnp.float32)
        var = msq - mean * mean
        y2 = (acc2 - mean) * (p2_ref[1:2, :] * lax.rsqrt(var + eps)) + p2_ref[2:3, :]
        y2 = jnp.maximum(y2, 0.0)

        o_ref[...] = y2.reshape(N, D, H, WCo)

    return kernel


# ----------------------------- wrapper-side parameter prep -----------------------------

def _banded_weight(w_dhwio, W):
    # w_dhwio: (3, 3, 3, Ci, Co). Fold the kw tap + the W-axis zero padding into a banded
    # matrix so the conv becomes 9 dense matmuls (one per (kd, kh)).
    # band[kd*3+kh][wi*Ci+ci, wo*Co+co] = w[kd, kh, wi-wo+1, ci, co] if 0 <= wi-wo+1 <= 2 else 0
    kw = jnp.arange(3)[:, None, None]
    wi = jnp.arange(W)[None, :, None]
    wo = jnp.arange(W)[None, None, :]
    sel = (wi == wo + kw - 1).astype(w_dhwio.dtype)            # (3, W, W)
    band = jnp.einsum('kiw,dhkcm->dhicwm', sel, w_dhwio)        # (3,3,W,Ci,W,Co)
    Ci, Co = w_dhwio.shape[3], w_dhwio.shape[4]
    return band.reshape(9, W * Ci, W * Co)


def _group_avg_matrix(C, W):
    # (W*C, W*C): averages per-channel over the W column groups and broadcasts back tiled.
    return jnp.tile(jnp.eye(C, dtype=jnp.float32), (W, W)) / W


def _pack_affine(b, g, beta, W):
    # rows: conv bias, BN gamma, BN beta — each tiled over the W column groups.
    return jnp.stack([jnp.tile(b, W), jnp.tile(g, W), jnp.tile(beta, W)]).astype(jnp.float32)


# ----------------------------- public forward -----------------------------

def downblock_forward(x_ncdhw, params):
    N, Cin, D0, H0, W0 = x_ncdhw.shape
    D, H, W = D0 // 2, H0 // 2, W0 // 2
    Cmid = params["w1"].shape[-1]
    Cout = params["w2"].shape[-1]

    # MaxPool3d(2, 2) as a cheap XLA reduce_window on channels-last data
    # (matches PyTorch floor-and-drop behavior for the even spatial dims used here).
    x = jnp.transpose(x_ncdhw, (0, 2, 3, 4, 1))                     # NCDHW -> NDHWC
    pooled = lax.reduce_window(x, -jnp.inf, lax.max,
                               (1, 2, 2, 2, 1), (1, 2, 2, 2, 1), "VALID")

    # Pad D/H by 1 (W padding is folded into the banded weights) and merge (W, C)
    # onto the lane dim so every in-kernel operand is >= 32 lanes wide.
    xp = jnp.pad(pooled, ((0, 0), (1, 1), (1, 1), (0, 0), (0, 0)))
    xp = xp.reshape(N, D + 2, H + 2, W * Cin)

    band1 = _banded_weight(params["w1"], W)                         # (9, W*Cin,  W*Cmid)
    band2 = _banded_weight(params["w2"], W)                         # (9, W*Cmid, W*Cout)
    p1 = _pack_affine(params["b1"], params["g1"], params["beta1"], W)
    p2 = _pack_affine(params["b2"], params["g2"], params["beta2"], W)
    g1 = _group_avg_matrix(Cmid, W)
    g2 = _group_avg_matrix(Cout, W)

    kernel = _make_fused_kernel(N, D, H, W, Cin, Cmid, Cout)
    out = pl.pallas_call(
        kernel,
        out_shape=jax.ShapeDtypeStruct((N, D, H, W * Cout), jnp.float32),
        in_specs=[pl.BlockSpec(memory_space=pltpu.MemorySpace.VMEM) for _ in range(7)],
        out_specs=pl.BlockSpec(memory_space=pltpu.MemorySpace.VMEM),
        scratch_shapes=[pltpu.VMEM((N, D + 2, H + 2, W * Cmid), jnp.float32)],
    )(xp, band1, band2, p1, p2, g1, g2)

    out = out.reshape(N, D, H, W, Cout)
    return jnp.transpose(out, (0, 4, 1, 2, 3))                      # -> NCDHW


# ----------------------------- pure-JAX reference -----------------------------

def _bn_relu_ref(y, gamma, beta):
    mean = jnp.mean(y, axis=(0, 1, 2, 3), keepdims=True)
    var = jnp.mean((y - mean) ** 2, axis=(0, 1, 2, 3), keepdims=True)
    out = (y - mean) * (gamma / jnp.sqrt(var + 1e-5)) + beta
    return jnp.maximum(out, 0.0)


def downblock_reference(x_ncdhw, params):
    pooled = lax.reduce_window(x_ncdhw, -jnp.inf, lax.max,
                               (1, 1, 2, 2, 2), (1, 1, 2, 2, 2), "VALID")
    h = jnp.transpose(pooled, (0, 2, 3, 4, 1))
    dn = ("NDHWC", "DHWIO", "NDHWC")
    h = lax.conv_general_dilated(h, params["w1"], (1, 1, 1), [(1, 1)] * 3,
                                 dimension_numbers=dn,
                                 precision=lax.Precision.HIGHEST) + params["b1"]
    h = _bn_relu_ref(h, params["g1"], params["beta1"])
    h = lax.conv_general_dilated(h, params["w2"], (1, 1, 1), [(1, 1)] * 3,
                                 dimension_numbers=dn,
                                 precision=lax.Precision.HIGHEST) + params["b2"]
    h = _bn_relu_ref(h, params["g2"], params["beta2"])
    return jnp.transpose(h, (0, 4, 1, 2, 3))


# ----------------------------- main -----------------------------

if __name__ == "__main__":
    key = jax.random.PRNGKey(0)
    N, Cin, D, H, W = 2, 4, 16, 16, 16     # NCDHW input (Conv3d module)
    Cmid, Cout = 8, 8                      # mid_channel, out_channel
    ks = jax.random.split(key, 9)

    x = jax.random.normal(ks[0], (N, Cin, D, H, W), jnp.float32)
    params = dict(
        # conv weights stored as DHWIO (kd, kh, kw, Cin, Cout)
        w1=0.1 * jax.random.normal(ks[1], (3, 3, 3, Cin, Cmid), jnp.float32),
        b1=0.1 * jax.random.normal(ks[2], (Cmid,), jnp.float32),
        g1=1.0 + 0.1 * jax.random.normal(ks[3], (Cmid,), jnp.float32),
        beta1=0.1 * jax.random.normal(ks[4], (Cmid,), jnp.float32),
        w2=0.1 * jax.random.normal(ks[5], (3, 3, 3, Cmid, Cout), jnp.float32),
        b2=0.1 * jax.random.normal(ks[6], (Cout,), jnp.float32),
        g2=1.0 + 0.1 * jax.random.normal(ks[7], (Cout,), jnp.float32),
        beta2=0.1 * jax.random.normal(ks[8], (Cout,), jnp.float32),
    )

    out = jax.jit(downblock_forward)(x, params)
    out = jax.block_until_ready(out)

    # Kernel runs at DEFAULT MXU matmul precision (bf16 passes) per the perf review;
    # reference stays at HIGHEST, so allow a slightly looser tolerance.
    ref = downblock_reference(x, params)
    np.testing.assert_allclose(np.asarray(out), np.asarray(ref), rtol=2e-2, atol=2e-2)

    print("KERNEL_OK")
</pallas_src>

<mosaic_0001>
module attributes {stable_mosaic.version = 11 : i64} {
  func.func @kernel(%arg0: memref<2x10x10x32xf32, #tpu.memory_space<vmem>>, %arg1: memref<9x32x64xf32, #tpu.memory_space<vmem>>, %arg2: memref<9x64x64xf32, #tpu.memory_space<vmem>>, %arg3: memref<3x64xf32, #tpu.memory_space<vmem>>, %arg4: memref<3x64xf32, #tpu.memory_space<vmem>>, %arg5: memref<64x64xf32, #tpu.memory_space<vmem>>, %arg6: memref<64x64xf32, #tpu.memory_space<vmem>>, %arg7: memref<2x8x8x64xf32, #tpu.memory_space<vmem>>, %arg8: memref<2x10x10x64xf32, #tpu.memory_space<vmem>>) attributes {dimension_semantics = [], scalar_prefetch = 0 : i64, scratch_operands = 1 : i64, tpu.core_type = #tpu.core_type<tc>} {
    %cst = arith.constant 0.000000e+00 : f32
    %0 = vector.broadcast %cst : f32 to vector<128x64xf32>
    %c0 = arith.constant 0 : index
    %c0_0 = arith.constant 0 : index
    %c0_1 = arith.constant 0 : index
    %c0_2 = arith.constant 0 : index
    %1 = vector.load %arg0[%c0, %c0_0, %c0_1, %c0_2] : memref<2x10x10x32xf32, #tpu.memory_space<vmem>>, vector<2x8x8x32xf32>
    %2 = vector.shape_cast %1 : vector<2x8x8x32xf32> to vector<128x32xf32>
    %c0_3 = arith.constant 0 : index
    %c0_4 = arith.constant 0 : index
    %c0_5 = arith.constant 0 : index
    %3 = vector.load %arg1[%c0_3, %c0_4, %c0_5] : memref<9x32x64xf32, #tpu.memory_space<vmem>>, vector<1x32x64xf32>
    %4 = vector.shape_cast %3 : vector<1x32x64xf32> to vector<32x64xf32>
    %cst_6 = arith.constant dense<0.000000e+00> : vector<128x64xf32>
    %5 = tpu.matmul %2, %4, %cst_6 {dimension_numbers = #tpu.dot_dimension_numbers<[1], [0], [0], [1], [0, 0, 1, 1], [], []>} : vector<128x32xf32>, vector<32x64xf32>, vector<128x64xf32> -> vector<128x64xf32>
    %6 = arith.addf %0, %5 : vector<128x64xf32>
    %c0_7 = arith.constant 0 : index
    %c0_8 = arith.constant 0 : index
    %c1 = arith.constant 1 : index
    %c0_9 = arith.constant 0 : index
    %7 = vector.load %arg0[%c0_7, %c0_8, %c1, %c0_9] : memref<2x10x10x32xf32, #tpu.memory_space<vmem>>, vector<2x8x8x32xf32>
    %8 = vector.shape_cast %7 : vector<2x8x8x32xf32> to vector<128x32xf32>
    %c1_10 = arith.constant 1 : index
    %c0_11 = arith.constant 0 : index
    %c0_12 = arith.constant 0 : index
    %9 = vector.load %arg1[%c1_10, %c0_11, %c0_12] : memref<9x32x64xf32, #tpu.memory_space<vmem>>, vector<1x32x64xf32>
    %10 = vector.shape_cast %9 : vector<1x32x64xf32> to vector<32x64xf32>
    %cst_13 = arith.constant dense<0.000000e+00> : vector<128x64xf32>
    %11 = tpu.matmul %8, %10, %cst_13 {dimension_numbers = #tpu.dot_dimension_numbers<[1], [0], [0], [1], [0, 0, 1, 1], [], []>} : vector<128x32xf32>, vector<32x64xf32>, vector<128x64xf32> -> vector<128x64xf32>
    %12 = arith.addf %6, %11 : vector<128x64xf32>
    %c0_14 = arith.constant 0 : index
    %c0_15 = arith.constant 0 : index
    %c2 = arith.constant 2 : index
    %c0_16 = arith.constant 0 : index
    %13 = vector.load %arg0[%c0_14, %c0_15, %c2, %c0_16] : memref<2x10x10x32xf32, #tpu.memory_space<vmem>>, vector<2x8x8x32xf32>
    %14 = vector.shape_cast %13 : vector<2x8x8x32xf32> to vector<128x32xf32>
    %c2_17 = arith.constant 2 : index
    %c0_18 = arith.constant 0 : index
    %c0_19 = arith.constant 0 : index
    %15 = vector.load %arg1[%c2_17, %c0_18, %c0_19] : memref<9x32x64xf32, #tpu.memory_space<vmem>>, vector<1x32x64xf32>
    %16 = vector.shape_cast %15 : vector<1x32x64xf32> to vector<32x64xf32>
    %cst_20 = arith.constant dense<0.000000e+00> : vector<128x64xf32>
    %17 = tpu.matmul %14, %16, %cst_20 {dimension_numbers = #tpu.dot_dimension_numbers<[1], [0], [0], [1], [0, 0, 1, 1], [], []>} : vector<128x32xf32>, vector<32x64xf32>, vector<128x64xf32> -> vector<128x64xf32>
    %18 = arith.addf %12, %17 : vector<128x64xf32>
    %c0_21 = arith.constant 0 : index
    %c1_22 = arith.constant 1 : index
    %c0_23 = arith.constant 0 : index
    %c0_24 = arith.constant 0 : index
    %19 = vector.load %arg0[%c0_21, %c1_22, %c0_23, %c0_24] : memref<2x10x10x32xf32, #tpu.memory_space<vmem>>, vector<2x8x8x32xf32>
    %20 = vector.shape_cast %19 : vector<2x8x8x32xf32> to vector<128x32xf32>
    %c3 = arith.constant 3 : index
    %c0_25 = arith.constant 0 : index
    %c0_26 = arith.constant 0 : index
    %21 = vector.load %arg1[%c3, %c0_25, %c0_26] : memref<9x32x64xf32, #tpu.memory_space<vmem>>, vector<1x32x64xf32>
    %22 = vector.shape_cast %21 : vector<1x32x64xf32> to vector<32x64xf32>
    %cst_27 = arith.constant dense<0.000000e+00> : vector<128x64xf32>
    %23 = tpu.matmul %20, %22, %cst_27 {dimension_numbers = #tpu.dot_dimension_numbers<[1], [0], [0], [1], [0, 0, 1, 1], [], []>} : vector<128x32xf32>, vector<32x64xf32>, vector<128x64xf32> -> vector<128x64xf32>
    %24 = arith.addf %18, %23 : vector<128x64xf32>
    %c0_28 = arith.constant 0 : index
    %c1_29 = arith.constant 1 : index
    %c1_30 = arith.constant 1 : index
    %c0_31 = arith.constant 0 : index
    %25 = vector.load %arg0[%c0_28, %c1_29, %c1_30, %c0_31] : memref<2x10x10x32xf32, #tpu.memory_space<vmem>>, vector<2x8x8x32xf32>
    %26 = vector.shape_cast %25 : vector<2x8x8x32xf32> to vector<128x32xf32>
    %c4 = arith.constant 4 : index
    %c0_32 = arith.constant 0 : index
    %c0_33 = arith.constant 0 : index
    %27 = vector.load %arg1[%c4, %c0_32, %c0_33] : memref<9x32x64xf32, #tpu.memory_space<vmem>>, vector<1x32x64xf32>
    %28 = vector.shape_cast %27 : vector<1x32x64xf32> to vector<32x64xf32>
    %cst_34 = arith.constant dense<0.000000e+00> : vector<128x64xf32>
    %29 = tpu.matmul %26, %28, %cst_34 {dimension_numbers = #tpu.dot_dimension_numbers<[1], [0], [0], [1], [0, 0, 1, 1], [], []>} : vector<128x32xf32>, vector<32x64xf32>, vector<128x64xf32> -> vector<128x64xf32>
    %30 = arith.addf %24, %29 : vector<128x64xf32>
    %c0_35 = arith.constant 0 : index
    %c1_36 = arith.constant 1 : index
    %c2_37 = arith.constant 2 : index
    %c0_38 = arith.constant 0 : index
    %31 = vector.load %arg0[%c0_35, %c1_36, %c2_37, %c0_38] : memref<2x10x10x32xf32, #tpu.memory_space<vmem>>, vector<2x8x8x32xf32>
    %32 = vector.shape_cast %31 : vector<2x8x8x32xf32> to vector<128x32xf32>
    %c5 = arith.constant 5 : index
    %c0_39 = arith.constant 0 : index
    %c0_40 = arith.constant 0 : index
    %33 = vector.load %arg1[%c5, %c0_39, %c0_40] : memref<9x32x64xf32, #tpu.memory_space<vmem>>, vector<1x32x64xf32>
    %34 = vector.shape_cast %33 : vector<1x32x64xf32> to vector<32x64xf32>
    %cst_41 = arith.constant dense<0.000000e+00> : vector<128x64xf32>
    %35 = tpu.matmul %32, %34, %cst_41 {dimension_numbers = #tpu.dot_dimension_numbers<[1], [0], [0], [1], [0, 0, 1, 1], [], []>} : vector<128x32xf32>, vector<32x64xf32>, vector<128x64xf32> -> vector<128x64xf32>
    %36 = arith.addf %30, %35 : vector<128x64xf32>
    %c0_42 = arith.constant 0 : index
    %c2_43 = arith.constant 2 : index
    %c0_44 = arith.constant 0 : index
    %c0_45 = arith.constant 0 : index
    %37 = vector.load %arg0[%c0_42, %c2_43, %c0_44, %c0_45] : memref<2x10x10x32xf32, #tpu.memory_space<vmem>>, vector<2x8x8x32xf32>
    %38 = vector.shape_cast %37 : vector<2x8x8x32xf32> to vector<128x32xf32>
    %c6 = arith.constant 6 : index
    %c0_46 = arith.constant 0 : index
    %c0_47 = arith.constant 0 : index
    %39 = vector.load %arg1[%c6, %c0_46, %c0_47] : memref<9x32x64xf32, #tpu.memory_space<vmem>>, vector<1x32x64xf32>
    %40 = vector.shape_cast %39 : vector<1x32x64xf32> to vector<32x64xf32>
    %cst_48 = arith.constant dense<0.000000e+00> : vector<128x64xf32>
    %41 = tpu.matmul %38, %40, %cst_48 {dimension_numbers = #tpu.dot_dimension_numbers<[1], [0], [0], [1], [0, 0, 1, 1], [], []>} : vector<128x32xf32>, vector<32x64xf32>, vector<128x64xf32> -> vector<128x64xf32>
    %42 = arith.addf %36, %41 : vector<128x64xf32>
    %c0_49 = arith.constant 0 : index
    %c2_50 = arith.constant 2 : index
    %c1_51 = arith.constant 1 : index
    %c0_52 = arith.constant 0 : index
    %43 = vector.load %arg0[%c0_49, %c2_50, %c1_51, %c0_52] : memref<2x10x10x32xf32, #tpu.memory_space<vmem>>, vector<2x8x8x32xf32>
    %44 = vector.shape_cast %43 : vector<2x8x8x32xf32> to vector<128x32xf32>
    %c7 = arith.constant 7 : index
    %c0_53 = arith.constant 0 : index
    %c0_54 = arith.constant 0 : index
    %45 = vector.load %arg1[%c7, %c0_53, %c0_54] : memref<9x32x64xf32, #tpu.memory_space<vmem>>, vector<1x32x64xf32>
    %46 = vector.shape_cast %45 : vector<1x32x64xf32> to vector<32x64xf32>
    %cst_55 = arith.constant dense<0.000000e+00> : vector<128x64xf32>
    %47 = tpu.matmul %44, %46, %cst_55 {dimension_numbers = #tpu.dot_dimension_numbers<[1], [0], [0], [1], [0, 0, 1, 1], [], []>} : vector<128x32xf32>, vector<32x64xf32>, vector<128x64xf32> -> vector<128x64xf32>
    %48 = arith.addf %42, %47 : vector<128x64xf32>
    %c0_56 = arith.constant 0 : index
    %c2_57 = arith.constant 2 : index
    %c2_58 = arith.constant 2 : index
    %c0_59 = arith.constant 0 : index
    %49 = vector.load %arg0[%c0_56, %c2_57, %c2_58, %c0_59] : memref<2x10x10x32xf32, #tpu.memory_space<vmem>>, vector<2x8x8x32xf32>
    %50 = vector.shape_cast %49 : vector<2x8x8x32xf32> to vector<128x32xf32>
    %c8 = arith.constant 8 : index
    %c0_60 = arith.constant 0 : index
    %c0_61 = arith.constant 0 : index
    %51 = vector.load %arg1[%c8, %c0_60, %c0_61] : memref<9x32x64xf32, #tpu.memory_space<vmem>>, vector<1x32x64xf32>
    %52 = vector.shape_cast %51 : vector<1x32x64xf32> to vector<32x64xf32>
    %cst_62 = arith.constant dense<0.000000e+00> : vector<128x64xf32>
    %53 = tpu.matmul %50, %52, %cst_62 {dimension_numbers = #tpu.dot_dimension_numbers<[1], [0], [0], [1], [0, 0, 1, 1], [], []>} : vector<128x32xf32>, vector<32x64xf32>, vector<128x64xf32> -> vector<128x64xf32>
    %54 = arith.addf %48, %53 : vector<128x64xf32>
    %c0_63 = arith.constant 0 : index
    %c0_64 = arith.constant 0 : index
    %55 = vector.load %arg3[%c0_63, %c0_64] : memref<3x64xf32, #tpu.memory_space<vmem>>, vector<1x64xf32>
    %56 = vector.broadcast %55 : vector<1x64xf32> to vector<128x64xf32>
    %57 = arith.addf %54, %56 : vector<128x64xf32>
    %cst_65 = arith.constant dense<0.000000e+00> : vector<64xf32>
    %58 = vector.multi_reduction <add>, %57, %cst_65 [0] : vector<128x64xf32> to vector<64xf32>
    %59 = vector.shape_cast %58 : vector<64xf32> to vector<1x64xf32>
    %cst_66 = arith.constant 7.812500e-03 : f32
    %60 = vector.broadcast %cst_66 : f32 to vector<1x64xf32>
    %61 = arith.mulf %59, %60 : vector<1x64xf32>
    %62 = arith.mulf %57, %57 : vector<128x64xf32>
    %cst_67 = arith.constant dense<0.000000e+00> : vector<64xf32>
    %63 = vector.multi_reduction <add>, %62, %cst_67 [0] : vector<128x64xf32> to vector<64xf32>
    %64 = vector.shape_cast %63 : vector<64xf32> to vector<1x64xf32>
    %cst_68 = arith.constant 7.812500e-03 : f32
    %65 = vector.broadcast %cst_68 : f32 to vector<1x64xf32>
    %66 = arith.mulf %64, %65 : vector<1x64xf32>
    %c0_69 = arith.constant 0 : index
    %c0_70 = arith.constant 0 : index
    %67 = vector.load %arg5[%c0_69, %c0_70] : memref<64x64xf32, #tpu.memory_space<vmem>>, vector<64x64xf32>
    %cst_71 = arith.constant dense<0.000000e+00> : vector<1x64xf32>
    %68 = tpu.matmul %61, %67, %cst_71 {dimension_numbers = #tpu.dot_dimension_numbers<[1], [0], [0], [1], [0, 0, 1, 1], [], []>} : vector<1x64xf32>, vector<64x64xf32>, vector<1x64xf32> -> vector<1x64xf32>
    %c0_72 = arith.constant 0 : index
    %c0_73 = arith.constant 0 : index
    %69 = vector.load %arg5[%c0_72, %c0_73] : memref<64x64xf32, #tpu.memory_space<vmem>>, vector<64x64xf32>
    %cst_74 = arith.constant dense<0.000000e+00> : vector<1x64xf32>
    %70 = tpu.matmul %66, %69, %cst_74 {dimension_numbers = #tpu.dot_dimension_numbers<[1], [0], [0], [1], [0, 0, 1, 1], [], []>} : vector<1x64xf32>, vector<64x64xf32>, vector<1x64xf32> -> vector<1x64xf32>
    %71 = arith.mulf %68, %68 : vector<1x64xf32>
    %72 = arith.subf %70, %71 : vector<1x64xf32>
    %73 = vector.broadcast %68 : vector<1x64xf32> to vector<128x64xf32>
    %74 = arith.subf %57, %73 : vector<128x64xf32>
    %c1_75 = arith.constant 1 : index
    %c0_76 = arith.constant 0 : index
    %75 = vector.load %arg3[%c1_75, %c0_76] : memref<3x64xf32, #tpu.memory_space<vmem>>, vector<1x64xf32>
    %cst_77 = arith.constant 9.99999974E-6 : f32
    %76 = vector.broadcast %cst_77 : f32 to vector<1x64xf32>
    %77 = arith.addf %72, %76 : vector<1x64xf32>
    %78 = math.rsqrt %77 : vector<1x64xf32>
    %79 = arith.mulf %75, %78 : vector<1x64xf32>
    %80 = vector.broadcast %79 : vector<1x64xf32> to vector<128x64xf32>
    %81 = arith.mulf %74, %80 : vector<128x64xf32>
    %c2_78 = arith.constant 2 : index
    %c0_79 = arith.constant 0 : index
    %82 = vector.load %arg3[%c2_78, %c0_79] : memref<3x64xf32, #tpu.memory_space<vmem>>, vector<1x64xf32>
    %83 = vector.broadcast %82 : vector<1x64xf32> to vector<128x64xf32>
    %84 = arith.addf %81, %83 : vector<128x64xf32>
    %cst_80 = arith.constant 0.000000e+00 : f32
    %85 = vector.broadcast %cst_80 : f32 to vector<128x64xf32>
    %86 = arith.maximumf %84, %85 : vector<128x64xf32>
    %cst_81 = arith.constant 0.000000e+00 : f32
    %87 = vector.broadcast %cst_81 : f32 to vector<2x10x10x64xf32>
    %c0_82 = arith.constant 0 : index
    %c0_83 = arith.constant 0 : index
    %c0_84 = arith.constant 0 : index
    %c0_85 = arith.constant 0 : index
    %88 = vector.load %arg8[%c0_82, %c0_83, %c0_84, %c0_85] : memref<2x10x10x64xf32, #tpu.memory_space<vmem>>, vector<2x10x10x64xf32>
    tpu.vector_store %arg8[%c0_82, %c0_83, %c0_84, %c0_85], %87 {strides = array<i32>} : memref<2x10x10x64xf32, #tpu.memory_space<vmem>>, vector<2x10x10x64xf32>,
    %89 = vector.shape_cast %86 : vector<128x64xf32> to vector<2x8x8x64xf32>
    %c0_86 = arith.constant 0 : index
    %c1_87 = arith.constant 1 : index
    %c1_88 = arith.constant 1 : index
    %c0_89 = arith.constant 0 : index
    %90 = vector.load %arg8[%c0_86, %c1_87, %c1_88, %c0_89] : memref<2x10x10x64xf32, #tpu.memory_space<vmem>>, vector<2x8x8x64xf32>
    tpu.vector_store %arg8[%c0_86, %c1_87, %c1_88, %c0_89], %89 {strides = array<i32>} : memref<2x10x10x64xf32, #tpu.memory_space<vmem>>, vector<2x8x8x64xf32>,
    %cst_90 = arith.constant 0.000000e+00 : f32
    %91 = vector.broadcast %cst_90 : f32 to vector<128x64xf32>
    %c0_91 = arith.constant 0 : index
    %c0_92 = arith.constant 0 : index
    %c0_93 = arith.constant 0 : index
    %c0_94 = arith.constant 0 : index
    %92 = vector.load %arg8[%c0_91, %c0_92, %c0_93, %c0_94] : memref<2x10x10x64xf32, #tpu.memory_space<vmem>>, vector<2x8x8x64xf32>
    %93 = vector.shape_cast %92 : vector<2x8x8x64xf32> to vector<128x64xf32>
    %c0_95 = arith.constant 0 : index
    %c0_96 = arith.constant 0 : index
    %c0_97 = arith.constant 0 : index
    %94 = vector.load %arg2[%c0_95, %c0_96, %c0_97] : memref<9x64x64xf32, #tpu.memory_space<vmem>>, vector<1x64x64xf32>
    %95 = vector.shape_cast %94 : vector<1x64x64xf32> to vector<64x64xf32>
    %cst_98 = arith.constant dense<0.000000e+00> : vector<128x64xf32>
    %96 = tpu.matmul %93, %95, %cst_98 {dimension_numbers = #tpu.dot_dimension_numbers<[1], [0], [0], [1], [0, 0, 1, 1], [], []>} : vector<128x64xf32>, vector<64x64xf32>, vector<128x64xf32> -> vector<128x64xf32>
    %97 = arith.addf %91, %96 : vector<128x64xf32>
    %c0_99 = arith.constant 0 : index
    %c0_100 = arith.constant 0 : index
    %c1_101 = arith.constant 1 : index
    %c0_102 = arith.constant 0 : index
    %98 = vector.load %arg8[%c0_99, %c0_100, %c1_101, %c0_102] : memref<2x10x10x64xf32, #tpu.memory_space<vmem>>, vector<2x8x8x64xf32>
    %99 = vector.shape_cast %98 : vector<2x8x8x64xf32> to vector<128x64xf32>
    %c1_103 = arith.constant 1 : index
    %c0_104 = arith.constant 0 : index
    %c0_105 = arith.constant 0 : index
    %100 = vector.load %arg2[%c1_103, %c0_104, %c0_105] : memref<9x64x64xf32, #tpu.memory_space<vmem>>, vector<1x64x64xf32>
    %101 = vector.shape_cast %100 : vector<1x64x64xf32> to vector<64x64xf32>
    %cst_106 = arith.constant dense<0.000000e+00> : vector<128x64xf32>
    %102 = tpu.matmul %99, %101, %cst_106 {dimension_numbers = #tpu.dot_dimension_numbers<[1], [0], [0], [1], [0, 0, 1, 1], [], []>} : vector<128x64xf32>, vector<64x64xf32>, vector<128x64xf32> -> vector<128x64xf32>
    %103 = arith.addf %97, %102 : vector<128x64xf32>
    %c0_107 = arith.constant 0 : index
    %c0_108 = arith.constant 0 : index
    %c2_109 = arith.constant 2 : index
    %c0_110 = arith.constant 0 : index
    %104 = vector.load %arg8[%c0_107, %c0_108, %c2_109, %c0_110] : memref<2x10x10x64xf32, #tpu.memory_space<vmem>>, vector<2x8x8x64xf32>
    %105 = vector.shape_cast %104 : vector<2x8x8x64xf32> to vector<128x64xf32>
    %c2_111 = arith.constant 2 : index
    %c0_112 = arith.constant 0 : index
    %c0_113 = arith.constant 0 : index
    %106 = vector.load %arg2[%c2_111, %c0_112, %c0_113] : memref<9x64x64xf32, #tpu.memory_space<vmem>>, vector<1x64x64xf32>
    %107 = vector.shape_cast %106 : vector<1x64x64xf32> to vector<64x64xf32>
    %cst_114 = arith.constant dense<0.000000e+00> : vector<128x64xf32>
    %108 = tpu.matmul %105, %107, %cst_114 {dimension_numbers = #tpu.dot_dimension_numbers<[1], [0], [0], [1], [0, 0, 1, 1], [], []>} : vector<128x64xf32>, vector<64x64xf32>, vector<128x64xf32> -> vector<128x64xf32>
    %109 = arith.addf %103, %108 : vector<128x64xf32>
    %c0_115 = arith.constant 0 : index
    %c1_116 = arith.constant 1 : index
    %c0_117 = arith.constant 0 : index
    %c0_118 = arith.constant 0 : index
    %110 = vector.load %arg8[%c0_115, %c1_116, %c0_117, %c0_118] : memref<2x10x10x64xf32, #tpu.memory_space<vmem>>, vector<2x8x8x64xf32>
    %111 = vector.shape_cast %110 : vector<2x8x8x64xf32> to vector<128x64xf32>
    %c3_119 = arith.constant 3 : index
    %c0_120 = arith.constant 0 : index
    %c0_121 = arith.constant 0 : index
    %112 = vector.load %arg2[%c3_119, %c0_120, %c0_121] : memref<9x64x64xf32, #tpu.memory_space<vmem>>, vector<1x64x64xf32>
    %113 = vector.shape_cast %112 : vector<1x64x64xf32> to vector<64x64xf32>
    %cst_122 = arith.constant dense<0.000000e+00> : vector<128x64xf32>
    %114 = tpu.matmul %111, %113, %cst_122 {dimension_numbers = #tpu.dot_dimension_numbers<[1], [0], [0], [1], [0, 0, 1, 1], [], []>} : vector<128x64xf32>, vector<64x64xf32>, vector<128x64xf32> -> vector<128x64xf32>
    %115 = arith.addf %109, %114 : vector<128x64xf32>
    %c0_123 = arith.constant 0 : index
    %c1_124 = arith.constant 1 : index
    %c1_125 = arith.constant 1 : index
    %c0_126 = arith.constant 0 : index
    %116 = vector.load %arg8[%c0_123, %c1_124, %c1_125, %c0_126] : memref<2x10x10x64xf32, #tpu.memory_space<vmem>>, vector<2x8x8x64xf32>
    %117 = vector.shape_cast %116 : vector<2x8x8x64xf32> to vector<128x64xf32>
    %c4_127 = arith.constant 4 : index
    %c0_128 = arith.constant 0 : index
    %c0_129 = arith.constant 0 : index
    %118 = vector.load %arg2[%c4_127, %c0_128, %c0_129] : memref<9x64x64xf32, #tpu.memory_space<vmem>>, vector<1x64x64xf32>
    %119 = vector.shape_cast %118 : vector<1x64x64xf32> to vector<64x64xf32>
    %cst_130 = arith.constant dense<0.000000e+00> : vector<128x64xf32>
    %120 = tpu.matmul %117, %119, %cst_130 {dimension_numbers = #tpu.dot_dimension_numbers<[1], [0], [0], [1], [0, 0, 1, 1], [], []>} : vector<128x64xf32>, vector<64x64xf32>, vector<128x64xf32> -> vector<128x64xf32>
    %121 = arith.addf %115, %120 : vector<128x64xf32>
    %c0_131 = arith.constant 0 : index
    %c1_132 = arith.constant 1 : index
    %c2_133 = arith.constant 2 : index
    %c0_134 = arith.constant 0 : index
    %122 = vector.load %arg8[%c0_131, %c1_132, %c2_133, %c0_134] : memref<2x10x10x64xf32, #tpu.memory_space<vmem>>, vector<2x8x8x64xf32>
    %123 = vector.shape_cast %122 : vector<2x8x8x64xf32> to vector<128x64xf32>
    %c5_135 = arith.constant 5 : index
    %c0_136 = arith.constant 0 : index
    %c0_137 = arith.constant 0 : index
    %124 = vector.load %arg2[%c5_135, %c0_136, %c0_137] : memref<9x64x64xf32, #tpu.memory_space<vmem>>, vector<1x64x64xf32>
    %125 = vector.shape_cast %124 : vector<1x64x64xf32> to vector<64x64xf32>
    %cst_138 = arith.constant dense<0.000000e+00> : vector<128x64xf32>
    %126 = tpu.matmul %123, %125, %cst_138 {dimension_numbers = #tpu.dot_dimension_numbers<[1], [0], [0], [1], [0, 0, 1, 1], [], []>} : vector<128x64xf32>, vector<64x64xf32>, vector<128x64xf32> -> vector<128x64xf32>
    %127 = arith.addf %121, %126 : vector<128x64xf32>
    %c0_139 = arith.constant 0 : index
    %c2_140 = arith.constant 2 : index
    %c0_141 = arith.constant 0 : index
    %c0_142 = arith.constant 0 : index
    %128 = vector.load %arg8[%c0_139, %c2_140, %c0_141, %c0_142] : memref<2x10x10x64xf32, #tpu.memory_space<vmem>>, vector<2x8x8x64xf32>
    %129 = vector.shape_cast %128 : vector<2x8x8x64xf32> to vector<128x64xf32>
    %c6_143 = arith.constant 6 : index
    %c0_144 = arith.constant 0 : index
    %c0_145 = arith.constant 0 : index
    %130 = vector.load %arg2[%c6_143, %c0_144, %c0_145] : memref<9x64x64xf32, #tpu.memory_space<vmem>>, vector<1x64x64xf32>
    %131 = vector.shape_cast %130 : vector<1x64x64xf32> to vector<64x64xf32>
    %cst_146 = arith.constant dense<0.000000e+00> : vector<128x64xf32>
    %132 = tpu.matmul %129, %131, %cst_146 {dimension_numbers = #tpu.dot_dimension_numbers<[1], [0], [0], [1], [0, 0, 1, 1], [], []>} : vector<128x64xf32>, vector<64x64xf32>, vector<128x64xf32> -> vector<128x64xf32>
    %133 = arith.addf %127, %132 : vector<128x64xf32>
    %c0_147 = arith.constant 0 : index
    %c2_148 = arith.constant 2 : index
    %c1_149 = arith.constant 1 : index
    %c0_150 = arith.constant 0 : index
    %134 = vector.load %arg8[%c0_147, %c2_148, %c1_149, %c0_150] : memref<2x10x10x64xf32, #tpu.memory_space<vmem>>, vector<2x8x8x64xf32>
    %135 = vector.shape_cast %134 : vector<2x8x8x64xf32> to vector<128x64xf32>
    %c7_151 = arith.constant 7 : index
    %c0_152 = arith.constant 0 : index
    %c0_153 = arith.constant 0 : index
    %136 = vector.load %arg2[%c7_151, %c0_152, %c0_153] : memref<9x64x64xf32, #tpu.memory_space<vmem>>, vector<1x64x64xf32>
    %137 = vector.shape_cast %136 : vector<1x64x64xf32> to vector<64x64xf32>
    %cst_154 = arith.constant dense<0.000000e+00> : vector<128x64xf32>
    %138 = tpu.matmul %135, %137, %cst_154 {dimension_numbers = #tpu.dot_dimension_numbers<[1], [0], [0], [1], [0, 0, 1, 1], [], []>} : vector<128x64xf32>, vector<64x64xf32>, vector<128x64xf32> -> vector<128x64xf32>
    %139 = arith.addf %133, %138 : vector<128x64xf32>
    %c0_155 = arith.constant 0 : index
    %c2_156 = arith.constant 2 : index
    %c2_157 = arith.constant 2 : index
    %c0_158 = arith.constant 0 : index
    %140 = vector.load %arg8[%c0_155, %c2_156, %c2_157, %c0_158] : memref<2x10x10x64xf32, #tpu.memory_space<vmem>>, vector<2x8x8x64xf32>
    %141 = vector.shape_cast %140 : vector<2x8x8x64xf32> to vector<128x64xf32>
    %c8_159 = arith.constant 8 : index
    %c0_160 = arith.constant 0 : index
    %c0_161 = arith.constant 0 : index
    %142 = vector.load %arg2[%c8_159, %c0_160, %c0_161] : memref<9x64x64xf32, #tpu.memory_space<vmem>>, vector<1x64x64xf32>
    %143 = vector.shape_cast %142 : vector<1x64x64xf32> to vector<64x64xf32>
    %cst_162 = arith.constant dense<0.000000e+00> : vector<128x64xf32>
    %144 = tpu.matmul %141, %143, %cst_162 {dimension_numbers = #tpu.dot_dimension_numbers<[1], [0], [0], [1], [0, 0, 1, 1], [], []>} : vector<128x64xf32>, vector<64x64xf32>, vector<128x64xf32> -> vector<128x64xf32>
    %145 = arith.addf %139, %144 : vector<128x64xf32>
    %c0_163 = arith.constant 0 : index
    %c0_164 = arith.constant 0 : index
    %146 = vector.load %arg4[%c0_163, %c0_164] : memref<3x64xf32, #tpu.memory_space<vmem>>, vector<1x64xf32>
    %147 = vector.broadcast %146 : vector<1x64xf32> to vector<128x64xf32>
    %148 = arith.addf %145, %147 : vector<128x64xf32>
    %cst_165 = arith.constant dense<0.000000e+00> : vector<64xf32>
    %149 = vector.multi_reduction <add>, %148, %cst_165 [0] : vector<128x64xf32> to vector<64xf32>
    %150 = vector.shape_cast %149 : vector<64xf32> to vector<1x64xf32>
    %cst_166 = arith.constant 7.812500e-03 : f32
    %151 = vector.broadcast %cst_166 : f32 to vector<1x64xf32>
    %152 = arith.mulf %150, %151 : vector<1x64xf32>
    %153 = arith.mulf %148, %148 : vector<128x64xf32>
    %cst_167 = arith.constant dense<0.000000e+00> : vector<64xf32>
    %154 = vector.multi_reduction <add>, %153, %cst_167 [0] : vector<128x64xf32> to vector<64xf32>
    %155 = vector.shape_cast %154 : vector<64xf32> to vector<1x64xf32>
    %cst_168 = arith.constant 7.812500e-03 : f32
    %156 = vector.broadcast %cst_168 : f32 to vector<1x64xf32>
    %157 = arith.mulf %155, %156 : vector<1x64xf32>
    %c0_169 = arith.constant 0 : index
    %c0_170 = arith.constant 0 : index
    %158 = vector.load %arg6[%c0_169, %c0_170] : memref<64x64xf32, #tpu.memory_space<vmem>>, vector<64x64xf32>
    %cst_171 = arith.constant dense<0.000000e+00> : vector<1x64xf32>
    %159 = tpu.matmul %152, %158, %cst_171 {dimension_numbers = #tpu.dot_dimension_numbers<[1], [0], [0], [1], [0, 0, 1, 1], [], []>} : vector<1x64xf32>, vector<64x64xf32>, vector<1x64xf32> -> vector<1x64xf32>
    %c0_172 = arith.constant 0 : index
    %c0_173 = arith.constant 0 : index
    %160 = vector.load %arg6[%c0_172, %c0_173] : memref<64x64xf32, #tpu.memory_space<vmem>>, vector<64x64xf32>
    %cst_174 = arith.constant dense<0.000000e+00> : vector<1x64xf32>
    %161 = tpu.matmul %157, %160, %cst_174 {dimension_numbers = #tpu.dot_dimension_numbers<[1], [0], [0], [1], [0, 0, 1, 1], [], []>} : vector<1x64xf32>, vector<64x64xf32>, vector<1x64xf32> -> vector<1x64xf32>
    %162 = arith.mulf %159, %159 : vector<1x64xf32>
    %163 = arith.subf %161, %162 : vector<1x64xf32>
    %164 = vector.broadcast %159 : vector<1x64xf32> to vector<128x64xf32>
    %165 = arith.subf %148, %164 : vector<128x64xf32>
    %c1_175 = arith.constant 1 : index
    %c0_176 = arith.constant 0 : index
    %166 = vector.load %arg4[%c1_175, %c0_176] : memref<3x64xf32, #tpu.memory_space<vmem>>, vector<1x64xf32>
    %cst_177 = arith.constant 9.99999974E-6 : f32
    %167 = vector.broadcast %cst_177 : f32 to vector<1x64xf32>
    %168 = arith.addf %163, %167 : vector<1x64xf32>
    %169 = math.rsqrt %168 : vector<1x64xf32>
    %170 = arith.mulf %166, %169 : vector<1x64xf32>
    %171 = vector.broadcast %170 : vector<1x64xf32> to vector<128x64xf32>
    %172 = arith.mulf %165, %171 : vector<128x64xf32>
    %c2_178 = arith.constant 2 : index
    %c0_179 = arith.constant 0 : index
    %173 = vector.load %arg4[%c2_178, %c0_179] : memref<3x64xf32, #tpu.memory_space<vmem>>, vector<1x64xf32>
    %174 = vector.broadcast %173 : vector<1x64xf32> to vector<128x64xf32>
    %175 = arith.addf %172, %174 : vector<128x64xf32>
    %cst_180 = arith.constant 0.000000e+00 : f32
    %176 = vector.broadcast %cst_180 : f32 to vector<128x64xf32>
    %177 = arith.maximumf %175, %176 : vector<128x64xf32>
    %178 = vector.shape_cast %177 : vector<128x64xf32> to vector<2x8x8x64xf32>
    %c0_181 = arith.constant 0 : index
    %c0_182 = arith.constant 0 : index
    %c0_183 = arith.constant 0 : index
    %c0_184 = arith.constant 0 : index
    %179 = vector.load %arg7[%c0_181, %c0_182, %c0_183, %c0_184] : memref<2x8x8x64xf32, #tpu.memory_space<vmem>>, vector<2x8x8x64xf32>
    tpu.vector_store %arg7[%c0_181, %c0_182, %c0_183, %c0_184], %178 {strides = array<i32>} : memref<2x8x8x64xf32, #tpu.memory_space<vmem>>, vector<2x8x8x64xf32>,
    return
  }
}

</mosaic_0001>

<llo_original>
// kernel: tile.43
$region0: #{tile.43}
  #allocation0 [shape = 's32[1]{0}', space=sflag, size = 0x4, scoped, tag = 'scoped memory for tile.43']
  %s0 = inlined_call_operand.vmem [shape: f32[8], index: 0, kind: input, shape index: {}]
  %s1 = inlined_call_operand.vmem [shape: f32[8,8], index: 1, kind: output, shape index: {}]
  // Predicated region
  $region2: #{tile.43} parent=0 // pred_check
    _
  $region3: #{tile.43} parent=0 // pred_check_branch
    %3 = sbr.rel (0) target = $region5
  $region4: #{tile.43} parent=0 // pred_region
    _
  $region5: #{tile.43} parent=0 // pred_fallthru
    _
  %v4 = vld [vmem:[%s0] ss:$0 sm:$0xff]
  %5 = vst [vmem:[%s1] sm:$0xff] %v4

// kernel: tile.52
$region0: #{tile.52}
  %s0 = inlined_call_operand.vmem [shape: f32[8,8], index: 0, kind: input, shape index: {}]
  %s1 = inlined_call_operand.vmem [shape: f32[1,64], index: 1, kind: output, shape index: {}]
  $region1: #{tile.52} parent=0
    #allocation0 [shape = 'u8[4096]{0}', space=vmem, size = 0x1000, scoped, tag = 'scoped mem for output reshape']
    %v2 = vld [vmem:[%s0] sm:$0x1]
    %vm3 = vcmask 64512
    %4 = vst.msk [vmem:[#allocation0] sm:$0x1] %vm3, %v2
    %s5 = scalar_lea.vmem %s0, 7
    %v6 = vld [vmem:[%s5] sm:$0x1]
    %7 = vrot.lane.b32.xlu0 %v6, 56
    %v8 = vpop.permute.xlu0 %7
    %vm9 = vcmask 523712
    %10 = vst.msk [vmem:[#allocation0] sm:$0x1] %vm9, %v8
    %s11 = scalar_lea.vmem %s0, 6
    %v12 = vld [vmem:[%s11] sm:$0x1]
    %13 = vrot.lane.b32.xlu0 %v12, 48
    %v14 = vpop.permute.xlu0 %13
    %vm15 = vcmask 458112
    %16 = vst.msk [vmem:[#allocation0] sm:$0x1] %vm15, %v14
    %s17 = scalar_lea.vmem %s0, 5
    %v18 = vld [vmem:[%s17] sm:$0x1]
    %19 = vrot.lane.b32.xlu0 %v18, 40
    %v20 = vpop.permute.xlu0 %19
    %vm21 = vcmask 392512
    %22 = vst.msk [vmem:[#allocation0] sm:$0x1] %vm21, %v20
    %s23 = scalar_lea.vmem %s0, 4
    %v24 = vld [vmem:[%s23] sm:$0x1]
    %25 = vrot.lane.b32.xlu0 %v24, 32
    %v26 = vpop.permute.xlu0 %25
    %vm27 = vcmask 326912
    %28 = vst.msk [vmem:[#allocation0] sm:$0x1] %vm27, %v26
    %s29 = scalar_lea.vmem %s0, 3
    %v30 = vld [vmem:[%s29] sm:$0x1]
    %31 = vrot.lane.b32.xlu0 %v30, 24
    %v32 = vpop.permute.xlu0 %31
    %vm33 = vcmask 261312
    %34 = vst.msk [vmem:[#allocation0] sm:$0x1] %vm33, %v32
    %s35 = scalar_lea.vmem %s0, 2
    %v36 = vld [vmem:[%s35] sm:$0x1]
    %37 = vrot.lane.b32.xlu0 %v36, 16
    %v38 = vpop.permute.xlu0 %37
    %vm39 = vcmask 195712
    %40 = vst.msk [vmem:[#allocation0] sm:$0x1] %vm39, %v38
    %s41 = scalar_lea.vmem %s0, 1
    %v42 = vld [vmem:[%s41] sm:$0x1]
    %43 = vrot.lane.b32.xlu0 %v42, 8
    %v44 = vpop.permute.xlu0 %43
    %vm45 = vcmask 130112
    %46 = vst.msk [vmem:[#allocation0] sm:$0x1] %vm45, %v44
    %s48 = sshllo.u32 0, 1
    %v50 = vld [vmem:[#allocation0] sm:%s48]
    %s51 = sshllo.u32 0, 1
    %52 = vst [vmem:[%s1] sm:%s51] %v50

// kernel: downblock_forward.1
$region0: #{downblock_forward.1}
  #allocation0 [shape = 'u32[]', space=smem, size = 0x4, offset = 0x4, fixed_abs, tag = 'smem constant byte address 0x4 - core index']
  #allocation1 [shape = 'u32[144,128]{1,0:T(1,128)}', space=vmem, size = 0x12000, scoped, tag = 'internal scratch']
  #allocation2 [shape = 'f32[2,10,10,64]{3,2,1,0:T(8,128)}', space=vmem, size = 0x28000, scoped, tag = 'scratch operand']
  %s0 = inlined_call_operand.vmem [shape: f32[2,10,10,32], index: 0, kind: input, shape index: {}]
  %s1 = inlined_call_operand.vmem [shape: f32[9,32,64], index: 1, kind: input, shape index: {}]
  %s2 = inlined_call_operand.vmem [shape: f32[9,64,64], index: 2, kind: input, shape index: {}]
  %s3 = inlined_call_operand.vmem [shape: f32[3,64], index: 3, kind: input, shape index: {}]
  %s4 = inlined_call_operand.vmem [shape: f32[3,64], index: 4, kind: input, shape index: {}]
  %s5 = inlined_call_operand.vmem [shape: f32[64,64], index: 5, kind: input, shape index: {}, may-alias: {5,6}]
  %s6 = inlined_call_operand.vmem [shape: f32[64,64], index: 6, kind: input, shape index: {}, may-alias: {5,6}]
  %s7 = inlined_call_operand.vmem [shape: f32[2,8,8,64], index: 7, kind: output, shape index: {}]
  %s8 = sld [smem:[#allocation0]]
  $region38: #{downblock_forward.1} parent=0
    _
  %s10 = ssub.s32 1, %s8
  %s11 = scalar_select 0, %s10, %s8
  // Predicated region
  $region2: #{downblock_forward.1} parent=0 // pred_check
    _
  $region3: #{downblock_forward.1} parent=0 // pred_check_branch
    %13 = sbr.rel (0) target = $region5
  $region4: #{downblock_forward.1} parent=0 // pred_region
    _
  $region5: #{downblock_forward.1} parent=0 // pred_fallthru
    _
  // Predicated region
  $region6: #{downblock_forward.1} parent=0 // pred_check
    _
  $region7: #{downblock_forward.1} parent=0 // pred_check_branch
    %15 = sbr.rel (0) target = $region9
  $region8: #{downblock_forward.1} parent=0 // pred_region
    _
  $region9: #{downblock_forward.1} parent=0 // pred_fallthru
    _
  // Predicated region
  $region10: #{downblock_forward.1} parent=0 // pred_check
    _
  $region11: #{downblock_forward.1} parent=0 // pred_check_branch
    %17 = sbr.rel (0) target = $region13
  $region12: #{downblock_forward.1} parent=0 // pred_region
    _
  $region13: #{downblock_forward.1} parent=0 // pred_fallthru
    _
  // Predicated region
  $region14: #{downblock_forward.1} parent=0 // pred_check
    _
  $region15: #{downblock_forward.1} parent=0 // pred_check_branch
    %19 = sbr.rel (0) target = $region17
  $region16: #{downblock_forward.1} parent=0 // pred_region
    _
  $region17: #{downblock_forward.1} parent=0 // pred_fallthru
    _
  // Predicated region
  $region18: #{downblock_forward.1} parent=0 // pred_check
    _
  $region19: #{downblock_forward.1} parent=0 // pred_check_branch
    %21 = sbr.rel (0) target = $region21
  $region20: #{downblock_forward.1} parent=0 // pred_region
    _
  $region21: #{downblock_forward.1} parent=0 // pred_fallthru
    _
  // Predicated region
  $region22: #{downblock_forward.1} parent=0 // pred_check
    _
  $region23: #{downblock_forward.1} parent=0 // pred_check_branch
    %23 = sbr.rel (0) target = $region25
  $region24: #{downblock_forward.1} parent=0 // pred_region
    _
  $region25: #{downblock_forward.1} parent=0 // pred_fallthru
    _
  // Predicated region
  $region26: #{downblock_forward.1} parent=0 // pred_check
    _
  $region27: #{downblock_forward.1} parent=0 // pred_check_branch
    %25 = sbr.rel (0) target = $region29
  $region28: #{downblock_forward.1} parent=0 // pred_region
    _
  $region29: #{downblock_forward.1} parent=0 // pred_fallthru
    _
  %v26 = vld [vmem:[%s0] sm:$0xff]
  %v27 = vld [vmem:[%s0 + $0x10] sm:$0xff]
  %v28 = vld [vmem:[%s0 + $0x20] sm:$0xff]
  %v29 = vld [vmem:[%s0 + $0x30] sm:$0xff]
  %v30 = vld [vmem:[%s0 + $0x40] sm:$0xff]
  %v31 = vld [vmem:[%s0 + $0x50] sm:$0xff]
  %v32 = vld [vmem:[%s0 + $0x60] sm:$0xff]
  %v33 = vld [vmem:[%s0 + $0x70] sm:$0xff]
  %v34 = vld [vmem:[%s0 + $0xa0] sm:$0xff]
  %v35 = vld [vmem:[%s0 + $0xb0] sm:$0xff]
  %v36 = vld [vmem:[%s0 + $0xc0] sm:$0xff]
  %v37 = vld [vmem:[%s0 + $0xd0] sm:$0xff]
  %v38 = vld [vmem:[%s0 + $0xe0] sm:$0xff]
  %v39 = vld [vmem:[%s0 + $0xf0] sm:$0xff]
  %v40 = vld [vmem:[%s0 + $0x100] sm:$0xff]
  %v41 = vld [vmem:[%s0 + $0x110] sm:$0xff]
  %v42 = vld [vmem:[%s1] sm:$0xff]
  %v43 = vld [vmem:[%s1 + $0x8] sm:$0xff]
  %v44 = vld [vmem:[%s1 + $0x10] sm:$0xff]
  %v45 = vld [vmem:[%s1 + $0x18] sm:$0xff]
  %v46 = vld [vmem:[%s0 + $0x1] sm:$0xff]
  %v47 = vld [vmem:[%s0 + $0x11] sm:$0xff]
  %v48 = vld [vmem:[%s0 + $0x21] sm:$0xff]
  %v49 = vld [vmem:[%s0 + $0x31] sm:$0xff]
  %v50 = vld [vmem:[%s0 + $0x41] sm:$0xff]
  %v51 = vld [vmem:[%s0 + $0x51] sm:$0xff]
  %v52 = vld [vmem:[%s0 + $0x61] sm:$0xff]
  %v53 = vld [vmem:[%s0 + $0x71] sm:$0xff]
  %v54 = vld [vmem:[%s0 + $0xa1] sm:$0xff]
  %v55 = vld [vmem:[%s0 + $0xb1] sm:$0xff]
  %v56 = vld [vmem:[%s0 + $0xc1] sm:$0xff]
  %v57 = vld [vmem:[%s0 + $0xd1] sm:$0xff]
  %v58 = vld [vmem:[%s0 + $0xe1] sm:$0xff]
  %v59 = vld [vmem:[%s0 + $0xf1] sm:$0xff]
  %v60 = vld [vmem:[%s0 + $0x101] sm:$0xff]
  %v61 = vld [vmem:[%s0 + $0x111] sm:$0xff]
  %s62 = scalar_lea.vmem %s1, 32
  %v63 = vld [vmem:[%s62] sm:$0xff]
  %v64 = vld [vmem:[%s62 + $0x8] sm:$0xff]
  %v65 = vld [vmem:[%s62 + $0x10] sm:$0xff]
  %v66 = vld [vmem:[%s62 + $0x18] sm:$0xff]
  %vm67 = vcmask 261120
  %v69 = vsel %vm67, %v46, 0
  %v72 = vsel %vm67, %v47, 0
  %v75 = vsel %vm67, %v48, 0
  %v78 = vsel %vm67, %v49, 0
  %v81 = vsel %vm67, %v50, 0
  %v84 = vsel %vm67, %v51, 0
  %v87 = vsel %vm67, %v52, 0
  %v90 = vsel %vm67, %v53, 0
  %v93 = vsel %vm67, %v54, 0
  %v96 = vsel %vm67, %v55, 0
  %v99 = vsel %vm67, %v56, 0
  %v102 = vsel %vm67, %v57, 0
  %v105 = vsel %vm67, %v58, 0
  %v108 = vsel %vm67, %v59, 0
  %v111 = vsel %vm67, %v60, 0
  %v114 = vsel %vm67, %v61, 0
  %116 = vmatprep.subr.mxu0 0.0
  %117 = vmatpush1.msra.mxu0 %v63
  %118 = vmatprep.subr.mxu0 0.0
  %119 = vmatpush1.msra.mxu0 %v64
  %120 = vmatprep.subr.mxu0 0.0
  %121 = vmatpush1.msra.mxu0 %v65
  %122 = vmatprep.subr.mxu0 0.0
  %123 = vmatpush1.msra.mxu0 %v66
  %124 = vmatprep.subr.mxu0 0.0
  %125 = vmatpush1.msra.mxu0 0.0
  %126 = vmatprep.subr.mxu0 0.0
  %127 = vmatpush1.msra.mxu0 0.0
  %128 = vmatprep.subr.mxu0 0.0
  %129 = vmatpush1.msra.mxu0 0.0
  %130 = vmatprep.subr.mxu0 0.0
  %131 = vmatpush1.msra.mxu0 0.0
  %132 = vmatprep.subr.mxu0 0.0
  %133 = vmatpush1.msra.mxu0 0.0
  %134 = vmatprep.subr.mxu0 0.0
  %135 = vmatpush1.msra.mxu0 0.0
  %136 = vmatprep.subr.mxu0 0.0
  %137 = vmatpush1.msra.mxu0 0.0
  %138 = vmatprep.subr.mxu0 0.0
  %139 = vmatpush1.msra.mxu0 0.0
  %140 = vmatprep.subr.mxu0 0.0
  %141 = vmatpush1.msra.mxu0 0.0
  %142 = vmatprep.subr.mxu0 0.0
  %143 = vmatpush1.msra.mxu0 0.0
  %144 = vmatprep.subr.mxu0 0.0
  %145 = vmatpush1.msra.mxu0 0.0
  %146 = vmatprep.subr.mxu0 0.0
  %147 = vmatpush1.msra.mxu0 0.0
  %148 = vmatprep.subr.mxu0 0.0
  %149 = vmatpush1.msra.mxu0 0.0
  %150 = vmatprep.subr.mxu0 0.0
  %151 = vmatpush1.msra.mxu0 0.0
  %152 = vmatprep.subr.mxu0 0.0
  %153 = vmatpush1.msra.mxu0 0.0
  %154 = vmatprep.subr.mxu0 0.0
  %155 = vmatpush1.msra.mxu0 0.0
  %156 = vmatprep.subr.mxu0 0.0
  %157 = vmatpush1.msra.mxu0 0.0
  %158 = vmatprep.subr.mxu0 0.0
  %159 = vmatpush1.msra.mxu0 0.0
  %160 = vmatprep.subr.mxu0 0.0
  %161 = vmatpush1.msra.mxu0 0.0
  %162 = vmatprep.subr.mxu0 0.0
  %163 = vmatpush1.msra.mxu0 0.0
  %164 = vmatprep.subr.mxu0 0.0
  %165 = vmatpush1.msra.mxu0 0.0
  %166 = vmatprep.subr.mxu0 0.0
  %167 = vmatpush1.msra.mxu0 0.0
  %168 = vmatprep.subr.mxu0 0.0
  %169 = vmatpush1.msra.mxu0 0.0
  %170 = vmatprep.subr.mxu0 0.0
  %171 = vmatpush1.msra.mxu0 0.0
  %172 = vmatprep.subr.mxu0 0.0
  %173 = vmatpush1.msra.mxu0 0.0
  %174 = vmatprep.subr.mxu0 0.0
  %175 = vmatpush1.msra.mxu0 0.0
  %176 = vmatprep.subr.mxu0 0.0
  %177 = vmatpush1.msra.mxu0 0.0
  %178 = vmatprep.subr.mxu0 0.0
  %179 = vmatpush1.msra.mxu0 0.0
  %180 = vmatprep.mubr.f32.mxu0 0.0
  %181 = vmatmul.mubr.f32.gmra.mrb[0].mxu0 %v69
  %v182 = vpop.f32.mrb[0].mxu0
  %v183 = vadd.f32 0.0, %v182
  %v184 = vpop.f32.mrb[0].mxu0
  %185 = vmatprep.mubr.f32.mxu0 0.0
  %186 = vmatmul.mubr.f32.gmra.mrb[0].mxu0 %v72
  %v187 = vpop.f32.mrb[0].mxu0
  %v188 = vadd.f32 0.0, %v187
  %v189 = vpop.f32.mrb[0].mxu0
  %190 = vmatprep.mubr.f32.mxu0 0.0
  %191 = vmatmul.mubr.f32.gmra.mrb[0].mxu0 %v75
  %v192 = vpop.f32.mrb[0].mxu0
  %v193 = vadd.f32 0.0, %v192
  %v194 = vpop.f32.mrb[0].mxu0
  %195 = vmatprep.mubr.f32.mxu0 0.0
  %196 = vmatmul.mubr.f32.gmra.mrb[0].mxu0 %v78
  %v197 = vpop.f32.mrb[0].mxu0
  %v198 = vadd.f32 0.0, %v197
  %v199 = vpop.f32.mrb[0].mxu0
  %200 = vmatprep.mubr.f32.mxu0 0.0
  %201 = vmatmul.mubr.f32.gmra.mrb[0].mxu0 %v81
  %v202 = vpop.f32.mrb[0].mxu0
  %v203 = vadd.f32 0.0, %v202
  %v204 = vpop.f32.mrb[0].mxu0
  %205 = vmatprep.mubr.f32.mxu0 0.0
  %206 = vmatmul.mubr.f32.gmra.mrb[0].mxu0 %v84
  %v207 = vpop.f32.mrb[0].mxu0
  %v208 = vadd.f32 0.0, %v207
  %v209 = vpop.f32.mrb[0].mxu0
  %210 = vmatprep.mubr.f32.mxu0 0.0
  %211 = vmatmul.mubr.f32.gmra.mrb[0].mxu0 %v87
  %v212 = vpop.f32.mrb[0].mxu0
  %v213 = vadd.f32 0.0, %v212
  %v214 = vpop.f32.mrb[0].mxu0
  %215 = vmatprep.mubr.f32.mxu0 0.0
  %216 = vmatmul.mubr.f32.gmra.mrb[0].mxu0 %v90
  %v217 = vpop.f32.mrb[0].mxu0
  %v218 = vadd.f32 0.0, %v217
  %v219 = vpop.f32.mrb[0].mxu0
  %220 = vmatprep.mubr.f32.mxu0 0.0
  %221 = vmatmul.mubr.f32.gmra.mrb[0].mxu0 %v93
  %v222 = vpop.f32.mrb[0].mxu0
  %v223 = vadd.f32 0.0, %v222
  %v224 = vpop.f32.mrb[0].mxu0
  %225 = vmatprep.mubr.f32.mxu0 0.0
  %226 = vmatmul.mubr.f32.gmra.mrb[0].mxu0 %v96
  %v227 = vpop.f32.mrb[0].mxu0
  %v228 = vadd.f32 0.0, %v227
  %v229 = vpop.f32.mrb[0].mxu0
  %230 = vmatprep.mubr.f32.mxu0 0.0
  %231 = vmatmul.mubr.f32.gmra.mrb[0].mxu0 %v99
  %v232 = vpop.f32.mrb[0].mxu0
  %v233 = vadd.f32 0.0, %v232
  %v234 = vpop.f32.mrb[0].mxu0
  %235 = vmatprep.mubr.f32.mxu0 0.0
  %236 = vmatmul.mubr.f32.gmra.mrb[0].mxu0 %v102
  %v237 = vpop.f32.mrb[0].mxu0
  %v238 = vadd.f32 0.0, %v237
  %v239 = vpop.f32.mrb[0].mxu0
  %240 = vmatprep.mubr.f32.mxu0 0.0
  %241 = vmatmul.mubr.f32.gmra.mrb[0].mxu0 %v105
  %v242 = vpop.f32.mrb[0].mxu0
  %v243 = vadd.f32 0.0, %v242
  %v244 = vpop.f32.mrb[0].mxu0
  %245 = vmatprep.mubr.f32.mxu0 0.0
  %246 = vmatmul.mubr.f32.gmra.mrb[0].mxu0 %v108
  %v247 = vpop.f32.mrb[0].mxu0
  %v248 = vadd.f32 0.0, %v247
  %v249 = vpop.f32.mrb[0].mxu0
  %250 = vmatprep.mubr.f32.mxu0 0.0
  %251 = vmatmul.mubr.f32.gmra.mrb[0].mxu0 %v111
  %v252 = vpop.f32.mrb[0].mxu0
  %v253 = vadd.f32 0.0, %v252
  %v254 = vpop.f32.mrb[0].mxu0
  %255 = vmatprep.mubr.f32.mxu0 0.0
  %256 = vmatmul.mubr.f32.gmra.mrb[0].mxu0 %v114
  %v257 = vpop.f32.mrb[0].mxu0
  %v258 = vadd.f32 0.0, %v257
  %v259 = vpop.f32.mrb[0].mxu0
  %260 = vdwg.mxu0
  %v262 = vsel %vm67, %v26, 0
  %v265 = vsel %vm67, %v27, 0
  %v268 = vsel %vm67, %v28, 0
  %v271 = vsel %vm67, %v29, 0
  %v274 = vsel %vm67, %v30, 0
  %v277 = vsel %vm67, %v31, 0
  %v280 = vsel %vm67, %v32, 0
  %v283 = vsel %vm67, %v33, 0
  %v286 = vsel %vm67, %v34, 0
  %v289 = vsel %vm67, %v35, 0
  %v292 = vsel %vm67, %v36, 0
  %v295 = vsel %vm67, %v37, 0
  %v298 = vsel %vm67, %v38, 0
  %v301 = vsel %vm67, %v39, 0
  %v304 = vsel %vm67, %v40, 0
  %v307 = vsel %vm67, %v41, 0
  %309 = vmatprep.subr.mxu0 0.0
  %310 = vmatpush1.msra.mxu0 %v42
  %311 = vmatprep.subr.mxu0 0.0
  %312 = vmatpush1.msra.mxu0 %v43
  %313 = vmatprep.subr.mxu0 0.0
  %314 = vmatpush1.msra.mxu0 %v44
  %315 = vmatprep.subr.mxu0 0.0
  %316 = vmatpush1.msra.mxu0 %v45
  %317 = vmatprep.subr.mxu0 0.0
  %318 = vmatpush1.msra.mxu0 0.0
  %319 = vmatprep.subr.mxu0 0.0
  %320 = vmatpush1.msra.mxu0 0.0
  %321 = vmatprep.subr.mxu0 0.0
  %322 = vmatpush1.msra.mxu0 0.0
  %323 = vmatprep.subr.mxu0 0.0
  %324 = vmatpush1.msra.mxu0 0.0
  %325 = vmatprep.subr.mxu0 0.0
  %326 = vmatpush1.msra.mxu0 0.0
  %327 = vmatprep.subr.mxu0 0.0
  %328 = vmatpush1.msra.mxu0 0.0
  %329 = vmatprep.subr.mxu0 0.0
  %330 = vmatpush1.msra.mxu0 0.0
  %331 = vmatprep.subr.mxu0 0.0
  %332 = vmatpush1.msra.mxu0 0.0
  %333 = vmatprep.subr.mxu0 0.0
  %334 = vmatpush1.msra.mxu0 0.0
  %335 = vmatprep.subr.mxu0 0.0
  %336 = vmatpush1.msra.mxu0 0.0
  %337 = vmatprep.subr.mxu0 0.0
  %338 = vmatpush1.msra.mxu0 0.0
  %339 = vmatprep.subr.mxu0 0.0
  %340 = vmatpush1.msra.mxu0 0.0
  %341 = vmatprep.subr.mxu0 0.0
  %342 = vmatpush1.msra.mxu0 0.0
  %343 = vmatprep.subr.mxu0 0.0
  %344 = vmatpush1.msra.mxu0 0.0
  %345 = vmatprep.subr.mxu0 0.0
  %346 = vmatpush1.msra.mxu0 0.0
  %347 = vmatprep.subr.mxu0 0.0
  %348 = vmatpush1.msra.mxu0 0.0
  %349 = vmatprep.subr.mxu0 0.0
  %350 = vmatpush1.msra.mxu0 0.0
  %351 = vmatprep.subr.mxu0 0.0
  %352 = vmatpush1.msra.mxu0 0.0
  %353 = vmatprep.subr.mxu0 0.0
  %354 = vmatpush1.msra.mxu0 0.0
  %355 = vmatprep.subr.mxu0 0.0
  %356 = vmatpush1.msra.mxu0 0.0
  %357 = vmatprep.subr.mxu0 0.0
  %358 = vmatpush1.msra.mxu0 0.0
  %359 = vmatprep.subr.mxu0 0.0
  %360 = vmatpush1.msra.mxu0 0.0
  %361 = vmatprep.subr.mxu0 0.0
  %362 = vmatpush1.msra.mxu0 0.0
  %363 = vmatprep.subr.mxu0 0.0
  %364 = vmatpush1.msra.mxu0 0.0
  %365 = vmatprep.subr.mxu0 0.0
  %366 = vmatpush1.msra.mxu0 0.0
  %367 = vmatprep.subr.mxu0 0.0
  %368 = vmatpush1.msra.mxu0 0.0
  %369 = vmatprep.subr.mxu0 0.0
  %370 = vmatpush1.msra.mxu0 0.0
  %371 = vmatprep.subr.mxu0 0.0
  %372 = vmatpush1.msra.mxu0 0.0
  %373 = vmatprep.mubr.f32.mxu0 0.0
  %374 = vmatmul.mubr.f32.gmra.mrb[0].mxu0 %v262
  %v375 = vpop.f32.mrb[0].mxu0
  %v376 = vadd.f32 %v183, %v375
  %v377 = vpop.f32.mrb[0].mxu0
  %378 = vmatprep.mubr.f32.mxu0 0.0
  %379 = vmatmul.mubr.f32.gmra.mrb[0].mxu0 %v265
  %v380 = vpop.f32.mrb[0].mxu0
  %v381 = vadd.f32 %v188, %v380
  %v382 = vpop.f32.mrb[0].mxu0
  %383 = vmatprep.mubr.f32.mxu0 0.0
  %384 = vmatmul.mubr.f32.gmra.mrb[0].mxu0 %v268
  %v385 = vpop.f32.mrb[0].mxu0
  %v386 = vadd.f32 %v193, %v385
  %v387 = vpop.f32.mrb[0].mxu0
  %388 = vmatprep.mubr.f32.mxu0 0.0
  %389 = vmatmul.mubr.f32.gmra.mrb[0].mxu0 %v271
  %v390 = vpop.f32.mrb[0].mxu0
  %v391 = vadd.f32 %v198, %v390
  %v392 = vpop.f32.mrb[0].mxu0
  %393 = vmatprep.mubr.f32.mxu0 0.0
  %394 = vmatmul.mubr.f32.gmra.mrb[0].mxu0 %v274
  %v395 = vpop.f32.mrb[0].mxu0
  %v396 = vadd.f32 %v203, %v395
  %v397 = vpop.f32.mrb[0].mxu0
  %398 = vmatprep.mubr.f32.mxu0 0.0
  %399 = vmatmul.mubr.f32.gmra.mrb[0].mxu0 %v277
  %v400 = vpop.f32.mrb[0].mxu0
  %v401 = vadd.f32 %v208, %v400
  %v402 = vpop.f32.mrb[0].mxu0
  %403 = vmatprep.mubr.f32.mxu0 0.0
  %404 = vmatmul.mubr.f32.gmra.mrb[0].mxu0 %v280
  %v405 = vpop.f32.mrb[0].mxu0
  %v406 = vadd.f32 %v213, %v405
  %v407 = vpop.f32.mrb[0].mxu0
  %408 = vmatprep.mubr.f32.mxu0 0.0
  %409 = vmatmul.mubr.f32.gmra.mrb[0].mxu0 %v283
  %v410 = vpop.f32.mrb[0].mxu0
  %v411 = vadd.f32 %v218, %v410
  %v412 = vpop.f32.mrb[0].mxu0
  %413 = vmatprep.mubr.f32.mxu0 0.0
  %414 = vmatmul.mubr.f32.gmra.mrb[0].mxu0 %v286
  %v415 = vpop.f32.mrb[0].mxu0
  %v416 = vadd.f32 %v223, %v415
  %v417 = vpop.f32.mrb[0].mxu0
  %418 = vmatprep.mubr.f32.mxu0 0.0
  %419 = vmatmul.mubr.f32.gmra.mrb[0].mxu0 %v289
  %v420 = vpop.f32.mrb[0].mxu0
  %v421 = vadd.f32 %v228, %v420
  %v422 = vpop.f32.mrb[0].mxu0
  %423 = vmatprep.mubr.f32.mxu0 0.0
  %424 = vmatmul.mubr.f32.gmra.mrb[0].mxu0 %v292
  %v425 = vpop.f32.mrb[0].mxu0
  %v426 = vadd.f32 %v233, %v425
  %v427 = vpop.f32.mrb[0].mxu0
  %428 = vmatprep.mubr.f32.mxu0 0.0
  %429 = vmatmul.mubr.f32.gmra.mrb[0].mxu0 %v295
  %v430 = vpop.f32.mrb[0].mxu0
  %v431 = vadd.f32 %v238, %v430
  %v432 = vpop.f32.mrb[0].mxu0
  %433 = vmatprep.mubr.f32.mxu0 0.0
  %434 = vmatmul.mubr.f32.gmra.mrb[0].mxu0 %v298
  %v435 = vpop.f32.mrb[0].mxu0
  %v436 = vadd.f32 %v243, %v435
  %v437 = vpop.f32.mrb[0].mxu0
  %438 = vmatprep.mubr.f32.mxu0 0.0
  %439 = vmatmul.mubr.f32.gmra.mrb[0].mxu0 %v301
  %v440 = vpop.f32.mrb[0].mxu0
  %v441 = vadd.f32 %v248, %v440
  %v442 = vpop.f32.mrb[0].mxu0
  %443 = vmatprep.mubr.f32.mxu0 0.0
  %444 = vmatmul.mubr.f32.gmra.mrb[0].mxu0 %v304
  %v445 = vpop.f32.mrb[0].mxu0
  %v446 = vadd.f32 %v253, %v445
  %v447 = vpop.f32.mrb[0].mxu0
  %448 = vmatprep.mubr.f32.mxu0 0.0
  %449 = vmatmul.mubr.f32.gmra.mrb[0].mxu0 %v307
  %v450 = vpop.f32.mrb[0].mxu0
  %v451 = vadd.f32 %v258, %v450
  %v452 = vpop.f32.mrb[0].mxu0
  %453 = vdwg.mxu0
  %v454 = vld [vmem:[%s0 + $0x2] sm:$0xff]
  %v455 = vld [vmem:[%s0 + $0x12] sm:$0xff]
  %v456 = vld [vmem:[%s0 + $0x22] sm:$0xff]
  %v457 = vld [vmem:[%s0 + $0x32] sm:$0xff]
  %v458 = vld [vmem:[%s0 + $0x42] sm:$0xff]
  %v459 = vld [vmem:[%s0 + $0x52] sm:$0xff]
  %v460 = vld [vmem:[%s0 + $0x62] sm:$0xff]
  %v461 = vld [vmem:[%s0 + $0x72] sm:$0xff]
  %v462 = vld [vmem:[%s0 + $0xa2] sm:$0xff]
  %v463 = vld [vmem:[%s0 + $0xb2] sm:$0xff]
  %v464 = vld [vmem:[%s0 + $0xc2] sm:$0xff]
  %v465 = vld [vmem:[%s0 + $0xd2] sm:$0xff]
  %v466 = vld [vmem:[%s0 + $0xe2] sm:$0xff]
  %v467 = vld [vmem:[%s0 + $0xf2] sm:$0xff]
  %v468 = vld [vmem:[%s0 + $0x102] sm:$0xff]
  %v469 = vld [vmem:[%s0 + $0x112] sm:$0xff]
  %s470 = scalar_lea.vmem %s1, 64
  %v471 = vld [vmem:[%s470] sm:$0xff]
  %v472 = vld [vmem:[%s470 + $0x8] sm:$0xff]
  %v473 = vld [vmem:[%s470 + $0x10] sm:$0xff]
  %v474 = vld [vmem:[%s470 + $0x18] sm:$0xff]
  %v476 = vsel %vm67, %v454, 0
  %v479 = vsel %vm67, %v455, 0
  %v482 = vsel %vm67, %v456, 0
  %v485 = vsel %vm67, %v457, 0
  %v488 = vsel %vm67, %v458, 0
  %v491 = vsel %vm67, %v459, 0
  %v494 = vsel %vm67, %v460, 0
  %v497 = vsel %vm67, %v461, 0
  %v500 = vsel %vm67, %v462, 0
  %v503 = vsel %vm67, %v463, 0
  %v506 = vsel %vm67, %v464, 0
  %v509 = vsel %vm67, %v465, 0
  %v512 = vsel %vm67, %v466, 0
  %v515 = vsel %vm67, %v467, 0
  %v518 = vsel %vm67, %v468, 0
  %v521 = vsel %vm67, %v469, 0
  %523 = vmatprep.subr.mxu0 0.0
  %524 = vmatpush1.msra.mxu0 %v471
  %525 = vmatprep.subr.mxu0 0.0
  %526 = vmatpush1.msra.mxu0 %v472
  %527 = vmatprep.subr.mxu0 0.0
  %528 = vmatpush1.msra.mxu0 %v473
  %529 = vmatprep.subr.mxu0 0.0
  %530 = vmatpush1.msra.mxu0 %v474
  %531 = vmatprep.subr.mxu0 0.0
  %532 = vmatpush1.msra.mxu0 0.0
  %533 = vmatprep.subr.mxu0 0.0
  %534 = vmatpush1.msra.mxu0 0.0
  %535 = vmatprep.subr.mxu0 0.0
  %536 = vmatpush1.msra.mxu0 0.0
  %537 = vmatprep.subr.mxu0 0.0
  %538 = vmatpush1.msra.mxu0 0.0
  %539 = vmatprep.subr.mxu0 0.0
  %540 = vmatpush1.msra.mxu0 0.0
  %541 = vmatprep.subr.mxu0 0.0
  %542 = vmatpush1.msra.mxu0 0.0
  %543 = vmatprep.subr.mxu0 0.0
  %544 = vmatpush1.msra.mxu0 0.0
  %545 = vmatprep.subr.mxu0 0.0
  %546 = vmatpush1.msra.mxu0 0.0
  %547 = vmatprep.subr.mxu0 0.0
  %548 = vmatpush1.msra.mxu0 0.0
  %549 = vmatprep.subr.mxu0 0.0
  %550 = vmatpush1.msra.mxu0 0.0
  %551 = vmatprep.subr.mxu0 0.0
  %552 = vmatpush1.msra.mxu0 0.0
  %553 = vmatprep.subr.mxu0 0.0
  %554 = vmatpush1.msra.mxu0 0.0
  %555 = vmatprep.subr.mxu0 0.0
  %556 = vmatpush1.msra.mxu0 0.0
  %557 = vmatprep.subr.mxu0 0.0
  %558 = vmatpush1.msra.mxu0 0.0
  %559 = vmatprep.subr.mxu0 0.0
  %560 = vmatpush1.msra.mxu0 0.0
  %561 = vmatprep.subr.mxu0 0.0
  %562 = vmatpush1.msra.mxu0 0.0
  %563 = vmatprep.subr.mxu0 0.0
  %564 = vmatpush1.msra.mxu0 0.0
  %565 = vmatprep.subr.mxu0 0.0
  %566 = vmatpush1.msra.mxu0 0.0
  %567 = vmatprep.subr.mxu0 0.0
  %568 = vmatpush1.msra.mxu0 0.0
  %569 = vmatprep.subr.mxu0 0.0
  %570 = vmatpush1.msra.mxu0 0.0
  %571 = vmatprep.subr.mxu0 0.0
  %572 = vmatpush1.msra.mxu0 0.0
  %573 = vmatprep.subr.mxu0 0.0
  %574 = vmatpush1.msra.mxu0 0.0
  %575 = vmatprep.subr.mxu0 0.0
  %576 = vmatpush1.msra.mxu0 0.0
  %577 = vmatprep.subr.mxu0 0.0
  %578 = vmatpush1.msra.mxu0 0.0
  %579 = vmatprep.subr.mxu0 0.0
  %580 = vmatpush1.msra.mxu0 0.0
  %581 = vmatprep.subr.mxu0 0.0
  %582 = vmatpush1.msra.mxu0 0.0
  %583 = vmatprep.subr.mxu0 0.0
  %584 = vmatpush1.msra.mxu0 0.0
  %585 = vmatprep.subr.mxu0 0.0
  %586 = vmatpush1.msra.mxu0 0.0
  %587 = vmatprep.mubr.f32.mxu0 0.0
  %588 = vmatmul.mubr.f32.gmra.mrb[0].mxu0 %v476
  %v589 = vpop.f32.mrb[0].mxu0
  %v590 = vadd.f32 0.0, %v589
  %v591 = vpop.f32.mrb[0].mxu0
  %592 = vmatprep.mubr.f32.mxu0 0.0
  %593 = vmatmul.mubr.f32.gmra.mrb[0].mxu0 %v479
  %v594 = vpop.f32.mrb[0].mxu0
  %v595 = vadd.f32 0.0, %v594
  %v596 = vpop.f32.mrb[0].mxu0
  %597 = vmatprep.mubr.f32.mxu0 0.0
  %598 = vmatmul.mubr.f32.gmra.mrb[0].mxu0 %v482
  %v599 = vpop.f32.mrb[0].mxu0
  %v600 = vadd.f32 0.0, %v599
  %v601 = vpop.f32.mrb[0].mxu0
  %602 = vmatprep.mubr.f32.mxu0 0.0
  %603 = vmatmul.mubr.f32.gmra.mrb[0].mxu0 %v485
  %v604 = vpop.f32.mrb[0].mxu0
  %v605 = vadd.f32 0.0, %v604
  %v606 = vpop.f32.mrb[0].mxu0
  %607 = vmatprep.mubr.f32.mxu0 0.0
  %608 = vmatmul.mubr.f32.gmra.mrb[0].mxu0 %v488
  %v609 = vpop.f32.mrb[0].mxu0
  %v610 = vadd.f32 0.0, %v609
  %v611 = vpop.f32.mrb[0].mxu0
  %612 = vmatprep.mubr.f32.mxu0 0.0
  %613 = vmatmul.mubr.f32.gmra.mrb[0].mxu0 %v491
  %v614 = vpop.f32.mrb[0].mxu0
  %v615 = vadd.f32 0.0, %v614
  %v616 = vpop.f32.mrb[0].mxu0
  %617 = vmatprep.mubr.f32.mxu0 0.0
  %618 = vmatmul.mubr.f32.gmra.mrb[0].mxu0 %v494
  %v619 = vpop.f32.mrb[0].mxu0
  %v620 = vadd.f32 0.0, %v619
  %v621 = vpop.f32.mrb[0].mxu0
  %622 = vmatprep.mubr.f32.mxu0 0.0
  %623 = vmatmul.mubr.f32.gmra.mrb[0].mxu0 %v497
  %v624 = vpop.f32.mrb[0].mxu0
  %v625 = vadd.f32 0.0, %v624
  %v626 = vpop.f32.mrb[0].mxu0
  %627 = vmatprep.mubr.f32.mxu0 0.0
  %628 = vmatmul.mubr.f32.gmra.mrb[0].mxu0 %v500
  %v629 = vpop.f32.mrb[0].mxu0
  %v630 = vadd.f32 0.0, %v629
  %v631 = vpop.f32.mrb[0].mxu0
  %632 = vmatprep.mubr.f32.mxu0 0.0
  %633 = vmatmul.mubr.f32.gmra.mrb[0].mxu0 %v503
  %v634 = vpop.f32.mrb[0].mxu0
  %v635 = vadd.f32 0.0, %v634
  %v636 = vpop.f32.mrb[0].mxu0
  %637 = vmatprep.mubr.f32.mxu0 0.0
  %638 = vmatmul.mubr.f32.gmra.mrb[0].mxu0 %v506
  %v639 = vpop.f32.mrb[0].mxu0
  %v640 = vadd.f32 0.0, %v639
  %v641 = vpop.f32.mrb[0].mxu0
  %642 = vmatprep.mubr.f32.mxu0 0.0
  %643 = vmatmul.mubr.f32.gmra.mrb[0].mxu0 %v509
  %v644 = vpop.f32.mrb[0].mxu0
  %v645 = vadd.f32 0.0, %v644
  %v646 = vpop.f32.mrb[0].mxu0
  %647 = vmatprep.mubr.f32.mxu0 0.0
  %648 = vmatmul.mubr.f32.gmra.mrb[0].mxu0 %v512
  %v649 = vpop.f32.mrb[0].mxu0
  %v650 = vadd.f32 0.0, %v649
  %v651 = vpop.f32.mrb[0].mxu0
  %652 = vmatprep.mubr.f32.mxu0 0.0
  %653 = vmatmul.mubr.f32.gmra.mrb[0].mxu0 %v515
  %v654 = vpop.f32.mrb[0].mxu0
  %v655 = vadd.f32 0.0, %v654
  %v656 = vpop.f32.mrb[0].mxu0
  %657 = vmatprep.mubr.f32.mxu0 0.0
  %658 = vmatmul.mubr.f32.gmra.mrb[0].mxu0 %v518
  %v659 = vpop.f32.mrb[0].mxu0
  %v660 = vadd.f32 0.0, %v659
  %v661 = vpop.f32.mrb[0].mxu0
  %662 = vmatprep.mubr.f32.mxu0 0.0
  %663 = vmatmul.mubr.f32.gmra.mrb[0].mxu0 %v521
  %v664 = vpop.f32.mrb[0].mxu0
  %v665 = vadd.f32 0.0, %v664
  %v666 = vpop.f32.mrb[0].mxu0
  %667 = vdwg.mxu0
  %v668 = vadd.f32 %v376, %v590
  %v669 = vadd.f32 %v381, %v595
  %v670 = vadd.f32 %v386, %v600
  %v671 = vadd.f32 %v391, %v605
  %v672 = vadd.f32 %v396, %v610
  %v673 = vadd.f32 %v401, %v615
  %v674 = vadd.f32 %v406, %v620
  %v675 = vadd.f32 %v411, %v625
  %v676 = vadd.f32 %v416, %v630
  %v677 = vadd.f32 %v421, %v635
  %v678 = vadd.f32 %v426, %v640
  %v679 = vadd.f32 %v431, %v645
  %v680 = vadd.f32 %v436, %v650
  %v681 = vadd.f32 %v441, %v655
  %v682 = vadd.f32 %v446, %v660
  %v683 = vadd.f32 %v451, %v665
  %s684 = scalar_lea.vmem %s0, 16
  %v685 = vld [vmem:[%s684] sm:$0xff]
  %v686 = vld [vmem:[%s684 + $0x10] sm:$0xff]
  %v687 = vld [vmem:[%s684 + $0x20] sm:$0xff]
  %v688 = vld [vmem:[%s684 + $0x30] sm:$0xff]
  %v689 = vld [vmem:[%s684 + $0x40] sm:$0xff]
  %v690 = vld [vmem:[%s684 + $0x50] sm:$0xff]
  %v691 = vld [vmem:[%s684 + $0x60] sm:$0xff]
  %v692 = vld [vmem:[%s684 + $0x70] sm:$0xff]
  %v693 = vld [vmem:[%s684 + $0xa0] sm:$0xff]
  %v694 = vld [vmem:[%s684 + $0xb0] sm:$0xff]
  %v695 = vld [vmem:[%s684 + $0xc0] sm:$0xff]
  %v696 = vld [vmem:[%s684 + $0xd0] sm:$0xff]
  %v697 = vld [vmem:[%s684 + $0xe0] sm:$0xff]
  %v698 = vld [vmem:[%s684 + $0xf0] sm:$0xff]
  %v699 = vld [vmem:[%s684 + $0x100] sm:$0xff]
  %v700 = vld [vmem:[%s684 + $0x110] sm:$0xff]
  %s701 = scalar_lea.vmem %s1, 96
  %v702 = vld [vmem:[%s701] sm:$0xff]
  %v703 = vld [vmem:[%s701 + $0x8] sm:$0xff]
  %v704 = vld [vmem:[%s701 + $0x10] sm:$0xff]
  %v705 = vld [vmem:[%s701 + $0x18] sm:$0xff]
  %v707 = vsel %vm67, %v685, 0
  %v710 = vsel %vm67, %v686, 0
  %v713 = vsel %vm67, %v687, 0
  %v716 = vsel %vm67, %v688, 0
  %v719 = vsel %vm67, %v689, 0
  %v722 = vsel %vm67, %v690, 0
  %v725 = vsel %vm67, %v691, 0
  %v728 = vsel %vm67, %v692, 0
  %v731 = vsel %vm67, %v693, 0
  %v734 = vsel %vm67, %v694, 0
  %v737 = vsel %vm67, %v695, 0
  %v740 = vsel %vm67, %v696, 0
  %v743 = vsel %vm67, %v697, 0
  %v746 = vsel %vm67, %v698, 0
  %v749 = vsel %vm67, %v699, 0
  %v752 = vsel %vm67, %v700, 0
  %754 = vmatprep.subr.mxu0 0.0
  %755 = vmatpush1.msra.mxu0 %v702
  %756 = vmatprep.subr.mxu0 0.0
  %757 = vmatpush1.msra.mxu0 %v703
  %758 = vmatprep.subr.mxu0 0.0
  %759 = vmatpush1.msra.mxu0 %v704
  %760 = vmatprep.subr.mxu0 0.0
  %761 = vmatpush1.msra.mxu0 %v705
  %762 = vmatprep.subr.mxu0 0.0
  %763 = vmatpush1.msra.mxu0 0.0
  %764 = vmatprep.subr.mxu0 0.0
  %765 = vmatpush1.msra.mxu0 0.0
  %766 = vmatprep.subr.mxu0 0.0
  %767 = vmatpush1.msra.mxu0 0.0
  %768 = vmatprep.subr.mxu0 0.0
  %769 = vmatpush1.msra.mxu0 0.0
  %770 = vmatprep.subr.mxu0 0.0
  %771 = vmatpush1.msra.mxu0 0.0
  %772 = vmatprep.subr.mxu0 0.0
  %773 = vmatpush1.msra.mxu0 0.0
  %774 = vmatprep.subr.mxu0 0.0
  %775 = vmatpush1.msra.mxu0 0.0
  %776 = vmatprep.subr.mxu0 0.0
  %777 = vmatpush1.msra.mxu0 0.0
  %778 = vmatprep.subr.mxu0 0.0
  %779 = vmatpush1.msra.mxu0 0.0
  %780 = vmatprep.subr.mxu0 0.0
  %781 = vmatpush1.msra.mxu0 0.0
  %782 = vmatprep.subr.mxu0 0.0
  %783 = vmatpush1.msra.mxu0 0.0
  %784 = vmatprep.subr.mxu0 0.0
  %785 = vmatpush1.msra.mxu0 0.0
  %786 = vmatprep.subr.mxu0 0.0
  %787 = vmatpush1.msra.mxu0 0.0
  %788 = vmatprep.subr.mxu0 0.0
  %789 = vmatpush1.msra.mxu0 0.0
  %790 = vmatprep.subr.mxu0 0.0
  %791 = vmatpush1.msra.mxu0 0.0
  %792 = vmatprep.subr.mxu0 0.0
  %793 = vmatpush1.msra.mxu0 0.0
  %794 = vmatprep.subr.mxu0 0.0
  %795 = vmatpush1.msra.mxu0 0.0
  %796 = vmatprep.subr.mxu0 0.0
  %797 = vmatpush1.msra.mxu0 0.0
  %798 = vmatprep.subr.mxu0 0.0
  %799 = vmatpush1.msra.mxu0 0.0
  %800 = vmatprep.subr.mxu0 0.0
  %801 = vmatpush1.msra.mxu0 0.0
  %802 = vmatprep.subr.mxu0 0.0
  %803 = vmatpush1.msra.mxu0 0.0
  %804 = vmatprep.subr.mxu0 0.0
  %805 = vmatpush1.msra.mxu0 0.0
  %806 = vmatprep.subr.mxu0 0.0
  %807 = vmatpush1.msra.mxu0 0.0
  %808 = vmatprep.subr.mxu0 0.0
  %809 = vmatpush1.msra.mxu0 0.0
  %810 = vmatprep.subr.mxu0 0.0
  %811 = vmatpush1.msra.mxu0 0.0
  %812 = vmatprep.subr.mxu0 0.0
  %813 = vmatpush1.msra.mxu0 0.0
  %814 = vmatprep.subr.mxu0 0.0
  %815 = vmatpush1.msra.mxu0 0.0
  %816 = vmatprep.subr.mxu0 0.0
  %817 = vmatpush1.msra.mxu0 0.0
  %818 = vmatprep.mubr.f32.mxu0 0.0
  %819 = vmatmul.mubr.f32.gmra.mrb[0].mxu0 %v707
  %v820 = vpop.f32.mrb[0].mxu0
  %v821 = vadd.f32 0.0, %v820
  %v822 = vpop.f32.mrb[0].mxu0
  %823 = vmatprep.mubr.f32.mxu0 0.0
  %824 = vmatmul.mubr.f32.gmra.mrb[0].mxu0 %v710
  %v825 = vpop.f32.mrb[0].mxu0
  %v826 = vadd.f32 0.0, %v825
  %v827 = vpop.f32.mrb[0].mxu0
  %828 = vmatprep.mubr.f32.mxu0 0.0
  %829 = vmatmul.mubr.f32.gmra.mrb[0].mxu0 %v713
  %v830 = vpop.f32.mrb[0].mxu0
  %v831 = vadd.f32 0.0, %v830
  %v832 = vpop.f32.mrb[0].mxu0
  %833 = vmatprep.mubr.f32.mxu0 0.0
  %834 = vmatmul.mubr.f32.gmra.mrb[0].mxu0 %v716
  %v835 = vpop.f32.mrb[0].mxu0
  %v836 = vadd.f32 0.0, %v835
  %v837 = vpop.f32.mrb[0].mxu0
  %838 = vmatprep.mubr.f32.mxu0 0.0
  %839 = vmatmul.mubr.f32.gmra.mrb[0].mxu0 %v719
  %v840 = vpop.f32.mrb[0].mxu0
  %v841 = vadd.f32 0.0, %v840
  %v842 = vpop.f32.mrb[0].mxu0
  %843 = vmatprep.mubr.f32.mxu0 0.0
  %844 = vmatmul.mubr.f32.gmra.mrb[0].mxu0 %v722
  %v845 = vpop.f32.mrb[0].mxu0
  %v846 = vadd.f32 0.0, %v845
  %v847 = vpop.f32.mrb[0].mxu0
  %848 = vmatprep.mubr.f32.mxu0 0.0
  %849 = vmatmul.mubr.f32.gmra.mrb[0].mxu0 %v725
  %v850 = vpop.f32.mrb[0].mxu0
  %v851 = vadd.f32 0.0, %v850
  %v852 = vpop.f32.mrb[0].mxu0
  %853 = vmatprep.mubr.f32.mxu0 0.0
  %854 = vmatmul.mubr.f32.gmra.mrb[0].mxu0 %v728
  %v855 = vpop.f32.mrb[0].mxu0
  %v856 = vadd.f32 0.0, %v855
  %v857 = vpop.f32.mrb[0].mxu0
  %858 = vmatprep.mubr.f32.mxu0 0.0
  %859 = vmatmul.mubr.f32.gmra.mrb[0].mxu0 %v731
  %v860 = vpop.f32.mrb[0].mxu0
  %v861 = vadd.f32 0.0, %v860
  %v862 = vpop.f32.mrb[0].mxu0
  %863 = vmatprep.mubr.f32.mxu0 0.0
  %864 = vmatmul.mubr.f32.gmra.mrb[0].mxu0 %v734
  %v865 = vpop.f32.mrb[0].mxu0
  %v866 = vadd.f32 0.0, %v865
  %v867 = vpop.f32.mrb[0].mxu0
  %868 = vmatprep.mubr.f32.mxu0 0.0
  %869 = vmatmul.mubr.f32.gmra.mrb[0].mxu0 %v737
  %v870 = vpop.f32.mrb[0].mxu0
  %v871 = vadd.f32 0.0, %v870
  %v872 = vpop.f32.mrb[0].mxu0
  %873 = vmatprep.mubr.f32.mxu0 0.0
  %874 = vmatmul.mubr.f32.gmra.mrb[0].mxu0 %v740
  %v875 = vpop.f32.mrb[0].mxu0
  %v876 = vadd.f32 0.0, %v875
  %v877 = vpop.f32.mrb[0].mxu0
  %878 = vmatprep.mubr.f32.mxu0 0.0
  %879 = vmatmul.mubr.f32.gmra.mrb[0].mxu0 %v743
  %v880 = vpop.f32.mrb[0].mxu0
  %v881 = vadd.f32 0.0, %v880
  %v882 = vpop.f32.mrb[0].mxu0
  %883 = vmatprep.mubr.f32.mxu0 0.0
  %884 = vmatmul.mubr.f32.gmra.mrb[0].mxu0 %v746
  %v885 = vpop.f32.mrb[0].mxu0
  %v886 = vadd.f32 0.0, %v885
  %v887 = vpop.f32.mrb[0].mxu0
  %888 = vmatprep.mubr.f32.mxu0 0.0
  %889 = vmatmul.mubr.f32.gmra.mrb[0].mxu0 %v749
  %v890 = vpop.f32.mrb[0].mxu0
  %v891 = vadd.f32 0.0, %v890
  %v892 = vpop.f32.mrb[0].mxu0
  %893 = vmatprep.mubr.f32.mxu0 0.0
  %894 = vmatmul.mubr.f32.gmra.mrb[0].mxu0 %v752
  %v895 = vpop.f32.mrb[0].mxu0
  %v896 = vadd.f32 0.0, %v895
  %v897 = vpop.f32.mrb[0].mxu0
  %898 = vdwg.mxu0
  %v899 = vadd.f32 %v668, %v821
  %v900 = vadd.f32 %v669, %v826
  %v901 = vadd.f32 %v670, %v831
  %v902 = vadd.f32 %v671, %v836
  %v903 = vadd.f32 %v672, %v841
  %v904 = vadd.f32 %v673, %v846
  %v905 = vadd.f32 %v674, %v851
  %v906 = vadd.f32 %v675, %v856
  %v907 = vadd.f32 %v676, %v861
  %v908 = vadd.f32 %v677, %v866
  %v909 = vadd.f32 %v678, %v871
  %v910 = vadd.f32 %v679, %v876
  %v911 = vadd.f32 %v680, %v881
  %v912 = vadd.f32 %v681, %v886
  %v913 = vadd.f32 %v682, %v891
  %v914 = vadd.f32 %v683, %v896
  %v915 = vld [vmem:[%s684 + $0x1] sm:$0xff]
  %v916 = vld [vmem:[%s684 + $0x11] sm:$0xff]
  %v917 = vld [vmem:[%s684 + $0x21] sm:$0xff]
  %v918 = vld [vmem:[%s684 + $0x31] sm:$0xff]
  %v919 = vld [vmem:[%s684 + $0x41] sm:$0xff]
  %v920 = vld [vmem:[%s684 + $0x51] sm:$0xff]
  %v921 = vld [vmem:[%s684 + $0x61] sm:$0xff]
  %v922 = vld [vmem:[%s684 + $0x71] sm:$0xff]
  %v923 = vld [vmem:[%s684 + $0xa1] sm:$0xff]
  %v924 = vld [vmem:[%s684 + $0xb1] sm:$0xff]
  %v925 = vld [vmem:[%s684 + $0xc1] sm:$0xff]
  %v926 = vld [vmem:[%s684 + $0xd1] sm:$0xff]
  %v927 = vld [vmem:[%s684 + $0xe1] sm:$0xff]
  %v928 = vld [vmem:[%s684 + $0xf1] sm:$0xff]
  %v929 = vld [vmem:[%s684 + $0x101] sm:$0xff]
  %v930 = vld [vmem:[%s684 + $0x111] sm:$0xff]
  %s931 = scalar_lea.vmem %s1, 128
  %v932 = vld [vmem:[%s931] sm:$0xff]
  %v933 = vld [vmem:[%s931 + $0x8] sm:$0xff]
  %v934 = vld [vmem:[%s931 + $0x10] sm:$0xff]
  %v935 = vld [vmem:[%s931 + $0x18] sm:$0xff]
  %v937 = vsel %vm67, %v915, 0
  %v940 = vsel %vm67, %v916, 0
  %v943 = vsel %vm67, %v917, 0
  %v946 = vsel %vm67, %v918, 0
  %v949 = vsel %vm67, %v919, 0
  %v952 = vsel %vm67, %v920, 0
  %v955 = vsel %vm67, %v921, 0
  %v958 = vsel %vm67, %v922, 0
  %v961 = vsel %vm67, %v923, 0
  %v964 = vsel %vm67, %v924, 0
  %v967 = vsel %vm67, %v925, 0
  %v970 = vsel %vm67, %v926, 0
  %v973 = vsel %vm67, %v927, 0
  %v976 = vsel %vm67, %v928, 0
  %v979 = vsel %vm67, %v929, 0
  %v982 = vsel %vm67, %v930, 0
  %984 = vmatprep.subr.mxu0 0.0
  %985 = vmatpush1.msra.mxu0 %v932
  %986 = vmatprep.subr.mxu0 0.0
  %987 = vmatpush1.msra.mxu0 %v933
  %988 = vmatprep.subr.mxu0 0.0
  %989 = vmatpush1.msra.mxu0 %v934
  %990 = vmatprep.subr.mxu0 0.0
  %991 = vmatpush1.msra.mxu0 %v935
  %992 = vmatprep.subr.mxu0 0.0
  %993 = vmatpush1.msra.mxu0 0.0
  %994 = vmatprep.subr.mxu0 0.0
  %995 = vmatpush1.msra.mxu0 0.0
  %996 = vmatprep.subr.mxu0 0.0
  %997 = vmatpush1.msra.mxu0 0.0
  %998 = vmatprep.subr.mxu0 0.0
  %999 = vmatpush1.msra.mxu0 0.0
  %1000 = vmatprep.subr.mxu0 0.0
  %1001 = vmatpush1.msra.mxu0 0.0
  %1002 = vmatprep.subr.mxu0 0.0
  %1003 = vmatpush1.msra.mxu0 0.0
  %1004 = vmatprep.subr.mxu0 0.0
  %1005 = vmatpush1.msra.mxu0 0.0
  %1006 = vmatprep.subr.mxu0 0.0
  %1007 = vmatpush1.msra.mxu0 0.0
  %1008 = vmatprep.subr.mxu0 0.0
  %1009 = vmatpush1.msra.mxu0 0.0
  %1010 = vmatprep.subr.mxu0 0.0
  %1011 = vmatpush1.msra.mxu0 0.0
  %1012 = vmatprep.subr.mxu0 0.0
  %1013 = vmatpush1.msra.mxu0 0.0
  %1014 = vmatprep.subr.mxu0 0.0
  %1015 = vmatpush1.msra.mxu0 0.0
  %1016 = vmatprep.subr.mxu0 0.0
  %1017 = vmatpush1.msra.mxu0 0.0
  %1018 = vmatprep.subr.mxu0 0.0
  %1019 = vmatpush1.msra.mxu0 0.0
  %1020 = vmatprep.subr.mxu0 0.0
  %1021 = vmatpush1.msra.mxu0 0.0
  %1022 = vmatprep.subr.mxu0 0.0
  %1023 = vmatpush1.msra.mxu0 0.0
  %1024 = vmatprep.subr.mxu0 0.0
  %1025 = vmatpush1.msra.mxu0 0.0
  %1026 = vmatprep.subr.mxu0 0.0
  %1027 = vmatpush1.msra.mxu0 0.0
  %1028 = vmatprep.subr.mxu0 0.0
  %1029 = vmatpush1.msra.mxu0 0.0
  %1030 = vmatprep.subr.mxu0 0.0
  %1031 = vmatpush1.msra.mxu0 0.0
  %1032 = vmatprep.subr.mxu0 0.0
  %1033 = vmatpush1.msra.mxu0 0.0
  %1034 = vmatprep.subr.mxu0 0.0
  %1035 = vmatpush1.msra.mxu0 0.0
  %1036 = vmatprep.subr.mxu0 0.0
  %1037 = vmatpush1.msra.mxu0 0.0
  %1038 = vmatprep.subr.mxu0 0.0
  %1039 = vmatpush1.msra.mxu0 0.0
  %1040 = vmatprep.subr.mxu0 0.0
  %1041 = vmatpush1.msra.mxu0 0.0
  %1042 = vmatprep.subr.mxu0 0.0
  %1043 = vmatpush1.msra.mxu0 0.0
  %1044 = vmatprep.subr.mxu0 0.0
  %1045 = vmatpush1.msra.mxu0 0.0
  %1046 = vmatprep.subr.mxu0 0.0
  %1047 = vmatpush1.msra.mxu0 0.0
  %1048 = vmatprep.mubr.f32.mxu0 0.0
  %1049 = vmatmul.mubr.f32.gmra.mrb[0].mxu0 %v937
  %v1050 = vpop.f32.mrb[0].mxu0
  %v1051 = vadd.f32 0.0, %v1050
  %v1052 = vpop.f32.mrb[0].mxu0
  %1053 = vmatprep.mubr.f32.mxu0 0.0
  %1054 = vmatmul.mubr.f32.gmra.mrb[0].mxu0 %v940
  %v1055 = vpop.f32.mrb[0].mxu0
  %v1056 = vadd.f32 0.0, %v1055
  %v1057 = vpop.f32.mrb[0].mxu0
  %1058 = vmatprep.mubr.f32.mxu0 0.0
  %1059 = vmatmul.mubr.f32.gmra.mrb[0].mxu0 %v943
  %v1060 = vpop.f32.mrb[0].mxu0
  %v1061 = vadd.f32 0.0, %v1060
  %v1062 = vpop.f32.mrb[0].mxu0
  %1063 = vmatprep.mubr.f32.mxu0 0.0
  %1064 = vmatmul.mubr.f32.gmra.mrb[0].mxu0 %v946
  %v1065 = vpop.f32.mrb[0].mxu0
  %v1066 = vadd.f32 0.0, %v1065
  %v1067 = vpop.f32.mrb[0].mxu0
  %1068 = vmatprep.mubr.f32.mxu0 0.0
  %1069 = vmatmul.mubr.f32.gmra.mrb[0].mxu0 %v949
  %v1070 = vpop.f32.mrb[0].mxu0
  %v1071 = vadd.f32 0.0, %v1070
  %v1072 = vpop.f32.mrb[0].mxu0
  %1073 = vmatprep.mubr.f32.mxu0 0.0
  %1074 = vmatmul.mubr.f32.gmra.mrb[0].mxu0 %v952
  %v1075 = vpop.f32.mrb[0].mxu0
  %v1076 = vadd.f32 0.0, %v1075
  %v1077 = vpop.f32.mrb[0].mxu0
  %1078 = vmatprep.mubr.f32.mxu0 0.0
  %1079 = vmatmul.mubr.f32.gmra.mrb[0].mxu0 %v955
  %v1080 = vpop.f32.mrb[0].mxu0
  %v1081 = vadd.f32 0.0, %v1080
  %v1082 = vpop.f32.mrb[0].mxu0
  %1083 = vmatprep.mubr.f32.mxu0 0.0
  %1084 = vmatmul.mubr.f32.gmra.mrb[0].mxu0 %v958
  %v1085 = vpop.f32.mrb[0].mxu0
  %v1086 = vadd.f32 0.0, %v1085
  %v1087 = vpop.f32.mrb[0].mxu0
  %1088 = vmatprep.mubr.f32.mxu0 0.0
  %1089 = vmatmul.mubr.f32.gmra.mrb[0].mxu0 %v961
  %v1090 = vpop.f32.mrb[0].mxu0
  %v1091 = vadd.f32 0.0, %v1090
  %v1092 = vpop.f32.mrb[0].mxu0
  %1093 = vmatprep.mubr.f32.mxu0 0.0
  %1094 = vmatmul.mubr.f32.gmra.mrb[0].mxu0 %v964
  %v1095 = vpop.f32.mrb[0].mxu0
  %v1096 = vadd.f32 0.0, %v1095
  %v1097 = vpop.f32.mrb[0].mxu0
  %1098 = vmatprep.mubr.f32.mxu0 0.0
  %1099 = vmatmul.mubr.f32.gmra.mrb[0].mxu0 %v967
  %v1100 = vpop.f32.mrb[0].mxu0
  %v1101 = vadd.f32 0.0, %v1100
  %v1102 = vpop.f32.mrb[0].mxu0
  %1103 = vmatprep.mubr.f32.mxu0 0.0
  %1104 = vmatmul.mubr.f32.gmra.mrb[0].mxu0 %v970
  %v1105 = vpop.f32.mrb[0].mxu0
  %v1106 = vadd.f32 0.0, %v1105
  %v1107 = vpop.f32.mrb[0].mxu0
  %1108 = vmatprep.mubr.f32.mxu0 0.0
  %1109 = vmatmul.mubr.f32.gmra.mrb[0].mxu0 %v973
  %v1110 = vpop.f32.mrb[0].mxu0
  %v1111 = vadd.f32 0.0, %v1110
  %v1112 = vpop.f32.mrb[0].mxu0
  %1113 = vmatprep.mubr.f32.mxu0 0.0
  %1114 = vmatmul.mubr.f32.gmra.mrb[0].mxu0 %v976
  %v1115 = vpop.f32.mrb[0].mxu0
  %v1116 = vadd.f32 0.0, %v1115
  %v1117 = vpop.f32.mrb[0].mxu0
  %1118 = vmatprep.mubr.f32.mxu0 0.0
  %1119 = vmatmul.mubr.f32.gmra.mrb[0].mxu0 %v979
  %v1120 = vpop.f32.mrb[0].mxu0
  %v1121 = vadd.f32 0.0, %v1120
  %v1122 = vpop.f32.mrb[0].mxu0
  %1123 = vmatprep.mubr.f32.mxu0 0.0
  %1124 = vmatmul.mubr.f32.gmra.mrb[0].mxu0 %v982
  %v1125 = vpop.f32.mrb[0].mxu0
  %v1126 = vadd.f32 0.0, %v1125
  %v1127 = vpop.f32.mrb[0].mxu0
  %1128 = vdwg.mxu0
  %v1129 = vadd.f32 %v899, %v1051
  %v1130 = vadd.f32 %v900, %v1056
  %v1131 = vadd.f32 %v901, %v1061
  %v1132 = vadd.f32 %v902, %v1066
  %v1133 = vadd.f32 %v903, %v1071
  %v1134 = vadd.f32 %v904, %v1076
  %v1135 = vadd.f32 %v905, %v1081
  %v1136 = vadd.f32 %v906, %v1086
  %v1137 = vadd.f32 %v907, %v1091
  %v1138 = vadd.f32 %v908, %v1096
  %v1139 = vadd.f32 %v909, %v1101
  %v1140 = vadd.f32 %v910, %v1106
  %v1141 = vadd.f32 %v911, %v1111
  %v1142 = vadd.f32 %v912, %v1116
  %v1143 = vadd.f32 %v913, %v1121
  %v1144 = vadd.f32 %v914, %v1126
  %v1145 = vld [vmem:[%s684 + $0x2] sm:$0xff]
  %v1146 = vld [vmem:[%s684 + $0x12] sm:$0xff]
  %v1147 = vld [vmem:[%s684 + $0x22] sm:$0xff]
  %v1148 = vld [vmem:[%s684 + $0x32] sm:$0xff]
  %v1149 = vld [vmem:[%s684 + $0x42] sm:$0xff]
  %v1150 = vld [vmem:[%s684 + $0x52] sm:$0xff]
  %v1151 = vld [vmem:[%s684 + $0x62] sm:$0xff]
  %v1152 = vld [vmem:[%s684 + $0x72] sm:$0xff]
  %v1153 = vld [vmem:[%s684 + $0xa2] sm:$0xff]
  %v1154 = vld [vmem:[%s684 + $0xb2] sm:$0xff]
  %v1155 = vld [vmem:[%s684 + $0xc2] sm:$0xff]
  %v1156 = vld [vmem:[%s684 + $0xd2] sm:$0xff]
  %v1157 = vld [vmem:[%s684 + $0xe2] sm:$0xff]
  %v1158 = vld [vmem:[%s684 + $0xf2] sm:$0xff]
  %v1159 = vld [vmem:[%s684 + $0x102] sm:$0xff]
  %v1160 = vld [vmem:[%s684 + $0x112] sm:$0xff]
  %s1161 = scalar_lea.vmem %s1, 160
  %v1162 = vld [vmem:[%s1161] sm:$0xff]
  %v1163 = vld [vmem:[%s1161 + $0x8] sm:$0xff]
  %v1164 = vld [vmem:[%s1161 + $0x10] sm:$0xff]
  %v1165 = vld [vmem:[%s1161 + $0x18] sm:$0xff]
  %v1167 = vsel %vm67, %v1145, 0
  %v1170 = vsel %vm67, %v1146, 0
  %v1173 = vsel %vm67, %v1147, 0
  %v1176 = vsel %vm67, %v1148, 0
  %v1179 = vsel %vm67, %v1149, 0
  %v1182 = vsel %vm67, %v1150, 0
  %v1185 = vsel %vm67, %v1151, 0
  %v1188 = vsel %vm67, %v1152, 0
  %v1191 = vsel %vm67, %v1153, 0
  %v1194 = vsel %vm67, %v1154, 0
  %v1197 = vsel %vm67, %v1155, 0
  %v1200 = vsel %vm67, %v1156, 0
  %v1203 = vsel %vm67, %v1157, 0
  %v1206 = vsel %vm67, %v1158, 0
  %v1209 = vsel %vm67, %v1159, 0
  %v1212 = vsel %vm67, %v1160, 0
  %1214 = vmatprep.subr.mxu0 0.0
  %1215 = vmatpush1.msra.mxu0 %v1162
  %1216 = vmatprep.subr.mxu0 0.0
  %1217 = vmatpush1.msra.mxu0 %v1163
  %1218 = vmatprep.subr.mxu0 0.0
  %1219 = vmatpush1.msra.mxu0 %v1164
  %1220 = vmatprep.subr.mxu0 0.0
  %1221 = vmatpush1.msra.mxu0 %v1165
  %1222 = vmatprep.subr.mxu0 0.0
  %1223 = vmatpush1.msra.mxu0 0.0
  %1224 = vmatprep.subr.mxu0 0.0
  %1225 = vmatpush1.msra.mxu0 0.0
  %1226 = vmatprep.subr.mxu0 0.0
  %1227 = vmatpush1.msra.mxu0 0.0
  %1228 = vmatprep.subr.mxu0 0.0
  %1229 = vmatpush1.msra.mxu0 0.0
  %1230 = vmatprep.subr.mxu0 0.0
  %1231 = vmatpush1.msra.mxu0 0.0
  %1232 = vmatprep.subr.mxu0 0.0
  %1233 = vmatpush1.msra.mxu0 0.0
  %1234 = vmatprep.subr.mxu0 0.0
  %1235 = vmatpush1.msra.mxu0 0.0
  %1236 = vmatprep.subr.mxu0 0.0
  %1237 = vmatpush1.msra.mxu0 0.0
  %1238 = vmatprep.subr.mxu0 0.0
  %1239 = vmatpush1.msra.mxu0 0.0
  %1240 = vmatprep.subr.mxu0 0.0
  %1241 = vmatpush1.msra.mxu0 0.0
  %1242 = vmatprep.subr.mxu0 0.0
  %1243 = vmatpush1.msra.mxu0 0.0
  %1244 = vmatprep.subr.mxu0 0.0
  %1245 = vmatpush1.msra.mxu0 0.0
  %1246 = vmatprep.subr.mxu0 0.0
  %1247 = vmatpush1.msra.mxu0 0.0
  %1248 = vmatprep.subr.mxu0 0.0
  %1249 = vmatpush1.msra.mxu0 0.0
  %1250 = vmatprep.subr.mxu0 0.0
  %1251 = vmatpush1.msra.mxu0 0.0
  %1252 = vmatprep.subr.mxu0 0.0
  %1253 = vmatpush1.msra.mxu0 0.0
  %1254 = vmatprep.subr.mxu0 0.0
  %1255 = vmatpush1.msra.mxu0 0.0
  %1256 = vmatprep.subr.mxu0 0.0
  %1257 = vmatpush1.msra.mxu0 0.0
  %1258 = vmatprep.subr.mxu0 0.0
  %1259 = vmatpush1.msra.mxu0 0.0
  %1260 = vmatprep.subr.mxu0 0.0
  %1261 = vmatpush1.msra.mxu0 0.0
  %1262 = vmatprep.subr.mxu0 0.0
  %1263 = vmatpush1.msra.mxu0 0.0
  %1264 = vmatprep.subr.mxu0 0.0
  %1265 = vmatpush1.msra.mxu0 0.0
  %1266 = vmatprep.subr.mxu0 0.0
  %1267 = vmatpush1.msra.mxu0 0.0
  %1268 = vmatprep.subr.mxu0 0.0
  %1269 = vmatpush1.msra.mxu0 0.0
  %1270 = vmatprep.subr.mxu0 0.0
  %1271 = vmatpush1.msra.mxu0 0.0
  %1272 = vmatprep.subr.mxu0 0.0
  %1273 = vmatpush1.msra.mxu0 0.0
  %1274 = vmatprep.subr.mxu0 0.0
  %1275 = vmatpush1.msra.mxu0 0.0
  %1276 = vmatprep.subr.mxu0 0.0
  %1277 = vmatpush1.msra.mxu0 0.0
  %1278 = vmatprep.mubr.f32.mxu0 0.0
  %1279 = vmatmul.mubr.f32.gmra.mrb[0].mxu0 %v1167
  %v1280 = vpop.f32.mrb[0].mxu0
  %v1281 = vadd.f32 0.0, %v1280
  %v1282 = vpop.f32.mrb[0].mxu0
  %1283 = vmatprep.mubr.f32.mxu0 0.0
  %1284 = vmatmul.mubr.f32.gmra.mrb[0].mxu0 %v1170
  %v1285 = vpop.f32.mrb[0].mxu0
  %v1286 = vadd.f32 0.0, %v1285
  %v1287 = vpop.f32.mrb[0].mxu0
  %1288 = vmatprep.mubr.f32.mxu0 0.0
  %1289 = vmatmul.mubr.f32.gmra.mrb[0].mxu0 %v1173
  %v1290 = vpop.f32.mrb[0].mxu0
  %v1291 = vadd.f32 0.0, %v1290
  %v1292 = vpop.f32.mrb[0].mxu0
  %1293 = vmatprep.mubr.f32.mxu0 0.0
  %1294 = vmatmul.mubr.f32.gmra.mrb[0].mxu0 %v1176
  %v1295 = vpop.f32.mrb[0].mxu0
  %v1296 = vadd.f32 0.0, %v1295
  %v1297 = vpop.f32.mrb[0].mxu0
  %1298 = vmatprep.mubr.f32.mxu0 0.0
  %1299 = vmatmul.mubr.f32.gmra.mrb[0].mxu0 %v1179
  %v1300 = vpop.f32.mrb[0].mxu0
  %v1301 = vadd.f32 0.0, %v1300
  %v1302 = vpop.f32.mrb[0].mxu0
  %1303 = vmatprep.mubr.f32.mxu0 0.0
  %1304 = vmatmul.mubr.f32.gmra.mrb[0].mxu0 %v1182
  %v1305 = vpop.f32.mrb[0].mxu0
  %v1306 = vadd.f32 0.0, %v1305
  %v1307 = vpop.f32.mrb[0].mxu0
  %1308 = vmatprep.mubr.f32.mxu0 0.0
  %1309 = vmatmul.mubr.f32.gmra.mrb[0].mxu0 %v1185
  %v1310 = vpop.f32.mrb[0].mxu0
  %v1311 = vadd.f32 0.0, %v1310
  %v1312 = vpop.f32.mrb[0].mxu0
  %1313 = vmatprep.mubr.f32.mxu0 0.0
  %1314 = vmatmul.mubr.f32.gmra.mrb[0].mxu0 %v1188
  %v1315 = vpop.f32.mrb[0].mxu0
  %v1316 = vadd.f32 0.0, %v1315
  %v1317 = vpop.f32.mrb[0].mxu0
  %1318 = vmatprep.mubr.f32.mxu0 0.0
  %1319 = vmatmul.mubr.f32.gmra.mrb[0].mxu0 %v1191
  %v1320 = vpop.f32.mrb[0].mxu0
  %v1321 = vadd.f32 0.0, %v1320
  %v1322 = vpop.f32.mrb[0].mxu0
  %1323 = vmatprep.mubr.f32.mxu0 0.0
  %1324 = vmatmul.mubr.f32.gmra.mrb[0].mxu0 %v1194
  %v1325 = vpop.f32.mrb[0].mxu0
  %v1326 = vadd.f32 0.0, %v1325
  %v1327 = vpop.f32.mrb[0].mxu0
  %1328 = vmatprep.mubr.f32.mxu0 0.0
  %1329 = vmatmul.mubr.f32.gmra.mrb[0].mxu0 %v1197
  %v1330 = vpop.f32.mrb[0].mxu0
  %v1331 = vadd.f32 0.0, %v1330
  %v1332 = vpop.f32.mrb[0].mxu0
  %1333 = vmatprep.mubr.f32.mxu0 0.0
  %1334 = vmatmul.mubr.f32.gmra.mrb[0].mxu0 %v1200
  %v1335 = vpop.f32.mrb[0].mxu0
  %v1336 = vadd.f32 0.0, %v1335
  %v1337 = vpop.f32.mrb[0].mxu0
  %1338 = vmatprep.mubr.f32.mxu0 0.0
  %1339 = vmatmul.mubr.f32.gmra.mrb[0].mxu0 %v1203
  %v1340 = vpop.f32.mrb[0].mxu0
  %v1341 = vadd.f32 0.0, %v1340
  %v1342 = vpop.f32.mrb[0].mxu0
  %1343 = vmatprep.mubr.f32.mxu0 0.0
  %1344 = vmatmul.mubr.f32.gmra.mrb[0].mxu0 %v1206
  %v1345 = vpop.f32.mrb[0].mxu0
  %v1346 = vadd.f32 0.0, %v1345
  %v1347 = vpop.f32.mrb[0].mxu0
  %1348 = vmatprep.mubr.f32.mxu0 0.0
  %1349 = vmatmul.mubr.f32.gmra.mrb[0].mxu0 %v1209
  %v1350 = vpop.f32.mrb[0].mxu0
  %v1351 = vadd.f32 0.0, %v1350
  %v1352 = vpop.f32.mrb[0].mxu0
  %1353 = vmatprep.mubr.f32.mxu0 0.0
  %1354 = vmatmul.mubr.f32.gmra.mrb[0].mxu0 %v1212
  %v1355 = vpop.f32.mrb[0].mxu0
  %v1356 = vadd.f32 0.0, %v1355
  %v1357 = vpop.f32.mrb[0].mxu0
  %1358 = vdwg.mxu0
  %v1359 = vadd.f32 %v1129, %v1281
  %v1360 = vadd.f32 %v1130, %v1286
  %v1361 = vadd.f32 %v1131, %v1291
  %v1362 = vadd.f32 %v1132, %v1296
  %v1363 = vadd.f32 %v1133, %v1301
  %v1364 = vadd.f32 %v1134, %v1306
  %v1365 = vadd.f32 %v1135, %v1311
  %v1366 = vadd.f32 %v1136, %v1316
  %v1367 = vadd.f32 %v1137, %v1321
  %v1368 = vadd.f32 %v1138, %v1326
  %v1369 = vadd.f32 %v1139, %v1331
  %v1370 = vadd.f32 %v1140, %v1336
  %v1371 = vadd.f32 %v1141, %v1341
  %v1372 = vadd.f32 %v1142, %v1346
  %v1373 = vadd.f32 %v1143, %v1351
  %v1374 = vadd.f32 %v1144, %v1356
  %s1375 = scalar_lea.vmem %s0, 32
  %v1376 = vld [vmem:[%s1375] sm:$0xff]
  %v1377 = vld [vmem:[%s1375 + $0x10] sm:$0xff]
  %v1378 = vld [vmem:[%s1375 + $0x20] sm:$0xff]
  %v1379 = vld [vmem:[%s1375 + $0x30] sm:$0xff]
  %v1380 = vld [vmem:[%s1375 + $0x40] sm:$0xff]
  %v1381 = vld [vmem:[%s1375 + $0x50] sm:$0xff]
  %v1382 = vld [vmem:[%s1375 + $0x60] sm:$0xff]
  %v1383 = vld [vmem:[%s1375 + $0x70] sm:$0xff]
  %v1384 = vld [vmem:[%s1375 + $0xa0] sm:$0xff]
  %v1385 = vld [vmem:[%s1375 + $0xb0] sm:$0xff]
  %v1386 = vld [vmem:[%s1375 + $0xc0] sm:$0xff]
  %v1387 = vld [vmem:[%s1375 + $0xd0] sm:$0xff]
  %v1388 = vld [vmem:[%s1375 + $0xe0] sm:$0xff]
  %v1389 = vld [vmem:[%s1375 + $0xf0] sm:$0xff]
  %v1390 = vld [vmem:[%s1375 + $0x100] sm:$0xff]
  %v1391 = vld [vmem:[%s1375 + $0x110] sm:$0xff]
  %s1392 = scalar_lea.vmem %s1, 192
  %v1393 = vld [vmem:[%s1392] sm:$0xff]
  %v1394 = vld [vmem:[%s1392 + $0x8] sm:$0xff]
  %v1395 = vld [vmem:[%s1392 + $0x10] sm:$0xff]
  %v1396 = vld [vmem:[%s1392 + $0x18] sm:$0xff]
  %v1398 = vsel %vm67, %v1376, 0
  %v1401 = vsel %vm67, %v1377, 0
  %v1404 = vsel %vm67, %v1378, 0
  %v1407 = vsel %vm67, %v1379, 0
  %v1410 = vsel %vm67, %v1380, 0
  %v1413 = vsel %vm67, %v1381, 0
  %v1416 = vsel %vm67, %v1382, 0
  %v1419 = vsel %vm67, %v1383, 0
  %v1422 = vsel %vm67, %v1384, 0
  %v1425 = vsel %vm67, %v1385, 0
  %v1428 = vsel %vm67, %v1386, 0
  %v1431 = vsel %vm67, %v1387, 0
  %v1434 = vsel %vm67, %v1388, 0
  %v1437 = vsel %vm67, %v1389, 0
  %v1440 = vsel %vm67, %v1390, 0
  %v1443 = vsel %vm67, %v1391, 0
  %1445 = vmatprep.subr.mxu0 0.0
  %1446 = vmatpush1.msra.mxu0 %v1393
  %1447 = vmatprep.subr.mxu0 0.0
  %1448 = vmatpush1.msra.mxu0 %v1394
  %1449 = vmatprep.subr.mxu0 0.0
  %1450 = vmatpush1.msra.mxu0 %v1395
  %1451 = vmatprep.subr.mxu0 0.0
  %1452 = vmatpush1.msra.mxu0 %v1396
  %1453 = vmatprep.subr.mxu0 0.0
  %1454 = vmatpush1.msra.mxu0 0.0
  %1455 = vmatprep.subr.mxu0 0.0
  %1456 = vmatpush1.msra.mxu0 0.0
  %1457 = vmatprep.subr.mxu0 0.0
  %1458 = vmatpush1.msra.mxu0 0.0
  %1459 = vmatprep.subr.mxu0 0.0
  %1460 = vmatpush1.msra.mxu0 0.0
  %1461 = vmatprep.subr.mxu0 0.0
  %1462 = vmatpush1.msra.mxu0 0.0
  %1463 = vmatprep.subr.mxu0 0.0
  %1464 = vmatpush1.msra.mxu0 0.0
  %1465 = vmatprep.subr.mxu0 0.0
  %1466 = vmatpush1.msra.mxu0 0.0
  %1467 = vmatprep.subr.mxu0 0.0
  %1468 = vmatpush1.msra.mxu0 0.0
  %1469 = vmatprep.subr.mxu0 0.0
  %1470 = vmatpush1.msra.mxu0 0.0
  %1471 = vmatprep.subr.mxu0 0.0
  %1472 = vmatpush1.msra.mxu0 0.0
  %1473 = vmatprep.subr.mxu0 0.0
  %1474 = vmatpush1.msra.mxu0 0.0
  %1475 = vmatprep.subr.mxu0 0.0
  %1476 = vmatpush1.msra.mxu0 0.0
  %1477 = vmatprep.subr.mxu0 0.0
  %1478 = vmatpush1.msra.mxu0 0.0
  %1479 = vmatprep.subr.mxu0 0.0
  %1480 = vmatpush1.msra.mxu0 0.0
  %1481 = vmatprep.subr.mxu0 0.0
  %1482 = vmatpush1.msra.mxu0 0.0
  %1483 = vmatprep.subr.mxu0 0.0
  %1484 = vmatpush1.msra.mxu0 0.0
  %1485 = vmatprep.subr.mxu0 0.0
  %1486 = vmatpush1.msra.mxu0 0.0
  %1487 = vmatprep.subr.mxu0 0.0
  %1488 = vmatpush1.msra.mxu0 0.0
  %1489 = vmatprep.subr.mxu0 0.0
  %1490 = vmatpush1.msra.mxu0 0.0
  %1491 = vmatprep.subr.mxu0 0.0
  %1492 = vmatpush1.msra.mxu0 0.0
  %1493 = vmatprep.subr.mxu0 0.0
  %1494 = vmatpush1.msra.mxu0 0.0
  %1495 = vmatprep.subr.mxu0 0.0
  %1496 = vmatpush1.msra.mxu0 0.0
  %1497 = vmatprep.subr.mxu0 0.0
  %1498 = vmatpush1.msra.mxu0 0.0
  %1499 = vmatprep.subr.mxu0 0.0
  %1500 = vmatpush1.msra.mxu0 0.0
  %1501 = vmatprep.subr.mxu0 0.0
  %1502 = vmatpush1.msra.mxu0 0.0
  %1503 = vmatprep.subr.mxu0 0.0
  %1504 = vmatpush1.msra.mxu0 0.0
  %1505 = vmatprep.subr.mxu0 0.0
  %1506 = vmatpush1.msra.mxu0 0.0
  %1507 = vmatprep.subr.mxu0 0.0
  %1508 = vmatpush1.msra.mxu0 0.0
  %1509 = vmatprep.mubr.f32.mxu0 0.0
  %1510 = vmatmul.mubr.f32.gmra.mrb[0].mxu0 %v1398
  %v1511 = vpop.f32.mrb[0].mxu0
  %v1512 = vadd.f32 0.0, %v1511
  %v1513 = vpop.f32.mrb[0].mxu0
  %1514 = vmatprep.mubr.f32.mxu0 0.0
  %1515 = vmatmul.mubr.f32.gmra.mrb[0].mxu0 %v1401
  %v1516 = vpop.f32.mrb[0].mxu0
  %v1517 = vadd.f32 0.0, %v1516
  %v1518 = vpop.f32.mrb[0].mxu0
  %1519 = vmatprep.mubr.f32.mxu0 0.0
  %1520 = vmatmul.mubr.f32.gmra.mrb[0].mxu0 %v1404
  %v1521 = vpop.f32.mrb[0].mxu0
  %v1522 = vadd.f32 0.0, %v1521
  %v1523 = vpop.f32.mrb[0].mxu0
  %1524 = vmatprep.mubr.f32.mxu0 0.0
  %1525 = vmatmul.mubr.f32.gmra.mrb[0].mxu0 %v1407
  %v1526 = vpop.f32.mrb[0].mxu0
  %v1527 = vadd.f32 0.0, %v1526
  %v1528 = vpop.f32.mrb[0].mxu0
  %1529 = vmatprep.mubr.f32.mxu0 0.0
  %1530 = vmatmul.mubr.f32.gmra.mrb[0].mxu0 %v1410
  %v1531 = vpop.f32.mrb[0].mxu0
  %v1532 = vadd.f32 0.0, %v1531
  %v1533 = vpop.f32.mrb[0].mxu0
  %1534 = vmatprep.mubr.f32.mxu0 0.0
  %1535 = vmatmul.mubr.f32.gmra.mrb[0].mxu0 %v1413
  %v1536 = vpop.f32.mrb[0].mxu0
  %v1537 = vadd.f32 0.0, %v1536
  %v1538 = vpop.f32.mrb[0].mxu0
  %1539 = vmatprep.mubr.f32.mxu0 0.0
  %1540 = vmatmul.mubr.f32.gmra.mrb[0].mxu0 %v1416
  %v1541 = vpop.f32.mrb[0].mxu0
  %v1542 = vadd.f32 0.0, %v1541
  %v1543 = vpop.f32.mrb[0].mxu0
  %1544 = vmatprep.mubr.f32.mxu0 0.0
  %1545 = vmatmul.mubr.f32.gmra.mrb[0].mxu0 %v1419
  %v1546 = vpop.f32.mrb[0].mxu0
  %v1547 = vadd.f32 0.0, %v1546
  %v1548 = vpop.f32.mrb[0].mxu0
  %1549 = vmatprep.mubr.f32.mxu0 0.0
  %1550 = vmatmul.mubr.f32.gmra.mrb[0].mxu0 %v1422
  %v1551 = vpop.f32.mrb[0].mxu0
  %v1552 = vadd.f32 0.0, %v1551
  %v1553 = vpop.f32.mrb[0].mxu0
  %1554 = vmatprep.mubr.f32.mxu0 0.0
  %1555 = vmatmul.mubr.f32.gmra.mrb[0].mxu0 %v1425
  %v1556 = vpop.f32.mrb[0].mxu0
  %v1557 = vadd.f32 0.0, %v1556
  %v1558 = vpop.f32.mrb[0].mxu0
  %1559 = vmatprep.mubr.f32.mxu0 0.0
  %1560 = vmatmul.mubr.f32.gmra.mrb[0].mxu0 %v1428
  %v1561 = vpop.f32.mrb[0].mxu0
  %v1562 = vadd.f32 0.0, %v1561
  %v1563 = vpop.f32.mrb[0].mxu0
  %1564 = vmatprep.mubr.f32.mxu0 0.0
  %1565 = vmatmul.mubr.f32.gmra.mrb[0].mxu0 %v1431
  %v1566 = vpop.f32.mrb[0].mxu0
  %v1567 = vadd.f32 0.0, %v1566
  %v1568 = vpop.f32.mrb[0].mxu0
  %1569 = vmatprep.mubr.f32.mxu0 0.0
  %1570 = vmatmul.mubr.f32.gmra.mrb[0].mxu0 %v1434
  %v1571 = vpop.f32.mrb[0].mxu0
  %v1572 = vadd.f32 0.0, %v1571
  %v1573 = vpop.f32.mrb[0].mxu0
  %1574 = vmatprep.mubr.f32.mxu0 0.0
  %1575 = vmatmul.mubr.f32.gmra.mrb[0].mxu0 %v1437
  %v1576 = vpop.f32.mrb[0].mxu0
  %v1577 = vadd.f32 0.0, %v1576
  %v1578 = vpop.f32.mrb[0].mxu0
  %1579 = vmatprep.mubr.f32.mxu0 0.0
  %1580 = vmatmul.mubr.f32.gmra.mrb[0].mxu0 %v1440
  %v1581 = vpop.f32.mrb[0].mxu0
  %v1582 = vadd.f32 0.0, %v1581
  %v1583 = vpop.f32.mrb[0].mxu0
  %1584 = vmatprep.mubr.f32.mxu0 0.0
  %1585 = vmatmul.mubr.f32.gmra.mrb[0].mxu0 %v1443
  %v1586 = vpop.f32.mrb[0].mxu0
  %v1587 = vadd.f32 0.0, %v1586
  %v1588 = vpop.f32.mrb[0].mxu0
  %1589 = vdwg.mxu0
  %v1590 = vadd.f32 %v1359, %v1512
  %v1591 = vadd.f32 %v1360, %v1517
  %v1592 = vadd.f32 %v1361, %v1522
  %v1593 = vadd.f32 %v1362, %v1527
  %v1594 = vadd.f32 %v1363, %v1532
  %v1595 = vadd.f32 %v1364, %v1537
  %v1596 = vadd.f32 %v1365, %v1542
  %v1597 = vadd.f32 %v1366, %v1547
  %v1598 = vadd.f32 %v1367, %v1552
  %v1599 = vadd.f32 %v1368, %v1557
  %v1600 = vadd.f32 %v1369, %v1562
  %v1601 = vadd.f32 %v1370, %v1567
  %v1602 = vadd.f32 %v1371, %v1572
  %v1603 = vadd.f32 %v1372, %v1577
  %v1604 = vadd.f32 %v1373, %v1582
  %v1605 = vadd.f32 %v1374, %v1587
  %v1606 = vld [vmem:[%s1375 + $0x1] sm:$0xff]
  %v1607 = vld [vmem:[%s1375 + $0x11] sm:$0xff]
  %v1608 = vld [vmem:[%s1375 + $0x21] sm:$0xff]
  %v1609 = vld [vmem:[%s1375 + $0x31] sm:$0xff]
  %v1610 = vld [vmem:[%s1375 + $0x41] sm:$0xff]
  %v1611 = vld [vmem:[%s1375 + $0x51] sm:$0xff]
  %v1612 = vld [vmem:[%s1375 + $0x61] sm:$0xff]
  %v1613 = vld [vmem:[%s1375 + $0x71] sm:$0xff]
  %v1614 = vld [vmem:[%s1375 + $0xa1] sm:$0xff]
  %v1615 = vld [vmem:[%s1375 + $0xb1] sm:$0xff]
  %v1616 = vld [vmem:[%s1375 + $0xc1] sm:$0xff]
  %v1617 = vld [vmem:[%s1375 + $0xd1] sm:$0xff]
  %v1618 = vld [vmem:[%s1375 + $0xe1] sm:$0xff]
  %v1619 = vld [vmem:[%s1375 + $0xf1] sm:$0xff]
  %v1620 = vld [vmem:[%s1375 + $0x101] sm:$0xff]
  %v1621 = vld [vmem:[%s1375 + $0x111] sm:$0xff]
  %s1622 = scalar_lea.vmem %s1, 224
  %v1623 = vld [vmem:[%s1622] sm:$0xff]
  %v1624 = vld [vmem:[%s1622 + $0x8] sm:$0xff]
  %v1625 = vld [vmem:[%s1622 + $0x10] sm:$0xff]
  %v1626 = vld [vmem:[%s1622 + $0x18] sm:$0xff]
  %v1628 = vsel %vm67, %v1606, 0
  %v1631 = vsel %vm67, %v1607, 0
  %v1634 = vsel %vm67, %v1608, 0
  %v1637 = vsel %vm67, %v1609, 0
  %v1640 = vsel %vm67, %v1610, 0
  %v1643 = vsel %vm67, %v1611, 0
  %v1646 = vsel %vm67, %v1612, 0
  %v1649 = vsel %vm67, %v1613, 0
  %v1652 = vsel %vm67, %v1614, 0
  %v1655 = vsel %vm67, %v1615, 0
  %v1658 = vsel %vm67, %v1616, 0
  %v1661 = vsel %vm67, %v1617, 0
  %v1664 = vsel %vm67, %v1618, 0
  %v1667 = vsel %vm67, %v1619, 0
  %v1670 = vsel %vm67, %v1620, 0
  %v1673 = vsel %vm67, %v1621, 0
  %1675 = vmatprep.subr.mxu0 0.0
  %1676 = vmatpush1.msra.mxu0 %v1623
  %1677 = vmatprep.subr.mxu0 0.0
  %1678 = vmatpush1.msra.mxu0 %v1624
  %1679 = vmatprep.subr.mxu0 0.0
  %1680 = vmatpush1.msra.mxu0 %v1625
  %1681 = vmatprep.subr.mxu0 0.0
  %1682 = vmatpush1.msra.mxu0 %v1626
  %1683 = vmatprep.subr.mxu0 0.0
  %1684 = vmatpush1.msra.mxu0 0.0
  %1685 = vmatprep.subr.mxu0 0.0
  %1686 = vmatpush1.msra.mxu0 0.0
  %1687 = vmatprep.subr.mxu0 0.0
  %1688 = vmatpush1.msra.mxu0 0.0
  %1689 = vmatprep.subr.mxu0 0.0
  %1690 = vmatpush1.msra.mxu0 0.0
  %1691 = vmatprep.subr.mxu0 0.0
  %1692 = vmatpush1.msra.mxu0 0.0
  %1693 = vmatprep.subr.mxu0 0.0
  %1694 = vmatpush1.msra.mxu0 0.0
  %1695 = vmatprep.subr.mxu0 0.0
  %1696 = vmatpush1.msra.mxu0 0.0
  %1697 = vmatprep.subr.mxu0 0.0
  %1698 = vmatpush1.msra.mxu0 0.0
  %1699 = vmatprep.subr.mxu0 0.0
  %1700 = vmatpush1.msra.mxu0 0.0
  %1701 = vmatprep.subr.mxu0 0.0
  %1702 = vmatpush1.msra.mxu0 0.0
  %1703 = vmatprep.subr.mxu0 0.0
  %1704 = vmatpush1.msra.mxu0 0.0
  %1705 = vmatprep.subr.mxu0 0.0
  %1706 = vmatpush1.msra.mxu0 0.0
  %1707 = vmatprep.subr.mxu0 0.0
  %1708 = vmatpush1.msra.mxu0 0.0
  %1709 = vmatprep.subr.mxu0 0.0
  %1710 = vmatpush1.msra.mxu0 0.0
  %1711 = vmatprep.subr.mxu0 0.0
  %1712 = vmatpush1.msra.mxu0 0.0
  %1713 = vmatprep.subr.mxu0 0.0
  %1714 = vmatpush1.msra.mxu0 0.0
  %1715 = vmatprep.subr.mxu0 0.0
  %1716 = vmatpush1.msra.mxu0 0.0
  %1717 = vmatprep.subr.mxu0 0.0
  %1718 = vmatpush1.msra.mxu0 0.0
  %1719 = vmatprep.subr.mxu0 0.0
  %1720 = vmatpush1.msra.mxu0 0.0
  %1721 = vmatprep.subr.mxu0 0.0
  %1722 = vmatpush1.msra.mxu0 0.0
  %1723 = vmatprep.subr.mxu0 0.0
  %1724 = vmatpush1.msra.mxu0 0.0
  %1725 = vmatprep.subr.mxu0 0.0
  %1726 = vmatpush1.msra.mxu0 0.0
  %1727 = vmatprep.subr.mxu0 0.0
  %1728 = vmatpush1.msra.mxu0 0.0
  %1729 = vmatprep.subr.mxu0 0.0
  %1730 = vmatpush1.msra.mxu0 0.0
  %1731 = vmatprep.subr.mxu0 0.0
  %1732 = vmatpush1.msra.mxu0 0.0
  %1733 = vmatprep.subr.mxu0 0.0
  %1734 = vmatpush1.msra.mxu0 0.0
  %1735 = vmatprep.subr.mxu0 0.0
  %1736 = vmatpush1.msra.mxu0 0.0
  %1737 = vmatprep.subr.mxu0 0.0
  %1738 = vmatpush1.msra.mxu0 0.0
  %1739 = vmatprep.mubr.f32.mxu0 0.0
  %1740 = vmatmul.mubr.f32.gmra.mrb[0].mxu0 %v1628
  %v1741 = vpop.f32.mrb[0].mxu0
  %v1742 = vadd.f32 0.0, %v1741
  %v1743 = vpop.f32.mrb[0].mxu0
  %1744 = vmatprep.mubr.f32.mxu0 0.0
  %1745 = vmatmul.mubr.f32.gmra.mrb[0].mxu0 %v1631
  %v1746 = vpop.f32.mrb[0].mxu0
  %v1747 = vadd.f32 0.0, %v1746
  %v1748 = vpop.f32.mrb[0].mxu0
  %1749 = vmatprep.mubr.f32.mxu0 0.0
  %1750 = vmatmul.mubr.f32.gmra.mrb[0].mxu0 %v1634
  %v1751 = vpop.f32.mrb[0].mxu0
  %v1752 = vadd.f32 0.0, %v1751
  %v1753 = vpop.f32.mrb[0].mxu0
  %1754 = vmatprep.mubr.f32.mxu0 0.0
  %1755 = vmatmul.mubr.f32.gmra.mrb[0].mxu0 %v1637
  %v1756 = vpop.f32.mrb[0].mxu0
  %v1757 = vadd.f32 0.0, %v1756
  %v1758 = vpop.f32.mrb[0].mxu0
  %1759 = vmatprep.mubr.f32.mxu0 0.0
  %1760 = vmatmul.mubr.f32.gmra.mrb[0].mxu0 %v1640
  %v1761 = vpop.f32.mrb[0].mxu0
  %v1762 = vadd.f32 0.0, %v1761
  %v1763 = vpop.f32.mrb[0].mxu0
  %1764 = vmatprep.mubr.f32.mxu0 0.0
  %1765 = vmatmul.mubr.f32.gmra.mrb[0].mxu0 %v1643
  %v1766 = vpop.f32.mrb[0].mxu0
  %v1767 = vadd.f32 0.0, %v1766
  %v1768 = vpop.f32.mrb[0].mxu0
  %1769 = vmatprep.mubr.f32.mxu0 0.0
  %1770 = vmatmul.mubr.f32.gmra.mrb[0].mxu0 %v1646
  %v1771 = vpop.f32.mrb[0].mxu0
  %v1772 = vadd.f32 0.0, %v1771
  %v1773 = vpop.f32.mrb[0].mxu0
  %1774 = vmatprep.mubr.f32.mxu0 0.0
  %1775 = vmatmul.mubr.f32.gmra.mrb[0].mxu0 %v1649
  %v1776 = vpop.f32.mrb[0].mxu0
  %v1777 = vadd.f32 0.0, %v1776
  %v1778 = vpop.f32.mrb[0].mxu0
  %1779 = vmatprep.mubr.f32.mxu0 0.0
  %1780 = vmatmul.mubr.f32.gmra.mrb[0].mxu0 %v1652
  %v1781 = vpop.f32.mrb[0].mxu0
  %v1782 = vadd.f32 0.0, %v1781
  %v1783 = vpop.f32.mrb[0].mxu0
  %1784 = vmatprep.mubr.f32.mxu0 0.0
  %1785 = vmatmul.mubr.f32.gmra.mrb[0].mxu0 %v1655
  %v1786 = vpop.f32.mrb[0].mxu0
  %v1787 = vadd.f32 0.0, %v1786
  %v1788 = vpop.f32.mrb[0].mxu0
  %1789 = vmatprep.mubr.f32.mxu0 0.0
  %1790 = vmatmul.mubr.f32.gmra.mrb[0].mxu0 %v1658
  %v1791 = vpop.f32.mrb[0].mxu0
  %v1792 = vadd.f32 0.0, %v1791
  %v1793 = vpop.f32.mrb[0].mxu0
  %1794 = vmatprep.mubr.f32.mxu0 0.0
  %1795 = vmatmul.mubr.f32.gmra.mrb[0].mxu0 %v1661
  %v1796 = vpop.f32.mrb[0].mxu0
  %v1797 = vadd.f32 0.0, %v1796
  %v1798 = vpop.f32.mrb[0].mxu0
  %1799 = vmatprep.mubr.f32.mxu0 0.0
  %1800 = vmatmul.mubr.f32.gmra.mrb[0].mxu0 %v1664
  %v1801 = vpop.f32.mrb[0].mxu0
  %v1802 = vadd.f32 0.0, %v1801
  %v1803 = vpop.f32.mrb[0].mxu0
  %1804 = vmatprep.mubr.f32.mxu0 0.0
  %1805 = vmatmul.mubr.f32.gmra.mrb[0].mxu0 %v1667
  %v1806 = vpop.f32.mrb[0].mxu0
  %v1807 = vadd.f32 0.0, %v1806
  %v1808 = vpop.f32.mrb[0].mxu0
  %1809 = vmatprep.mubr.f32.mxu0 0.0
  %1810 = vmatmul.mubr.f32.gmra.mrb[0].mxu0 %v1670
  %v1811 = vpop.f32.mrb[0].mxu0
  %v1812 = vadd.f32 0.0, %v1811
  %v1813 = vpop.f32.mrb[0].mxu0
  %1814 = vmatprep.mubr.f32.mxu0 0.0
  %1815 = vmatmul.mubr.f32.gmra.mrb[0].mxu0 %v1673
  %v1816 = vpop.f32.mrb[0].mxu0
  %v1817 = vadd.f32 0.0, %v1816
  %v1818 = vpop.f32.mrb[0].mxu0
  %1819 = vdwg.mxu0
  %v1820 = vadd.f32 %v1590, %v1742
  %v1821 = vadd.f32 %v1591, %v1747
  %v1822 = vadd.f32 %v1592, %v1752
  %v1823 = vadd.f32 %v1593, %v1757
  %v1824 = vadd.f32 %v1594, %v1762
  %v1825 = vadd.f32 %v1595, %v1767
  %v1826 = vadd.f32 %v1596, %v1772
  %v1827 = vadd.f32 %v1597, %v1777
  %v1828 = vadd.f32 %v1598, %v1782
  %v1829 = vadd.f32 %v1599, %v1787
  %v1830 = vadd.f32 %v1600, %v1792
  %v1831 = vadd.f32 %v1601, %v1797
  %v1832 = vadd.f32 %v1602, %v1802
  %v1833 = vadd.f32 %v1603, %v1807
  %v1834 = vadd.f32 %v1604, %v1812
  %v1835 = vadd.f32 %v1605, %v1817
  %v1836 = vld [vmem:[%s1375 + $0x2] sm:$0xff]
  %v1837 = vld [vmem:[%s1375 + $0x12] sm:$0xff]
  %v1838 = vld [vmem:[%s1375 + $0x22] sm:$0xff]
  %v1839 = vld [vmem:[%s1375 + $0x32] sm:$0xff]
  %v1840 = vld [vmem:[%s1375 + $0x42] sm:$0xff]
  %v1841 = vld [vmem:[%s1375 + $0x52] sm:$0xff]
  %v1842 = vld [vmem:[%s1375 + $0x62] sm:$0xff]
  %v1843 = vld [vmem:[%s1375 + $0x72] sm:$0xff]
  %v1844 = vld [vmem:[%s1375 + $0xa2] sm:$0xff]
  %v1845 = vld [vmem:[%s1375 + $0xb2] sm:$0xff]
  %v1846 = vld [vmem:[%s1375 + $0xc2] sm:$0xff]
  %v1847 = vld [vmem:[%s1375 + $0xd2] sm:$0xff]
  %v1848 = vld [vmem:[%s1375 + $0xe2] sm:$0xff]
  %v1849 = vld [vmem:[%s1375 + $0xf2] sm:$0xff]
  %v1850 = vld [vmem:[%s1375 + $0x102] sm:$0xff]
  %v1851 = vld [vmem:[%s1375 + $0x112] sm:$0xff]
  %s1852 = scalar_lea.vmem %s1, 256
  %v1853 = vld [vmem:[%s1852] sm:$0xff]
  %v1854 = vld [vmem:[%s1852 + $0x8] sm:$0xff]
  %v1855 = vld [vmem:[%s1852 + $0x10] sm:$0xff]
  %v1856 = vld [vmem:[%s1852 + $0x18] sm:$0xff]
  %v1858 = vsel %vm67, %v1836, 0
  %v1861 = vsel %vm67, %v1837, 0
  %v1864 = vsel %vm67, %v1838, 0
  %v1867 = vsel %vm67, %v1839, 0
  %v1870 = vsel %vm67, %v1840, 0
  %v1873 = vsel %vm67, %v1841, 0
  %v1876 = vsel %vm67, %v1842, 0
  %v1879 = vsel %vm67, %v1843, 0
  %v1882 = vsel %vm67, %v1844, 0
  %v1885 = vsel %vm67, %v1845, 0
  %v1888 = vsel %vm67, %v1846, 0
  %v1891 = vsel %vm67, %v1847, 0
  %v1894 = vsel %vm67, %v1848, 0
  %v1897 = vsel %vm67, %v1849, 0
  %v1900 = vsel %vm67, %v1850, 0
  %v1903 = vsel %vm67, %v1851, 0
  %1905 = vmatprep.subr.mxu0 0.0
  %1906 = vmatpush1.msra.mxu0 %v1853
  %1907 = vmatprep.subr.mxu0 0.0
  %1908 = vmatpush1.msra.mxu0 %v1854
  %1909 = vmatprep.subr.mxu0 0.0
  %1910 = vmatpush1.msra.mxu0 %v1855
  %1911 = vmatprep.subr.mxu0 0.0
  %1912 = vmatpush1.msra.mxu0 %v1856
  %1913 = vmatprep.subr.mxu0 0.0
  %1914 = vmatpush1.msra.mxu0 0.0
  %1915 = vmatprep.subr.mxu0 0.0
  %1916 = vmatpush1.msra.mxu0 0.0
  %1917 = vmatprep.subr.mxu0 0.0
  %1918 = vmatpush1.msra.mxu0 0.0
  %1919 = vmatprep.subr.mxu0 0.0
  %1920 = vmatpush1.msra.mxu0 0.0
  %1921 = vmatprep.subr.mxu0 0.0
  %1922 = vmatpush1.msra.mxu0 0.0
  %1923 = vmatprep.subr.mxu0 0.0
  %1924 = vmatpush1.msra.mxu0 0.0
  %1925 = vmatprep.subr.mxu0 0.0
  %1926 = vmatpush1.msra.mxu0 0.0
  %1927 = vmatprep.subr.mxu0 0.0
  %1928 = vmatpush1.msra.mxu0 0.0
  %1929 = vmatprep.subr.mxu0 0.0
  %1930 = vmatpush1.msra.mxu0 0.0
  %1931 = vmatprep.subr.mxu0 0.0
  %1932 = vmatpush1.msra.mxu0 0.0
  %1933 = vmatprep.subr.mxu0 0.0
  %1934 = vmatpush1.msra.mxu0 0.0
  %1935 = vmatprep.subr.mxu0 0.0
  %1936 = vmatpush1.msra.mxu0 0.0
  %1937 = vmatprep.subr.mxu0 0.0
  %1938 = vmatpush1.msra.mxu0 0.0
  %1939 = vmatprep.subr.mxu0 0.0
  %1940 = vmatpush1.msra.mxu0 0.0
  %1941 = vmatprep.subr.mxu0 0.0
  %1942 = vmatpush1.msra.mxu0 0.0
  %1943 = vmatprep.subr.mxu0 0.0
  %1944 = vmatpush1.msra.mxu0 0.0
  %1945 = vmatprep.subr.mxu0 0.0
  %1946 = vmatpush1.msra.mxu0 0.0
  %1947 = vmatprep.subr.mxu0 0.0
  %1948 = vmatpush1.msra.mxu0 0.0
  %1949 = vmatprep.subr.mxu0 0.0
  %1950 = vmatpush1.msra.mxu0 0.0
  %1951 = vmatprep.subr.mxu0 0.0
  %1952 = vmatpush1.msra.mxu0 0.0
  %1953 = vmatprep.subr.mxu0 0.0
  %1954 = vmatpush1.msra.mxu0 0.0
  %1955 = vmatprep.subr.mxu0 0.0
  %1956 = vmatpush1.msra.mxu0 0.0
  %1957 = vmatprep.subr.mxu0 0.0
  %1958 = vmatpush1.msra.mxu0 0.0
  %1959 = vmatprep.subr.mxu0 0.0
  %1960 = vmatpush1.msra.mxu0 0.0
  %1961 = vmatprep.subr.mxu0 0.0
  %1962 = vmatpush1.msra.mxu0 0.0
  %1963 = vmatprep.subr.mxu0 0.0
  %1964 = vmatpush1.msra.mxu0 0.0
  %1965 = vmatprep.subr.mxu0 0.0
  %1966 = vmatpush1.msra.mxu0 0.0
  %1967 = vmatprep.subr.mxu0 0.0
  %1968 = vmatpush1.msra.mxu0 0.0
  %1969 = vmatprep.mubr.f32.mxu0 0.0
  %1970 = vmatmul.mubr.f32.gmra.mrb[0].mxu0 %v1858
  %v1971 = vpop.f32.mrb[0].mxu0
  %v1972 = vadd.f32 0.0, %v1971
  %v1973 = vpop.f32.mrb[0].mxu0
  %1974 = vmatprep.mubr.f32.mxu0 0.0
  %1975 = vmatmul.mubr.f32.gmra.mrb[0].mxu0 %v1861
  %v1976 = vpop.f32.mrb[0].mxu0
  %v1977 = vadd.f32 0.0, %v1976
  %v1978 = vpop.f32.mrb[0].mxu0
  %1979 = vmatprep.mubr.f32.mxu0 0.0
  %1980 = vmatmul.mubr.f32.gmra.mrb[0].mxu0 %v1864
  %v1981 = vpop.f32.mrb[0].mxu0
  %v1982 = vadd.f32 0.0, %v1981
  %v1983 = vpop.f32.mrb[0].mxu0
  %1984 = vmatprep.mubr.f32.mxu0 0.0
  %1985 = vmatmul.mubr.f32.gmra.mrb[0].mxu0 %v1867
  %v1986 = vpop.f32.mrb[0].mxu0
  %v1987 = vadd.f32 0.0, %v1986
  %v1988 = vpop.f32.mrb[0].mxu0
  %1989 = vmatprep.mubr.f32.mxu0 0.0
  %1990 = vmatmul.mubr.f32.gmra.mrb[0].mxu0 %v1870
  %v1991 = vpop.f32.mrb[0].mxu0
  %v1992 = vadd.f32 0.0, %v1991
  %v1993 = vpop.f32.mrb[0].mxu0
  %1994 = vmatprep.mubr.f32.mxu0 0.0
  %1995 = vmatmul.mubr.f32.gmra.mrb[0].mxu0 %v1873
  %v1996 = vpop.f32.mrb[0].mxu0
  %v1997 = vadd.f32 0.0, %v1996
  %v1998 = vpop.f32.mrb[0].mxu0
  %1999 = vmatprep.mubr.f32.mxu0 0.0
  %2000 = vmatmul.mubr.f32.gmra.mrb[0].mxu0 %v1876
  %v2001 = vpop.f32.mrb[0].mxu0
  %v2002 = vadd.f32 0.0, %v2001
  %v2003 = vpop.f32.mrb[0].mxu0
  %2004 = vmatprep.mubr.f32.mxu0 0.0
  %2005 = vmatmul.mubr.f32.gmra.mrb[0].mxu0 %v1879
  %v2006 = vpop.f32.mrb[0].mxu0
  %v2007 = vadd.f32 0.0, %v2006
  %v2008 = vpop.f32.mrb[0].mxu0
  %2009 = vmatprep.mubr.f32.mxu0 0.0
  %2010 = vmatmul.mubr.f32.gmra.mrb[0].mxu0 %v1882
  %v2011 = vpop.f32.mrb[0].mxu0
  %v2012 = vadd.f32 0.0, %v2011
  %v2013 = vpop.f32.mrb[0].mxu0
  %2014 = vmatprep.mubr.f32.mxu0 0.0
  %2015 = vmatmul.mubr.f32.gmra.mrb[0].mxu0 %v1885
  %v2016 = vpop.f32.mrb[0].mxu0
  %v2017 = vadd.f32 0.0, %v2016
  %v2018 = vpop.f32.mrb[0].mxu0
  %2019 = vmatprep.mubr.f32.mxu0 0.0
  %2020 = vmatmul.mubr.f32.gmra.mrb[0].mxu0 %v1888
  %v2021 = vpop.f32.mrb[0].mxu0
  %v2022 = vadd.f32 0.0, %v2021
  %v2023 = vpop.f32.mrb[0].mxu0
  %2024 = vmatprep.mubr.f32.mxu0 0.0
  %2025 = vmatmul.mubr.f32.gmra.mrb[0].mxu0 %v1891
  %v2026 = vpop.f32.mrb[0].mxu0
  %v2027 = vadd.f32 0.0, %v2026
  %v2028 = vpop.f32.mrb[0].mxu0
  %2029 = vmatprep.mubr.f32.mxu0 0.0
  %2030 = vmatmul.mubr.f32.gmra.mrb[0].mxu0 %v1894
  %v2031 = vpop.f32.mrb[0].mxu0
  %v2032 = vadd.f32 0.0, %v2031
  %v2033 = vpop.f32.mrb[0].mxu0
  %2034 = vmatprep.mubr.f32.mxu0 0.0
  %2035 = vmatmul.mubr.f32.gmra.mrb[0].mxu0 %v1897
  %v2036 = vpop.f32.mrb[0].mxu0
  %v2037 = vadd.f32 0.0, %v2036
  %v2038 = vpop.f32.mrb[0].mxu0
  %2039 = vmatprep.mubr.f32.mxu0 0.0
  %2040 = vmatmul.mubr.f32.gmra.mrb[0].mxu0 %v1900
  %v2041 = vpop.f32.mrb[0].mxu0
  %v2042 = vadd.f32 0.0, %v2041
  %v2043 = vpop.f32.mrb[0].mxu0
  %2044 = vmatprep.mubr.f32.mxu0 0.0
  %2045 = vmatmul.mubr.f32.gmra.mrb[0].mxu0 %v1903
  %v2046 = vpop.f32.mrb[0].mxu0
  %v2047 = vadd.f32 0.0, %v2046
  %v2048 = vpop.f32.mrb[0].mxu0
  %2049 = vdwg.mxu0
  %v2050 = vadd.f32 %v1820, %v1972
  %v2051 = vadd.f32 %v1821, %v1977
  %v2052 = vadd.f32 %v1822, %v1982
  %v2053 = vadd.f32 %v1823, %v1987
  %v2054 = vadd.f32 %v1824, %v1992
  %v2055 = vadd.f32 %v1825, %v1997
  %v2056 = vadd.f32 %v1826, %v2002
  %v2057 = vadd.f32 %v1827, %v2007
  %v2058 = vadd.f32 %v1828, %v2012
  %v2059 = vadd.f32 %v1829, %v2017
  %v2060 = vadd.f32 %v1830, %v2022
  %v2061 = vadd.f32 %v1831, %v2027
  %v2062 = vadd.f32 %v1832, %v2032
  %v2063 = vadd.f32 %v1833, %v2037
  %v2064 = vadd.f32 %v1834, %v2042
  %v2065 = vadd.f32 %v1835, %v2047
  %v2066 = vld [vmem:[%s3] sm:$0x1]
  %v2067 = vlaneseq
  %v2068 = vshrl.u32 %v2067, 7
  %v2069 = vsub.s32 0, %v2068
  %v2070 = vrot.slane %v2066, %v2069
  %v2071 = vadd.f32 %v2050, %v2070
  %v2072 = vadd.f32 %v2051, %v2070
  %v2073 = vadd.f32 %v2052, %v2070
  %v2074 = vadd.f32 %v2053, %v2070
  %v2075 = vadd.f32 %v2054, %v2070
  %v2076 = vadd.f32 %v2055, %v2070
  %v2077 = vadd.f32 %v2056, %v2070
  %v2078 = vadd.f32 %v2057, %v2070
  %v2079 = vadd.f32 %v2058, %v2070
  %v2080 = vadd.f32 %v2059, %v2070
  %v2081 = vadd.f32 %v2060, %v2070
  %v2082 = vadd.f32 %v2061, %v2070
  %v2083 = vadd.f32 %v2062, %v2070
  %v2084 = vadd.f32 %v2063, %v2070
  %v2085 = vadd.f32 %v2064, %v2070
  %v2086 = vadd.f32 %v2065, %v2070
  %vm2087 = vcmask 523264
  %v2088 = vsel %vm2087, %v2071, 0.0
  %v2089 = vsel %vm2087, %v2072, 0.0
  %v2090 = vadd.f32 %v2088, %v2089
  %v2091 = vsel %vm2087, %v2073, 0.0
  %v2092 = vadd.f32 %v2090, %v2091
  %v2093 = vsel %vm2087, %v2074, 0.0
  %v2094 = vadd.f32 %v2092, %v2093
  %v2095 = vsel %vm2087, %v2075, 0.0
  %v2096 = vadd.f32 %v2094, %v2095
  %v2097 = vsel %vm2087, %v2076, 0.0
  %v2098 = vadd.f32 %v2096, %v2097
  %v2099 = vsel %vm2087, %v2077, 0.0
  %v2100 = vadd.f32 %v2098, %v2099
  %v2101 = vsel %vm2087, %v2078, 0.0
  %v2102 = vadd.f32 %v2100, %v2101
  %v2103 = vsel %vm2087, %v2079, 0.0
  %v2104 = vadd.f32 %v2102, %v2103
  %v2105 = vsel %vm2087, %v2080, 0.0
  %v2106 = vadd.f32 %v2104, %v2105
  %v2107 = vsel %vm2087, %v2081, 0.0
  %v2108 = vadd.f32 %v2106, %v2107
  %v2109 = vsel %vm2087, %v2082, 0.0
  %v2110 = vadd.f32 %v2108, %v2109
  %v2111 = vsel %vm2087, %v2083, 0.0
  %v2112 = vadd.f32 %v2110, %v2111
  %v2113 = vsel %vm2087, %v2084, 0.0
  %v2114 = vadd.f32 %v2112, %v2113
  %v2115 = vsel %vm2087, %v2085, 0.0
  %v2116 = vadd.f32 %v2114, %v2115
  %v2117 = vsel %vm2087, %v2086, 0.0
  %v2118 = vadd.f32 %v2116, %v2117
  %v2119 = vrot.slane %v2118, 4
  %v2120 = vadd.f32 %v2118, %v2119
  %v2121 = vrot.slane %v2120, 2
  %v2122 = vadd.f32 %v2120, %v2121
  %v2123 = vrot.slane %v2122, 1
  %v2124 = vadd.f32 %v2122, %v2123
  %v2125 = vmul.f32 %v2124, 0.0078125
  %v2126 = vmul.f32 %v2071, %v2071
  %v2127 = vmul.f32 %v2072, %v2072
  %v2128 = vmul.f32 %v2073, %v2073
  %v2129 = vmul.f32 %v2074, %v2074
  %v2130 = vmul.f32 %v2075, %v2075
  %v2131 = vmul.f32 %v2076, %v2076
  %v2132 = vmul.f32 %v2077, %v2077
  %v2133 = vmul.f32 %v2078, %v2078
  %v2134 = vmul.f32 %v2079, %v2079
  %v2135 = vmul.f32 %v2080, %v2080
  %v2136 = vmul.f32 %v2081, %v2081
  %v2137 = vmul.f32 %v2082, %v2082
  %v2138 = vmul.f32 %v2083, %v2083
  %v2139 = vmul.f32 %v2084, %v2084
  %v2140 = vmul.f32 %v2085, %v2085
  %v2141 = vmul.f32 %v2086, %v2086
  %v2142 = vsel %vm2087, %v2126, 0.0
  %v2143 = vsel %vm2087, %v2127, 0.0
  %v2144 = vadd.f32 %v2142, %v2143
  %v2145 = vsel %vm2087, %v2128, 0.0
  %v2146 = vadd.f32 %v2144, %v2145
  %v2147 = vsel %vm2087, %v2129, 0.0
  %v2148 = vadd.f32 %v2146, %v2147
  %v2149 = vsel %vm2087, %v2130, 0.0
  %v2150 = vadd.f32 %v2148, %v2149
  %v2151 = vsel %vm2087, %v2131, 0.0
  %v2152 = vadd.f32 %v2150, %v2151
  %v2153 = vsel %vm2087, %v2132, 0.0
  %v2154 = vadd.f32 %v2152, %v2153
  %v2155 = vsel %vm2087, %v2133, 0.0
  %v2156 = vadd.f32 %v2154, %v2155
  %v2157 = vsel %vm2087, %v2134, 0.0
  %v2158 = vadd.f32 %v2156, %v2157
  %v2159 = vsel %vm2087, %v2135, 0.0
  %v2160 = vadd.f32 %v2158, %v2159
  %v2161 = vsel %vm2087, %v2136, 0.0
  %v2162 = vadd.f32 %v2160, %v2161
  %v2163 = vsel %vm2087, %v2137, 0.0
  %v2164 = vadd.f32 %v2162, %v2163
  %v2165 = vsel %vm2087, %v2138, 0.0
  %v2166 = vadd.f32 %v2164, %v2165
  %v2167 = vsel %vm2087, %v2139, 0.0
  %v2168 = vadd.f32 %v2166, %v2167
  %v2169 = vsel %vm2087, %v2140, 0.0
  %v2170 = vadd.f32 %v2168, %v2169
  %v2171 = vsel %vm2087, %v2141, 0.0
  %v2172 = vadd.f32 %v2170, %v2171
  %v2173 = vrot.slane %v2172, 4
  %v2174 = vadd.f32 %v2172, %v2173
  %v2175 = vrot.slane %v2174, 2
  %v2176 = vadd.f32 %v2174, %v2175
  %v2177 = vrot.slane %v2176, 1
  %v2178 = vadd.f32 %v2176, %v2177
  %v2179 = vmul.f32 %v2178, 0.0078125
  %v2180 = vld [vmem:[%s5] sm:$0xff]
  %v2181 = vld [vmem:[%s5 + $0x8] sm:$0xff]
  %v2182 = vld [vmem:[%s5 + $0x10] sm:$0xff]
  %v2183 = vld [vmem:[%s5 + $0x18] sm:$0xff]
  %v2184 = vld [vmem:[%s5 + $0x20] sm:$0xff]
  %v2185 = vld [vmem:[%s5 + $0x28] sm:$0xff]
  %v2186 = vld [vmem:[%s5 + $0x30] sm:$0xff]
  %v2187 = vld [vmem:[%s5 + $0x38] sm:$0xff]
  %v2189 = vsel %vm2087, %v2125, 0
  %2191 = vmatprep.subr.mxu0 0.0
  %2192 = vmatpush1.msra.mxu0 %v2180
  %2193 = vmatprep.subr.mxu0 0.0
  %2194 = vmatpush1.msra.mxu0 %v2181
  %2195 = vmatprep.subr.mxu0 0.0
  %2196 = vmatpush1.msra.mxu0 %v2182
  %2197 = vmatprep.subr.mxu0 0.0
  %2198 = vmatpush1.msra.mxu0 %v2183
  %2199 = vmatprep.subr.mxu0 0.0
  %2200 = vmatpush1.msra.mxu0 %v2184
  %2201 = vmatprep.subr.mxu0 0.0
  %2202 = vmatpush1.msra.mxu0 %v2185
  %2203 = vmatprep.subr.mxu0 0.0
  %2204 = vmatpush1.msra.mxu0 %v2186
  %2205 = vmatprep.subr.mxu0 0.0
  %2206 = vmatpush1.msra.mxu0 %v2187
  %2207 = vmatprep.subr.mxu0 0.0
  %2208 = vmatpush1.msra.mxu0 0.0
  %2209 = vmatprep.subr.mxu0 0.0
  %2210 = vmatpush1.msra.mxu0 0.0
  %2211 = vmatprep.subr.mxu0 0.0
  %2212 = vmatpush1.msra.mxu0 0.0
  %2213 = vmatprep.subr.mxu0 0.0
  %2214 = vmatpush1.msra.mxu0 0.0
  %2215 = vmatprep.subr.mxu0 0.0
  %2216 = vmatpush1.msra.mxu0 0.0
  %2217 = vmatprep.subr.mxu0 0.0
  %2218 = vmatpush1.msra.mxu0 0.0
  %2219 = vmatprep.subr.mxu0 0.0
  %2220 = vmatpush1.msra.mxu0 0.0
  %2221 = vmatprep.subr.mxu0 0.0
  %2222 = vmatpush1.msra.mxu0 0.0
  %2223 = vmatprep.subr.mxu0 0.0
  %2224 = vmatpush1.msra.mxu0 0.0
  %2225 = vmatprep.subr.mxu0 0.0
  %2226 = vmatpush1.msra.mxu0 0.0
  %2227 = vmatprep.subr.mxu0 0.0
  %2228 = vmatpush1.msra.mxu0 0.0
  %2229 = vmatprep.subr.mxu0 0.0
  %2230 = vmatpush1.msra.mxu0 0.0
  %2231 = vmatprep.subr.mxu0 0.0
  %2232 = vmatpush1.msra.mxu0 0.0
  %2233 = vmatprep.subr.mxu0 0.0
  %2234 = vmatpush1.msra.mxu0 0.0
  %2235 = vmatprep.subr.mxu0 0.0
  %2236 = vmatpush1.msra.mxu0 0.0
  %2237 = vmatprep.subr.mxu0 0.0
  %2238 = vmatpush1.msra.mxu0 0.0
  %2239 = vmatprep.subr.mxu0 0.0
  %2240 = vmatpush1.msra.mxu0 0.0
  %2241 = vmatprep.subr.mxu0 0.0
  %2242 = vmatpush1.msra.mxu0 0.0
  %2243 = vmatprep.subr.mxu0 0.0
  %2244 = vmatpush1.msra.mxu0 0.0
  %2245 = vmatprep.subr.mxu0 0.0
  %2246 = vmatpush1.msra.mxu0 0.0
  %2247 = vmatprep.subr.mxu0 0.0
  %2248 = vmatpush1.msra.mxu0 0.0
  %2249 = vmatprep.subr.mxu0 0.0
  %2250 = vmatpush1.msra.mxu0 0.0
  %2251 = vmatprep.subr.mxu0 0.0
  %2252 = vmatpush1.msra.mxu0 0.0
  %2253 = vmatprep.subr.mxu0 0.0
  %2254 = vmatpush1.msra.mxu0 0.0
  %2255 = vmatprep.mubr.f32.mxu0 0.0
  %2256 = vmatmul.mubr.f32.gmra.mrb[0].mxu0 %v2189
  %v2257 = vpop.f32.mrb[0].mxu0
  %v2258 = vadd.f32 0.0, %v2257
  %v2259 = vpop.f32.mrb[0].mxu0
  %2260 = vdwg.mxu0
  %v2262 = vsel %vm2087, %v2179, 0
  %2264 = vmatprep.subr.mxu0 0.0
  %2265 = vmatpush1.msra.mxu0 %v2180
  %2266 = vmatprep.subr.mxu0 0.0
  %2267 = vmatpush1.msra.mxu0 %v2181
  %2268 = vmatprep.subr.mxu0 0.0
  %2269 = vmatpush1.msra.mxu0 %v2182
  %2270 = vmatprep.subr.mxu0 0.0
  %2271 = vmatpush1.msra.mxu0 %v2183
  %2272 = vmatprep.subr.mxu0 0.0
  %2273 = vmatpush1.msra.mxu0 %v2184
  %2274 = vmatprep.subr.mxu0 0.0
  %2275 = vmatpush1.msra.mxu0 %v2185
  %2276 = vmatprep.subr.mxu0 0.0
  %2277 = vmatpush1.msra.mxu0 %v2186
  %2278 = vmatprep.subr.mxu0 0.0
  %2279 = vmatpush1.msra.mxu0 %v2187
  %2280 = vmatprep.subr.mxu0 0.0
  %2281 = vmatpush1.msra.mxu0 0.0
  %2282 = vmatprep.subr.mxu0 0.0
  %2283 = vmatpush1.msra.mxu0 0.0
  %2284 = vmatprep.subr.mxu0 0.0
  %2285 = vmatpush1.msra.mxu0 0.0
  %2286 = vmatprep.subr.mxu0 0.0
  %2287 = vmatpush1.msra.mxu0 0.0
  %2288 = vmatprep.subr.mxu0 0.0
  %2289 = vmatpush1.msra.mxu0 0.0
  %2290 = vmatprep.subr.mxu0 0.0
  %2291 = vmatpush1.msra.mxu0 0.0
  %2292 = vmatprep.subr.mxu0 0.0
  %2293 = vmatpush1.msra.mxu0 0.0
  %2294 = vmatprep.subr.mxu0 0.0
  %2295 = vmatpush1.msra.mxu0 0.0
  %2296 = vmatprep.subr.mxu0 0.0
  %2297 = vmatpush1.msra.mxu0 0.0
  %2298 = vmatprep.subr.mxu0 0.0
  %2299 = vmatpush1.msra.mxu0 0.0
  %2300 = vmatprep.subr.mxu0 0.0
  %2301 = vmatpush1.msra.mxu0 0.0
  %2302 = vmatprep.subr.mxu0 0.0
  %2303 = vmatpush1.msra.mxu0 0.0
  %2304 = vmatprep.subr.mxu0 0.0
  %2305 = vmatpush1.msra.mxu0 0.0
  %2306 = vmatprep.subr.mxu0 0.0
  %2307 = vmatpush1.msra.mxu0 0.0
  %2308 = vmatprep.subr.mxu0 0.0
  %2309 = vmatpush1.msra.mxu0 0.0
  %2310 = vmatprep.subr.mxu0 0.0
  %2311 = vmatpush1.msra.mxu0 0.0
  %2312 = vmatprep.subr.mxu0 0.0
  %2313 = vmatpush1.msra.mxu0 0.0
  %2314 = vmatprep.subr.mxu0 0.0
  %2315 = vmatpush1.msra.mxu0 0.0
  %2316 = vmatprep.subr.mxu0 0.0
  %2317 = vmatpush1.msra.mxu0 0.0
  %2318 = vmatprep.subr.mxu0 0.0
  %2319 = vmatpush1.msra.mxu0 0.0
  %2320 = vmatprep.subr.mxu0 0.0
  %2321 = vmatpush1.msra.mxu0 0.0
  %2322 = vmatprep.subr.mxu0 0.0
  %2323 = vmatpush1.msra.mxu0 0.0
  %2324 = vmatprep.subr.mxu0 0.0
  %2325 = vmatpush1.msra.mxu0 0.0
  %2326 = vmatprep.subr.mxu0 0.0
  %2327 = vmatpush1.msra.mxu0 0.0
  %2328 = vmatprep.mubr.f32.mxu0 0.0
  %2329 = vmatmul.mubr.f32.gmra.mrb[0].mxu0 %v2262
  %v2330 = vpop.f32.mrb[0].mxu0
  %v2331 = vadd.f32 0.0, %v2330
  %v2332 = vpop.f32.mrb[0].mxu0
  %2333 = vdwg.mxu0
  %v2334 = vmul.f32 %v2258, %v2258
  %v2335 = vsub.f32 %v2331, %v2334
  %v2336 = vlaneseq
  %v2337 = vshrl.u32 %v2336, 7
  %v2338 = vsub.s32 0, %v2337
  %v2339 = vrot.slane %v2258, %v2338
  %v2340 = vsub.f32 %v2071, %v2339
  %v2341 = vsub.f32 %v2072, %v2339
  %v2342 = vsub.f32 %v2073, %v2339
  %v2343 = vsub.f32 %v2074, %v2339
  %v2344 = vsub.f32 %v2075, %v2339
  %v2345 = vsub.f32 %v2076, %v2339
  %v2346 = vsub.f32 %v2077, %v2339
  %v2347 = vsub.f32 %v2078, %v2339
  %v2348 = vsub.f32 %v2079, %v2339
  %v2349 = vsub.f32 %v2080, %v2339
  %v2350 = vsub.f32 %v2081, %v2339
  %v2351 = vsub.f32 %v2082, %v2339
  %v2352 = vsub.f32 %v2083, %v2339
  %v2353 = vsub.f32 %v2084, %v2339
  %v2354 = vsub.f32 %v2085, %v2339
  %v2355 = vsub.f32 %v2086, %v2339
  %v2356 = vld [vmem:[%s3 + $0x1] sm:$0x1]
  %v2357 = vadd.f32 %v2335, 1e-05
  %v2358 = vrsqrt.pop %v2357
  %v2359 = vmul.f32 %v2356, %v2358
  %v2360 = vlaneseq
  %v2361 = vshrl.u32 %v2360, 7
  %v2362 = vsub.s32 0, %v2361
  %v2363 = vrot.slane %v2359, %v2362
  %v2364 = vmul.f32 %v2340, %v2363
  %v2365 = vmul.f32 %v2341, %v2363
  %v2366 = vmul.f32 %v2342, %v2363
  %v2367 = vmul.f32 %v2343, %v2363
  %v2368 = vmul.f32 %v2344, %v2363
  %v2369 = vmul.f32 %v2345, %v2363
  %v2370 = vmul.f32 %v2346, %v2363
  %v2371 = vmul.f32 %v2347, %v2363
  %v2372 = vmul.f32 %v2348, %v2363
  %v2373 = vmul.f32 %v2349, %v2363
  %v2374 = vmul.f32 %v2350, %v2363
  %v2375 = vmul.f32 %v2351, %v2363
  %v2376 = vmul.f32 %v2352, %v2363
  %v2377 = vmul.f32 %v2353, %v2363
  %v2378 = vmul.f32 %v2354, %v2363
  %v2379 = vmul.f32 %v2355, %v2363
  %v2380 = vld [vmem:[%s3 + $0x2] sm:$0x1]
  %v2381 = vlaneseq
  %v2382 = vshrl.u32 %v2381, 7
  %v2383 = vsub.s32 0, %v2382
  %v2384 = vrot.slane %v2380, %v2383
  %v2385 = vadd.f32 %v2364, %v2384
  %v2386 = vadd.f32 %v2365, %v2384
  %v2387 = vadd.f32 %v2366, %v2384
  %v2388 = vadd.f32 %v2367, %v2384
  %v2389 = vadd.f32 %v2368, %v2384
  %v2390 = vadd.f32 %v2369, %v2384
  %v2391 = vadd.f32 %v2370, %v2384
  %v2392 = vadd.f32 %v2371, %v2384
  %v2393 = vadd.f32 %v2372, %v2384
  %v2394 = vadd.f32 %v2373, %v2384
  %v2395 = vadd.f32 %v2374, %v2384
  %v2396 = vadd.f32 %v2375, %v2384
  %v2397 = vadd.f32 %v2376, %v2384
  %v2398 = vadd.f32 %v2377, %v2384
  %v2399 = vadd.f32 %v2378, %v2384
  %v2400 = vadd.f32 %v2379, %v2384
  %v2401 = vmax.f32 %v2385, 0.0
  %v2402 = vmax.f32 %v2386, 0.0
  %v2403 = vmax.f32 %v2387, 0.0
  %v2404 = vmax.f32 %v2388, 0.0
  %v2405 = vmax.f32 %v2389, 0.0
  %v2406 = vmax.f32 %v2390, 0.0
  %v2407 = vmax.f32 %v2391, 0.0
  %v2408 = vmax.f32 %v2392, 0.0
  %v2409 = vmax.f32 %v2393, 0.0
  %v2410 = vmax.f32 %v2394, 0.0
  %v2411 = vmax.f32 %v2395, 0.0
  %v2412 = vmax.f32 %v2396, 0.0
  %v2413 = vmax.f32 %v2397, 0.0
  %v2414 = vmax.f32 %v2398, 0.0
  %v2415 = vmax.f32 %v2399, 0.0
  %v2416 = vmax.f32 %v2400, 0.0
  %2417 = vst.msk [vmem:[#allocation2] sm:$0xff] %vm2087, 0.0
  %vm2418 = vcmask 517120
  %2419 = vst.msk [vmem:[#allocation2 + $0x8] sm:$0x3] %vm2418, 0.0
  %2420 = vst.msk [vmem:[#allocation2 + $0x10] sm:$0xff] %vm2087, 0.0
  %2421 = vst.msk [vmem:[#allocation2 + $0x18] sm:$0x3] %vm2418, 0.0
  %2422 = vst.msk [vmem:[#allocation2 + $0x20] sm:$0xff] %vm2087, 0.0
  %2423 = vst.msk [vmem:[#allocation2 + $0x28] sm:$0x3] %vm2418, 0.0
  %2424 = vst.msk [vmem:[#allocation2 + $0x30] sm:$0xff] %vm2087, 0.0
  %2425 = vst.msk [vmem:[#allocation2 + $0x38] sm:$0x3] %vm2418, 0.0
  %2426 = vst.msk [vmem:[#allocation2 + $0x40] sm:$0xff] %vm2087, 0.0
  %2427 = vst.msk [vmem:[#allocation2 + $0x48] sm:$0x3] %vm2418, 0.0
  %2428 = vst.msk [vmem:[#allocation2 + $0x50] sm:$0xff] %vm2087, 0.0
  %2429 = vst.msk [vmem:[#allocation2 + $0x58] sm:$0x3] %vm2418, 0.0
  %2430 = vst.msk [vmem:[#allocation2 + $0x60] sm:$0xff] %vm2087, 0.0
  %2431 = vst.msk [vmem:[#allocation2 + $0x68] sm:$0x3] %vm2418, 0.0
  %2432 = vst.msk [vmem:[#allocation2 + $0x70] sm:$0xff] %vm2087, 0.0
  %2433 = vst.msk [vmem:[#allocation2 + $0x78] sm:$0x3] %vm2418, 0.0
  %2434 = vst.msk [vmem:[#allocation2 + $0x80] sm:$0xff] %vm2087, 0.0
  %2435 = vst.msk [vmem:[#allocation2 + $0x88] sm:$0x3] %vm2418, 0.0
  %2436 = vst.msk [vmem:[#allocation2 + $0x90] sm:$0xff] %vm2087, 0.0
  %2437 = vst.msk [vmem:[#allocation2 + $0x98] sm:$0x3] %vm2418, 0.0
  %2438 = vst.msk [vmem:[#allocation2 + $0xa0] sm:$0xff] %vm2087, 0.0
  %2439 = vst.msk [vmem:[#allocation2 + $0xa8] sm:$0x3] %vm2418, 0.0
  %2440 = vst.msk [vmem:[#allocation2 + $0xb0] sm:$0xff] %vm2087, 0.0
  %2441 = vst.msk [vmem:[#allocation2 + $0xb8] sm:$0x3] %vm2418, 0.0
  %2442 = vst.msk [vmem:[#allocation2 + $0xc0] sm:$0xff] %vm2087, 0.0
  %2443 = vst.msk [vmem:[#allocation2 + $0xc8] sm:$0x3] %vm2418, 0.0
  %2444 = vst.msk [vmem:[#allocation2 + $0xd0] sm:$0xff] %vm2087, 0.0
  %2445 = vst.msk [vmem:[#allocation2 + $0xd8] sm:$0x3] %vm2418, 0.0
  %2446 = vst.msk [vmem:[#allocation2 + $0xe0] sm:$0xff] %vm2087, 0.0
  %2447 = vst.msk [vmem:[#allocation2 + $0xe8] sm:$0x3] %vm2418, 0.0
  %2448 = vst.msk [vmem:[#allocation2 + $0xf0] sm:$0xff] %vm2087, 0.0
  %2449 = vst.msk [vmem:[#allocation2 + $0xf8] sm:$0x3] %vm2418, 0.0
  %2450 = vst.msk [vmem:[#allocation2 + $0x100] sm:$0xff] %vm2087, 0.0
  %2451 = vst.msk [vmem:[#allocation2 + $0x108] sm:$0x3] %vm2418, 0.0
  %2452 = vst.msk [vmem:[#allocation2 + $0x110] sm:$0xff] %vm2087, 0.0
  %2453 = vst.msk [vmem:[#allocation2 + $0x118] sm:$0x3] %vm2418, 0.0
  %2454 = vst.msk [vmem:[#allocation2 + $0x120] sm:$0xff] %vm2087, 0.0
  %2455 = vst.msk [vmem:[#allocation2 + $0x128] sm:$0x3] %vm2418, 0.0
  %2456 = vst.msk [vmem:[#allocation2 + $0x130] sm:$0xff] %vm2087, 0.0
  %2457 = vst.msk [vmem:[#allocation2 + $0x138] sm:$0x3] %vm2418, 0.0
  %s2458 = scalar_lea.vmem [#allocation2], 16
  %2459 = vst.msk [vmem:[%s2458 + $0x1] sm:$0xff] %vm2087, %v2401
  %2460 = vst.msk [vmem:[%s2458 + $0x11] sm:$0xff] %vm2087, %v2402
  %2461 = vst.msk [vmem:[%s2458 + $0x21] sm:$0xff] %vm2087, %v2403
  %2462 = vst.msk [vmem:[%s2458 + $0x31] sm:$0xff] %vm2087, %v2404
  %2463 = vst.msk [vmem:[%s2458 + $0x41] sm:$0xff] %vm2087, %v2405
  %2464 = vst.msk [vmem:[%s2458 + $0x51] sm:$0xff] %vm2087, %v2406
  %2465 = vst.msk [vmem:[%s2458 + $0x61] sm:$0xff] %vm2087, %v2407
  %2466 = vst.msk [vmem:[%s2458 + $0x71] sm:$0xff] %vm2087, %v2408
  %2467 = vst.msk [vmem:[%s2458 + $0xa1] sm:$0xff] %vm2087, %v2409
  %2468 = vst.msk [vmem:[%s2458 + $0xb1] sm:$0xff] %vm2087, %v2410
  %2469 = vst.msk [vmem:[%s2458 + $0xc1] sm:$0xff] %vm2087, %v2411
  %2470 = vst.msk [vmem:[%s2458 + $0xd1] sm:$0xff] %vm2087, %v2412
  %2471 = vst.msk [vmem:[%s2458 + $0xe1] sm:$0xff] %vm2087, %v2413
  %2472 = vst.msk [vmem:[%s2458 + $0xf1] sm:$0xff] %vm2087, %v2414
  %2473 = vst.msk [vmem:[%s2458 + $0x101] sm:$0xff] %vm2087, %v2415
  %2474 = vst.msk [vmem:[%s2458 + $0x111] sm:$0xff] %vm2087, %v2416
  %v2475 = vld [vmem:[#allocation2] sm:$0xff]
  %v2476 = vld [vmem:[#allocation2 + $0x10] sm:$0xff]
  %v2477 = vld [vmem:[#allocation2 + $0x20] sm:$0xff]
  %v2478 = vld [vmem:[#allocation2 + $0x30] sm:$0xff]
  %v2479 = vld [vmem:[#allocation2 + $0x40] sm:$0xff]
  %v2480 = vld [vmem:[#allocation2 + $0x50] sm:$0xff]
  %v2481 = vld [vmem:[#allocation2 + $0x60] sm:$0xff]
  %v2482 = vld [vmem:[#allocation2 + $0x70] sm:$0xff]
  %v2483 = vld [vmem:[#allocation2 + $0xa0] sm:$0xff]
  %v2484 = vld [vmem:[#allocation2 + $0xb0] sm:$0xff]
  %v2485 = vld [vmem:[#allocation2 + $0xc0] sm:$0xff]
  %v2486 = vld [vmem:[#allocation2 + $0xd0] sm:$0xff]
  %v2487 = vld [vmem:[#allocation2 + $0xe0] sm:$0xff]
  %v2488 = vld [vmem:[#allocation2 + $0xf0] sm:$0xff]
  %v2489 = vld [vmem:[#allocation2 + $0x100] sm:$0xff]
  %v2490 = vld [vmem:[#allocation2 + $0x110] sm:$0xff]
  %v2491 = vld [vmem:[%s2] sm:$0xff]
  %v2492 = vld [vmem:[%s2 + $0x8] sm:$0xff]
  %v2493 = vld [vmem:[%s2 + $0x10] sm:$0xff]
  %v2494 = vld [vmem:[%s2 + $0x18] sm:$0xff]
  %v2495 = vld [vmem:[%s2 + $0x20] sm:$0xff]
  %v2496 = vld [vmem:[%s2 + $0x28] sm:$0xff]
  %v2497 = vld [vmem:[%s2 + $0x30] sm:$0xff]
  %v2498 = vld [vmem:[%s2 + $0x38] sm:$0xff]
  %v2499 = vld [vmem:[#allocation2 + $0x1] sm:$0xff]
  %v2500 = vld [vmem:[#allocation2 + $0x11] sm:$0xff]
  %v2501 = vld [vmem:[#allocation2 + $0x21] sm:$0xff]
  %v2502 = vld [vmem:[#allocation2 + $0x31] sm:$0xff]
  %v2503 = vld [vmem:[#allocation2 + $0x41] sm:$0xff]
  %v2504 = vld [vmem:[#allocation2 + $0x51] sm:$0xff]
  %v2505 = vld [vmem:[#allocation2 + $0x61] sm:$0xff]
  %v2506 = vld [vmem:[#allocation2 + $0x71] sm:$0xff]
  %v2507 = vld [vmem:[#allocation2 + $0xa1] sm:$0xff]
  %v2508 = vld [vmem:[#allocation2 + $0xb1] sm:$0xff]
  %v2509 = vld [vmem:[#allocation2 + $0xc1] sm:$0xff]
  %v2510 = vld [vmem:[#allocation2 + $0xd1] sm:$0xff]
  %v2511 = vld [vmem:[#allocation2 + $0xe1] sm:$0xff]
  %v2512 = vld [vmem:[#allocation2 + $0xf1] sm:$0xff]
  %v2513 = vld [vmem:[#allocation2 + $0x101] sm:$0xff]
  %v2514 = vld [vmem:[#allocation2 + $0x111] sm:$0xff]
  %s2515 = scalar_lea.vmem %s2, 64
  %v2516 = vld [vmem:[%s2515] sm:$0xff]
  %v2517 = vld [vmem:[%s2515 + $0x8] sm:$0xff]
  %v2518 = vld [vmem:[%s2515 + $0x10] sm:$0xff]
  %v2519 = vld [vmem:[%s2515 + $0x18] sm:$0xff]
  %v2520 = vld [vmem:[%s2515 + $0x20] sm:$0xff]
  %v2521 = vld [vmem:[%s2515 + $0x28] sm:$0xff]
  %v2522 = vld [vmem:[%s2515 + $0x30] sm:$0xff]
  %v2523 = vld [vmem:[%s2515 + $0x38] sm:$0xff]
  %v2525 = vsel %vm2087, %v2499, 0
  %v2528 = vsel %vm2087, %v2500, 0
  %v2531 = vsel %vm2087, %v2501, 0
  %v2534 = vsel %vm2087, %v2502, 0
  %v2537 = vsel %vm2087, %v2503, 0
  %v2540 = vsel %vm2087, %v2504, 0
  %v2543 = vsel %vm2087, %v2505, 0
  %v2546 = vsel %vm2087, %v2506, 0
  %v2549 = vsel %vm2087, %v2507, 0
  %v2552 = vsel %vm2087, %v2508, 0
  %v2555 = vsel %vm2087, %v2509, 0
  %v2558 = vsel %vm2087, %v2510, 0
  %v2561 = vsel %vm2087, %v2511, 0
  %v2564 = vsel %vm2087, %v2512, 0
  %v2567 = vsel %vm2087, %v2513, 0
  %v2570 = vsel %vm2087, %v2514, 0
  %2572 = vmatprep.subr.mxu0 0.0
  %2573 = vmatpush1.msra.mxu0 %v2516
  %2574 = vmatprep.subr.mxu0 0.0
  %2575 = vmatpush1.msra.mxu0 %v2517
  %2576 = vmatprep.subr.mxu0 0.0
  %2577 = vmatpush1.msra.mxu0 %v2518
  %2578 = vmatprep.subr.mxu0 0.0
  %2579 = vmatpush1.msra.mxu0 %v2519
  %2580 = vmatprep.subr.mxu0 0.0
  %2581 = vmatpush1.msra.mxu0 %v2520
  %2582 = vmatprep.subr.mxu0 0.0
  %2583 = vmatpush1.msra.mxu0 %v2521
  %2584 = vmatprep.subr.mxu0 0.0
  %2585 = vmatpush1.msra.mxu0 %v2522
  %2586 = vmatprep.subr.mxu0 0.0
  %2587 = vmatpush1.msra.mxu0 %v2523
  %2588 = vmatprep.subr.mxu0 0.0
  %2589 = vmatpush1.msra.mxu0 0.0
  %2590 = vmatprep.subr.mxu0 0.0
  %2591 = vmatpush1.msra.mxu0 0.0
  %2592 = vmatprep.subr.mxu0 0.0
  %2593 = vmatpush1.msra.mxu0 0.0
  %2594 = vmatprep.subr.mxu0 0.0
  %2595 = vmatpush1.msra.mxu0 0.0
  %2596 = vmatprep.subr.mxu0 0.0
  %2597 = vmatpush1.msra.mxu0 0.0
  %2598 = vmatprep.subr.mxu0 0.0
  %2599 = vmatpush1.msra.mxu0 0.0
  %2600 = vmatprep.subr.mxu0 0.0
  %2601 = vmatpush1.msra.mxu0 0.0
  %2602 = vmatprep.subr.mxu0 0.0
  %2603 = vmatpush1.msra.mxu0 0.0
  %2604 = vmatprep.subr.mxu0 0.0
  %2605 = vmatpush1.msra.mxu0 0.0
  %2606 = vmatprep.subr.mxu0 0.0
  %2607 = vmatpush1.msra.mxu0 0.0
  %2608 = vmatprep.subr.mxu0 0.0
  %2609 = vmatpush1.msra.mxu0 0.0
  %2610 = vmatprep.subr.mxu0 0.0
  %2611 = vmatpush1.msra.mxu0 0.0
  %2612 = vmatprep.subr.mxu0 0.0
  %2613 = vmatpush1.msra.mxu0 0.0
  %2614 = vmatprep.subr.mxu0 0.0
  %2615 = vmatpush1.msra.mxu0 0.0
  %2616 = vmatprep.subr.mxu0 0.0
  %2617 = vmatpush1.msra.mxu0 0.0
  %2618 = vmatprep.subr.mxu0 0.0
  %2619 = vmatpush1.msra.mxu0 0.0
  %2620 = vmatprep.subr.mxu0 0.0
  %2621 = vmatpush1.msra.mxu0 0.0
  %2622 = vmatprep.subr.mxu0 0.0
  %2623 = vmatpush1.msra.mxu0 0.0
  %2624 = vmatprep.subr.mxu0 0.0
  %2625 = vmatpush1.msra.mxu0 0.0
  %2626 = vmatprep.subr.mxu0 0.0
  %2627 = vmatpush1.msra.mxu0 0.0
  %2628 = vmatprep.subr.mxu0 0.0
  %2629 = vmatpush1.msra.mxu0 0.0
  %2630 = vmatprep.subr.mxu0 0.0
  %2631 = vmatpush1.msra.mxu0 0.0
  %2632 = vmatprep.subr.mxu0 0.0
  %2633 = vmatpush1.msra.mxu0 0.0
  %2634 = vmatprep.subr.mxu0 0.0
  %2635 = vmatpush1.msra.mxu0 0.0
  %2636 = vmatprep.mubr.f32.mxu0 0.0
  %2637 = vmatmul.mubr.f32.gmra.mrb[0].mxu0 %v2525
  %v2638 = vpop.f32.mrb[0].mxu0
  %v2639 = vadd.f32 0.0, %v2638
  %v2640 = vpop.f32.mrb[0].mxu0
  %2641 = vmatprep.mubr.f32.mxu0 0.0
  %2642 = vmatmul.mubr.f32.gmra.mrb[0].mxu0 %v2528
  %v2643 = vpop.f32.mrb[0].mxu0
  %v2644 = vadd.f32 0.0, %v2643
  %v2645 = vpop.f32.mrb[0].mxu0
  %2646 = vmatprep.mubr.f32.mxu0 0.0
  %2647 = vmatmul.mubr.f32.gmra.mrb[0].mxu0 %v2531
  %v2648 = vpop.f32.mrb[0].mxu0
  %v2649 = vadd.f32 0.0, %v2648
  %v2650 = vpop.f32.mrb[0].mxu0
  %2651 = vmatprep.mubr.f32.mxu0 0.0
  %2652 = vmatmul.mubr.f32.gmra.mrb[0].mxu0 %v2534
  %v2653 = vpop.f32.mrb[0].mxu0
  %v2654 = vadd.f32 0.0, %v2653
  %v2655 = vpop.f32.mrb[0].mxu0
  %2656 = vmatprep.mubr.f32.mxu0 0.0
  %2657 = vmatmul.mubr.f32.gmra.mrb[0].mxu0 %v2537
  %v2658 = vpop.f32.mrb[0].mxu0
  %v2659 = vadd.f32 0.0, %v2658
  %v2660 = vpop.f32.mrb[0].mxu0
  %2661 = vmatprep.mubr.f32.mxu0 0.0
  %2662 = vmatmul.mubr.f32.gmra.mrb[0].mxu0 %v2540
  %v2663 = vpop.f32.mrb[0].mxu0
  %v2664 = vadd.f32 0.0, %v2663
  %v2665 = vpop.f32.mrb[0].mxu0
  %2666 = vmatprep.mubr.f32.mxu0 0.0
  %2667 = vmatmul.mubr.f32.gmra.mrb[0].mxu0 %v2543
  %v2668 = vpop.f32.mrb[0].mxu0
  %v2669 = vadd.f32 0.0, %v2668
  %v2670 = vpop.f32.mrb[0].mxu0
  %2671 = vmatprep.mubr.f32.mxu0 0.0
  %2672 = vmatmul.mubr.f32.gmra.mrb[0].mxu0 %v2546
  %v2673 = vpop.f32.mrb[0].mxu0
  %v2674 = vadd.f32 0.0, %v2673
  %v2675 = vpop.f32.mrb[0].mxu0
  %2676 = vmatprep.mubr.f32.mxu0 0.0
  %2677 = vmatmul.mubr.f32.gmra.mrb[0].mxu0 %v2549
  %v2678 = vpop.f32.mrb[0].mxu0
  %v2679 = vadd.f32 0.0, %v2678
  %v2680 = vpop.f32.mrb[0].mxu0
  %2681 = vmatprep.mubr.f32.mxu0 0.0
  %2682 = vmatmul.mubr.f32.gmra.mrb[0].mxu0 %v2552
  %v2683 = vpop.f32.mrb[0].mxu0
  %v2684 = vadd.f32 0.0, %v2683
  %v2685 = vpop.f32.mrb[0].mxu0
  %2686 = vmatprep.mubr.f32.mxu0 0.0
  %2687 = vmatmul.mubr.f32.gmra.mrb[0].mxu0 %v2555
  %v2688 = vpop.f32.mrb[0].mxu0
  %v2689 = vadd.f32 0.0, %v2688
  %v2690 = vpop.f32.mrb[0].mxu0
  %2691 = vmatprep.mubr.f32.mxu0 0.0
  %2692 = vmatmul.mubr.f32.gmra.mrb[0].mxu0 %v2558
  %v2693 = vpop.f32.mrb[0].mxu0
  %v2694 = vadd.f32 0.0, %v2693
  %v2695 = vpop.f32.mrb[0].mxu0
  %2696 = vmatprep.mubr.f32.mxu0 0.0
  %2697 = vmatmul.mubr.f32.gmra.mrb[0].mxu0 %v2561
  %v2698 = vpop.f32.mrb[0].mxu0
  %v2699 = vadd.f32 0.0, %v2698
  %v2700 = vpop.f32.mrb[0].mxu0
  %2701 = vmatprep.mubr.f32.mxu0 0.0
  %2702 = vmatmul.mubr.f32.gmra.mrb[0].mxu0 %v2564
  %v2703 = vpop.f32.mrb[0].mxu0
  %v2704 = vadd.f32 0.0, %v2703
  %v2705 = vpop.f32.mrb[0].mxu0
  %2706 = vmatprep.mubr.f32.mxu0 0.0
  %2707 = vmatmul.mubr.f32.gmra.mrb[0].mxu0 %v2567
  %v2708 = vpop.f32.mrb[0].mxu0
  %v2709 = vadd.f32 0.0, %v2708
  %v2710 = vpop.f32.mrb[0].mxu0
  %2711 = vmatprep.mubr.f32.mxu0 0.0
  %2712 = vmatmul.mubr.f32.gmra.mrb[0].mxu0 %v2570
  %v2713 = vpop.f32.mrb[0].mxu0
  %v2714 = vadd.f32 0.0, %v2713
  %v2715 = vpop.f32.mrb[0].mxu0
  %2716 = vdwg.mxu0
  %v2718 = vsel %vm2087, %v2475, 0
  %v2721 = vsel %vm2087, %v2476, 0
  %v2724 = vsel %vm2087, %v2477, 0
  %v2727 = vsel %vm2087, %v2478, 0
  %v2730 = vsel %vm2087, %v2479, 0
  %v2733 = vsel %vm2087, %v2480, 0
  %v2736 = vsel %vm2087, %v2481, 0
  %v2739 = vsel %vm2087, %v2482, 0
  %v2742 = vsel %vm2087, %v2483, 0
  %v2745 = vsel %vm2087, %v2484, 0
  %v2748 = vsel %vm2087, %v2485, 0
  %v2751 = vsel %vm2087, %v2486, 0
  %v2754 = vsel %vm2087, %v2487, 0
  %v2757 = vsel %vm2087, %v2488, 0
  %v2760 = vsel %vm2087, %v2489, 0
  %v2763 = vsel %vm2087, %v2490, 0
  %2765 = vmatprep.subr.mxu0 0.0
  %2766 = vmatpush1.msra.mxu0 %v2491
  %2767 = vmatprep.subr.mxu0 0.0
  %2768 = vmatpush1.msra.mxu0 %v2492
  %2769 = vmatprep.subr.mxu0 0.0
  %2770 = vmatpush1.msra.mxu0 %v2493
  %2771 = vmatprep.subr.mxu0 0.0
  %2772 = vmatpush1.msra.mxu0 %v2494
  %2773 = vmatprep.subr.mxu0 0.0
  %2774 = vmatpush1.msra.mxu0 %v2495
  %2775 = vmatprep.subr.mxu0 0.0
  %2776 = vmatpush1.msra.mxu0 %v2496
  %2777 = vmatprep.subr.mxu0 0.0
  %2778 = vmatpush1.msra.mxu0 %v2497
  %2779 = vmatprep.subr.mxu0 0.0
  %2780 = vmatpush1.msra.mxu0 %v2498
  %2781 = vmatprep.subr.mxu0 0.0
  %2782 = vmatpush1.msra.mxu0 0.0
  %2783 = vmatprep.subr.mxu0 0.0
  %2784 = vmatpush1.msra.mxu0 0.0
  %2785 = vmatprep.subr.mxu0 0.0
  %2786 = vmatpush1.msra.mxu0 0.0
  %2787 = vmatprep.subr.mxu0 0.0
  %2788 = vmatpush1.msra.mxu0 0.0
  %2789 = vmatprep.subr.mxu0 0.0
  %2790 = vmatpush1.msra.mxu0 0.0
  %2791 = vmatprep.subr.mxu0 0.0
  %2792 = vmatpush1.msra.mxu0 0.0
  %2793 = vmatprep.subr.mxu0 0.0
  %2794 = vmatpush1.msra.mxu0 0.0
  %2795 = vmatprep.subr.mxu0 0.0
  %2796 = vmatpush1.msra.mxu0 0.0
  %2797 = vmatprep.subr.mxu0 0.0
  %2798 = vmatpush1.msra.mxu0 0.0
  %2799 = vmatprep.subr.mxu0 0.0
  %2800 = vmatpush1.msra.mxu0 0.0
  %2801 = vmatprep.subr.mxu0 0.0
  %2802 = vmatpush1.msra.mxu0 0.0
  %2803 = vmatprep.subr.mxu0 0.0
  %2804 = vmatpush1.msra.mxu0 0.0
  %2805 = vmatprep.subr.mxu0 0.0
  %2806 = vmatpush1.msra.mxu0 0.0
  %2807 = vmatprep.subr.mxu0 0.0
  %2808 = vmatpush1.msra.mxu0 0.0
  %2809 = vmatprep.subr.mxu0 0.0
  %2810 = vmatpush1.msra.mxu0 0.0
  %2811 = vmatprep.subr.mxu0 0.0
  %2812 = vmatpush1.msra.mxu0 0.0
  %2813 = vmatprep.subr.mxu0 0.0
  %2814 = vmatpush1.msra.mxu0 0.0
  %2815 = vmatprep.subr.mxu0 0.0
  %2816 = vmatpush1.msra.mxu0 0.0
  %2817 = vmatprep.subr.mxu0 0.0
  %2818 = vmatpush1.msra.mxu0 0.0
  %2819 = vmatprep.subr.mxu0 0.0
  %2820 = vmatpush1.msra.mxu0 0.0
  %2821 = vmatprep.subr.mxu0 0.0
  %2822 = vmatpush1.msra.mxu0 0.0
  %2823 = vmatprep.subr.mxu0 0.0
  %2824 = vmatpush1.msra.mxu0 0.0
  %2825 = vmatprep.subr.mxu0 0.0
  %2826 = vmatpush1.msra.mxu0 0.0
  %2827 = vmatprep.subr.mxu0 0.0
  %2828 = vmatpush1.msra.mxu0 0.0
  %2829 = vmatprep.mubr.f32.mxu0 0.0
  %2830 = vmatmul.mubr.f32.gmra.mrb[0].mxu0 %v2718
  %v2831 = vpop.f32.mrb[0].mxu0
  %v2832 = vadd.f32 %v2639, %v2831
  %v2833 = vpop.f32.mrb[0].mxu0
  %2834 = vmatprep.mubr.f32.mxu0 0.0
  %2835 = vmatmul.mubr.f32.gmra.mrb[0].mxu0 %v2721
  %v2836 = vpop.f32.mrb[0].mxu0
  %v2837 = vadd.f32 %v2644, %v2836
  %v2838 = vpop.f32.mrb[0].mxu0
  %2839 = vmatprep.mubr.f32.mxu0 0.0
  %2840 = vmatmul.mubr.f32.gmra.mrb[0].mxu0 %v2724
  %v2841 = vpop.f32.mrb[0].mxu0
  %v2842 = vadd.f32 %v2649, %v2841
  %v2843 = vpop.f32.mrb[0].mxu0
  %2844 = vmatprep.mubr.f32.mxu0 0.0
  %2845 = vmatmul.mubr.f32.gmra.mrb[0].mxu0 %v2727
  %v2846 = vpop.f32.mrb[0].mxu0
  %v2847 = vadd.f32 %v2654, %v2846
  %v2848 = vpop.f32.mrb[0].mxu0
  %2849 = vmatprep.mubr.f32.mxu0 0.0
  %2850 = vmatmul.mubr.f32.gmra.mrb[0].mxu0 %v2730
  %v2851 = vpop.f32.mrb[0].mxu0
  %v2852 = vadd.f32 %v2659, %v2851
  %v2853 = vpop.f32.mrb[0].mxu0
  %2854 = vmatprep.mubr.f32.mxu0 0.0
  %2855 = vmatmul.mubr.f32.gmra.mrb[0].mxu0 %v2733
  %v2856 = vpop.f32.mrb[0].mxu0
  %v2857 = vadd.f32 %v2664, %v2856
  %v2858 = vpop.f32.mrb[0].mxu0
  %2859 = vmatprep.mubr.f32.mxu0 0.0
  %2860 = vmatmul.mubr.f32.gmra.mrb[0].mxu0 %v2736
  %v2861 = vpop.f32.mrb[0].mxu0
  %v2862 = vadd.f32 %v2669, %v2861
  %v2863 = vpop.f32.mrb[0].mxu0
  %2864 = vmatprep.mubr.f32.mxu0 0.0
  %2865 = vmatmul.mubr.f32.gmra.mrb[0].mxu0 %v2739
  %v2866 = vpop.f32.mrb[0].mxu0
  %v2867 = vadd.f32 %v2674, %v2866
  %v2868 = vpop.f32.mrb[0].mxu0
  %2869 = vmatprep.mubr.f32.mxu0 0.0
  %2870 = vmatmul.mubr.f32.gmra.mrb[0].mxu0 %v2742
  %v2871 = vpop.f32.mrb[0].mxu0
  %v2872 = vadd.f32 %v2679, %v2871
  %v2873 = vpop.f32.mrb[0].mxu0
  %2874 = vmatprep.mubr.f32.mxu0 0.0
  %2875 = vmatmul.mubr.f32.gmra.mrb[0].mxu0 %v2745
  %v2876 = vpop.f32.mrb[0].mxu0
  %v2877 = vadd.f32 %v2684, %v2876
  %v2878 = vpop.f32.mrb[0].mxu0
  %2879 = vmatprep.mubr.f32.mxu0 0.0
  %2880 = vmatmul.mubr.f32.gmra.mrb[0].mxu0 %v2748
  %v2881 = vpop.f32.mrb[0].mxu0
  %v2882 = vadd.f32 %v2689, %v2881
  %v2883 = vpop.f32.mrb[0].mxu0
  %2884 = vmatprep.mubr.f32.mxu0 0.0
  %2885 = vmatmul.mubr.f32.gmra.mrb[0].mxu0 %v2751
  %v2886 = vpop.f32.mrb[0].mxu0
  %v2887 = vadd.f32 %v2694, %v2886
  %v2888 = vpop.f32.mrb[0].mxu0
  %2889 = vmatprep.mubr.f32.mxu0 0.0
  %2890 = vmatmul.mubr.f32.gmra.mrb[0].mxu0 %v2754
  %v2891 = vpop.f32.mrb[0].mxu0
  %v2892 = vadd.f32 %v2699, %v2891
  %v2893 = vpop.f32.mrb[0].mxu0
  %2894 = vmatprep.mubr.f32.mxu0 0.0
  %2895 = vmatmul.mubr.f32.gmra.mrb[0].mxu0 %v2757
  %v2896 = vpop.f32.mrb[0].mxu0
  %v2897 = vadd.f32 %v2704, %v2896
  %v2898 = vpop.f32.mrb[0].mxu0
  %2899 = vmatprep.mubr.f32.mxu0 0.0
  %2900 = vmatmul.mubr.f32.gmra.mrb[0].mxu0 %v2760
  %v2901 = vpop.f32.mrb[0].mxu0
  %v2902 = vadd.f32 %v2709, %v2901
  %v2903 = vpop.f32.mrb[0].mxu0
  %2904 = vmatprep.mubr.f32.mxu0 0.0
  %2905 = vmatmul.mubr.f32.gmra.mrb[0].mxu0 %v2763
  %v2906 = vpop.f32.mrb[0].mxu0
  %v2907 = vadd.f32 %v2714, %v2906
  %v2908 = vpop.f32.mrb[0].mxu0
  %2909 = vdwg.mxu0
  %v2910 = vld [vmem:[#allocation2 + $0x2] sm:$0xff]
  %v2911 = vld [vmem:[#allocation2 + $0x12] sm:$0xff]
  %v2912 = vld [vmem:[#allocation2 + $0x22] sm:$0xff]
  %v2913 = vld [vmem:[#allocation2 + $0x32] sm:$0xff]
  %v2914 = vld [vmem:[#allocation2 + $0x42] sm:$0xff]
  %v2915 = vld [vmem:[#allocation2 + $0x52] sm:$0xff]
  %v2916 = vld [vmem:[#allocation2 + $0x62] sm:$0xff]
  %v2917 = vld [vmem:[#allocation2 + $0x72] sm:$0xff]
  %v2918 = vld [vmem:[#allocation2 + $0xa2] sm:$0xff]
  %v2919 = vld [vmem:[#allocation2 + $0xb2] sm:$0xff]
  %v2920 = vld [vmem:[#allocation2 + $0xc2] sm:$0xff]
  %v2921 = vld [vmem:[#allocation2 + $0xd2] sm:$0xff]
  %v2922 = vld [vmem:[#allocation2 + $0xe2] sm:$0xff]
  %v2923 = vld [vmem:[#allocation2 + $0xf2] sm:$0xff]
  %v2924 = vld [vmem:[#allocation2 + $0x102] sm:$0xff]
  %v2925 = vld [vmem:[#allocation2 + $0x112] sm:$0xff]
  %s2926 = scalar_lea.vmem %s2, 128
  %v2927 = vld [vmem:[%s2926] sm:$0xff]
  %v2928 = vld [vmem:[%s2926 + $0x8] sm:$0xff]
  %v2929 = vld [vmem:[%s2926 + $0x10] sm:$0xff]
  %v2930 = vld [vmem:[%s2926 + $0x18] sm:$0xff]
  %v2931 = vld [vmem:[%s2926 + $0x20] sm:$0xff]
  %v2932 = vld [vmem:[%s2926 + $0x28] sm:$0xff]
  %v2933 = vld [vmem:[%s2926 + $0x30] sm:$0xff]
  %v2934 = vld [vmem:[%s2926 + $0x38] sm:$0xff]
  %v2936 = vsel %vm2087, %v2910, 0
  %v2939 = vsel %vm2087, %v2911, 0
  %v2942 = vsel %vm2087, %v2912, 0
  %v2945 = vsel %vm2087, %v2913, 0
  %v2948 = vsel %vm2087, %v2914, 0
  %v2951 = vsel %vm2087, %v2915, 0
  %v2954 = vsel %vm2087, %v2916, 0
  %v2957 = vsel %vm2087, %v2917, 0
  %v2960 = vsel %vm2087, %v2918, 0
  %v2963 = vsel %vm2087, %v2919, 0
  %v2966 = vsel %vm2087, %v2920, 0
  %v2969 = vsel %vm2087, %v2921, 0
  %v2972 = vsel %vm2087, %v2922, 0
  %v2975 = vsel %vm2087, %v2923, 0
  %v2978 = vsel %vm2087, %v2924, 0
  %v2981 = vsel %vm2087, %v2925, 0
  %2983 = vmatprep.subr.mxu0 0.0
  %2984 = vmatpush1.msra.mxu0 %v2927
  %2985 = vmatprep.subr.mxu0 0.0
  %2986 = vmatpush1.msra.mxu0 %v2928
  %2987 = vmatprep.subr.mxu0 0.0
  %2988 = vmatpush1.msra.mxu0 %v2929
  %2989 = vmatprep.subr.mxu0 0.0
  %2990 = vmatpush1.msra.mxu0 %v2930
  %2991 = vmatprep.subr.mxu0 0.0
  %2992 = vmatpush1.msra.mxu0 %v2931
  %2993 = vmatprep.subr.mxu0 0.0
  %2994 = vmatpush1.msra.mxu0 %v2932
  %2995 = vmatprep.subr.mxu0 0.0
  %2996 = vmatpush1.msra.mxu0 %v2933
  %2997 = vmatprep.subr.mxu0 0.0
  %2998 = vmatpush1.msra.mxu0 %v2934
  %2999 = vmatprep.subr.mxu0 0.0
  %3000 = vmatpush1.msra.mxu0 0.0
  %3001 = vmatprep.subr.mxu0 0.0
  %3002 = vmatpush1.msra.mxu0 0.0
  %3003 = vmatprep.subr.mxu0 0.0
  %3004 = vmatpush1.msra.mxu0 0.0
  %3005 = vmatprep.subr.mxu0 0.0
  %3006 = vmatpush1.msra.mxu0 0.0
  %3007 = vmatprep.subr.mxu0 0.0
  %3008 = vmatpush1.msra.mxu0 0.0
  %3009 = vmatprep.subr.mxu0 0.0
  %3010 = vmatpush1.msra.mxu0 0.0
  %3011 = vmatprep.subr.mxu0 0.0
  %3012 = vmatpush1.msra.mxu0 0.0
  %3013 = vmatprep.subr.mxu0 0.0
  %3014 = vmatpush1.msra.mxu0 0.0
  %3015 = vmatprep.subr.mxu0 0.0
  %3016 = vmatpush1.msra.mxu0 0.0
  %3017 = vmatprep.subr.mxu0 0.0
  %3018 = vmatpush1.msra.mxu0 0.0
  %3019 = vmatprep.subr.mxu0 0.0
  %3020 = vmatpush1.msra.mxu0 0.0
  %3021 = vmatprep.subr.mxu0 0.0
  %3022 = vmatpush1.msra.mxu0 0.0
  %3023 = vmatprep.subr.mxu0 0.0
  %3024 = vmatpush1.msra.mxu0 0.0
  %3025 = vmatprep.subr.mxu0 0.0
  %3026 = vmatpush1.msra.mxu0 0.0
  %3027 = vmatprep.subr.mxu0 0.0
  %3028 = vmatpush1.msra.mxu0 0.0
  %3029 = vmatprep.subr.mxu0 0.0
  %3030 = vmatpush1.msra.mxu0 0.0
  %3031 = vmatprep.subr.mxu0 0.0
  %3032 = vmatpush1.msra.mxu0 0.0
  %3033 = vmatprep.subr.mxu0 0.0
  %3034 = vmatpush1.msra.mxu0 0.0
  %3035 = vmatprep.subr.mxu0 0.0
  %3036 = vmatpush1.msra.mxu0 0.0
  %3037 = vmatprep.subr.mxu0 0.0
  %3038 = vmatpush1.msra.mxu0 0.0
  %3039 = vmatprep.subr.mxu0 0.0
  %3040 = vmatpush1.msra.mxu0 0.0
  %3041 = vmatprep.subr.mxu0 0.0
  %3042 = vmatpush1.msra.mxu0 0.0
  %3043 = vmatprep.subr.mxu0 0.0
  %3044 = vmatpush1.msra.mxu0 0.0
  %3045 = vmatprep.subr.mxu0 0.0
  %3046 = vmatpush1.msra.mxu0 0.0
  %3047 = vmatprep.mubr.f32.mxu0 0.0
  %3048 = vmatmul.mubr.f32.gmra.mrb[0].mxu0 %v2936
  %v3049 = vpop.f32.mrb[0].mxu0
  %v3050 = vadd.f32 0.0, %v3049
  %v3051 = vpop.f32.mrb[0].mxu0
  %3052 = vmatprep.mubr.f32.mxu0 0.0
  %3053 = vmatmul.mubr.f32.gmra.mrb[0].mxu0 %v2939
  %v3054 = vpop.f32.mrb[0].mxu0
  %v3055 = vadd.f32 0.0, %v3054
  %v3056 = vpop.f32.mrb[0].mxu0
  %3057 = vmatprep.mubr.f32.mxu0 0.0
  %3058 = vmatmul.mubr.f32.gmra.mrb[0].mxu0 %v2942
  %v3059 = vpop.f32.mrb[0].mxu0
  %v3060 = vadd.f32 0.0, %v3059
  %v3061 = vpop.f32.mrb[0].mxu0
  %3062 = vmatprep.mubr.f32.mxu0 0.0
  %3063 = vmatmul.mubr.f32.gmra.mrb[0].mxu0 %v2945
  %v3064 = vpop.f32.mrb[0].mxu0
  %v3065 = vadd.f32 0.0, %v3064
  %v3066 = vpop.f32.mrb[0].mxu0
  %3067 = vmatprep.mubr.f32.mxu0 0.0
  %3068 = vmatmul.mubr.f32.gmra.mrb[0].mxu0 %v2948
  %v3069 = vpop.f32.mrb[0].mxu0
  %v3070 = vadd.f32 0.0, %v3069
  %v3071 = vpop.f32.mrb[0].mxu0
  %3072 = vmatprep.mubr.f32.mxu0 0.0
  %3073 = vmatmul.mubr.f32.gmra.mrb[0].mxu0 %v2951
  %v3074 = vpop.f32.mrb[0].mxu0
  %v3075 = vadd.f32 0.0, %v3074
  %v3076 = vpop.f32.mrb[0].mxu0
  %3077 = vmatprep.mubr.f32.mxu0 0.0
  %3078 = vmatmul.mubr.f32.gmra.mrb[0].mxu0 %v2954
  %v3079 = vpop.f32.mrb[0].mxu0
  %v3080 = vadd.f32 0.0, %v3079
  %v3081 = vpop.f32.mrb[0].mxu0
  %3082 = vmatprep.mubr.f32.mxu0 0.0
  %3083 = vmatmul.mubr.f32.gmra.mrb[0].mxu0 %v2957
  %v3084 = vpop.f32.mrb[0].mxu0
  %v3085 = vadd.f32 0.0, %v3084
  %v3086 = vpop.f32.mrb[0].mxu0
  %3087 = vmatprep.mubr.f32.mxu0 0.0
  %3088 = vmatmul.mubr.f32.gmra.mrb[0].mxu0 %v2960
  %v3089 = vpop.f32.mrb[0].mxu0
  %v3090 = vadd.f32 0.0, %v3089
  %v3091 = vpop.f32.mrb[0].mxu0
  %3092 = vmatprep.mubr.f32.mxu0 0.0
  %3093 = vmatmul.mubr.f32.gmra.mrb[0].mxu0 %v2963
  %v3094 = vpop.f32.mrb[0].mxu0
  %v3095 = vadd.f32 0.0, %v3094
  %v3096 = vpop.f32.mrb[0].mxu0
  %3097 = vmatprep.mubr.f32.mxu0 0.0
  %3098 = vmatmul.mubr.f32.gmra.mrb[0].mxu0 %v2966
  %v3099 = vpop.f32.mrb[0].mxu0
  %v3100 = vadd.f32 0.0, %v3099
  %v3101 = vpop.f32.mrb[0].mxu0
  %3102 = vmatprep.mubr.f32.mxu0 0.0
  %3103 = vmatmul.mubr.f32.gmra.mrb[0].mxu0 %v2969
  %v3104 = vpop.f32.mrb[0].mxu0
  %v3105 = vadd.f32 0.0, %v3104
  %v3106 = vpop.f32.mrb[0].mxu0
  %3107 = vmatprep.mubr.f32.mxu0 0.0
  %3108 = vmatmul.mubr.f32.gmra.mrb[0].mxu0 %v2972
  %v3109 = vpop.f32.mrb[0].mxu0
  %v3110 = vadd.f32 0.0, %v3109
  %v3111 = vpop.f32.mrb[0].mxu0
  %3112 = vmatprep.mubr.f32.mxu0 0.0
  %3113 = vmatmul.mubr.f32.gmra.mrb[0].mxu0 %v2975
  %v3114 = vpop.f32.mrb[0].mxu0
  %v3115 = vadd.f32 0.0, %v3114
  %v3116 = vpop.f32.mrb[0].mxu0
  %3117 = vmatprep.mubr.f32.mxu0 0.0
  %3118 = vmatmul.mubr.f32.gmra.mrb[0].mxu0 %v2978
  %v3119 = vpop.f32.mrb[0].mxu0
  %v3120 = vadd.f32 0.0, %v3119
  %v3121 = vpop.f32.mrb[0].mxu0
  %3122 = vmatprep.mubr.f32.mxu0 0.0
  %3123 = vmatmul.mubr.f32.gmra.mrb[0].mxu0 %v2981
  %v3124 = vpop.f32.mrb[0].mxu0
  %v3125 = vadd.f32 0.0, %v3124
  %v3126 = vpop.f32.mrb[0].mxu0
  %3127 = vdwg.mxu0
  %v3128 = vadd.f32 %v2832, %v3050
  %v3129 = vadd.f32 %v2837, %v3055
  %v3130 = vadd.f32 %v2842, %v3060
  %v3131 = vadd.f32 %v2847, %v3065
  %v3132 = vadd.f32 %v2852, %v3070
  %v3133 = vadd.f32 %v2857, %v3075
  %v3134 = vadd.f32 %v2862, %v3080
  %v3135 = vadd.f32 %v2867, %v3085
  %v3136 = vadd.f32 %v2872, %v3090
  %v3137 = vadd.f32 %v2877, %v3095
  %v3138 = vadd.f32 %v2882, %v3100
  %v3139 = vadd.f32 %v2887, %v3105
  %v3140 = vadd.f32 %v2892, %v3110
  %v3141 = vadd.f32 %v2897, %v3115
  %v3142 = vadd.f32 %v2902, %v3120
  %v3143 = vadd.f32 %v2907, %v3125
  %v3144 = vld [vmem:[%s2458] sm:$0xff]
  %v3145 = vld [vmem:[%s2458 + $0x10] sm:$0xff]
  %v3146 = vld [vmem:[%s2458 + $0x20] sm:$0xff]
  %v3147 = vld [vmem:[%s2458 + $0x30] sm:$0xff]
  %v3148 = vld [vmem:[%s2458 + $0x40] sm:$0xff]
  %v3149 = vld [vmem:[%s2458 + $0x50] sm:$0xff]
  %v3150 = vld [vmem:[%s2458 + $0x60] sm:$0xff]
  %v3151 = vld [vmem:[%s2458 + $0x70] sm:$0xff]
  %v3152 = vld [vmem:[%s2458 + $0xa0] sm:$0xff]
  %v3153 = vld [vmem:[%s2458 + $0xb0] sm:$0xff]
  %v3154 = vld [vmem:[%s2458 + $0xc0] sm:$0xff]
  %v3155 = vld [vmem:[%s2458 + $0xd0] sm:$0xff]
  %v3156 = vld [vmem:[%s2458 + $0xe0] sm:$0xff]
  %v3157 = vld [vmem:[%s2458 + $0xf0] sm:$0xff]
  %v3158 = vld [vmem:[%s2458 + $0x100] sm:$0xff]
  %v3159 = vld [vmem:[%s2458 + $0x110] sm:$0xff]
  %s3160 = scalar_lea.vmem %s2, 192
  %v3161 = vld [vmem:[%s3160] sm:$0xff]
  %v3162 = vld [vmem:[%s3160 + $0x8] sm:$0xff]
  %v3163 = vld [vmem:[%s3160 + $0x10] sm:$0xff]
  %v3164 = vld [vmem:[%s3160 + $0x18] sm:$0xff]
  %v3165 = vld [vmem:[%s3160 + $0x20] sm:$0xff]
  %v3166 = vld [vmem:[%s3160 + $0x28] sm:$0xff]
  %v3167 = vld [vmem:[%s3160 + $0x30] sm:$0xff]
  %v3168 = vld [vmem:[%s3160 + $0x38] sm:$0xff]
  %v3170 = vsel %vm2087, %v3144, 0
  %v3173 = vsel %vm2087, %v3145, 0
  %v3176 = vsel %vm2087, %v3146, 0
  %v3179 = vsel %vm2087, %v3147, 0
  %v3182 = vsel %vm2087, %v3148, 0
  %v3185 = vsel %vm2087, %v3149, 0
  %v3188 = vsel %vm2087, %v3150, 0
  %v3191 = vsel %vm2087, %v3151, 0
  %v3194 = vsel %vm2087, %v3152, 0
  %v3197 = vsel %vm2087, %v3153, 0
  %v3200 = vsel %vm2087, %v3154, 0
  %v3203 = vsel %vm2087, %v3155, 0
  %v3206 = vsel %vm2087, %v3156, 0
  %v3209 = vsel %vm2087, %v3157, 0
  %v3212 = vsel %vm2087, %v3158, 0
  %v3215 = vsel %vm2087, %v3159, 0
  %3217 = vmatprep.subr.mxu0 0.0
  %3218 = vmatpush1.msra.mxu0 %v3161
  %3219 = vmatprep.subr.mxu0 0.0
  %3220 = vmatpush1.msra.mxu0 %v3162
  %3221 = vmatprep.subr.mxu0 0.0
  %3222 = vmatpush1.msra.mxu0 %v3163
  %3223 = vmatprep.subr.mxu0 0.0
  %3224 = vmatpush1.msra.mxu0 %v3164
  %3225 = vmatprep.subr.mxu0 0.0
  %3226 = vmatpush1.msra.mxu0 %v3165
  %3227 = vmatprep.subr.mxu0 0.0
  %3228 = vmatpush1.msra.mxu0 %v3166
  %3229 = vmatprep.subr.mxu0 0.0
  %3230 = vmatpush1.msra.mxu0 %v3167
  %3231 = vmatprep.subr.mxu0 0.0
  %3232 = vmatpush1.msra.mxu0 %v3168
  %3233 = vmatprep.subr.mxu0 0.0
  %3234 = vmatpush1.msra.mxu0 0.0
  %3235 = vmatprep.subr.mxu0 0.0
  %3236 = vmatpush1.msra.mxu0 0.0
  %3237 = vmatprep.subr.mxu0 0.0
  %3238 = vmatpush1.msra.mxu0 0.0
  %3239 = vmatprep.subr.mxu0 0.0
  %3240 = vmatpush1.msra.mxu0 0.0
  %3241 = vmatprep.subr.mxu0 0.0
  %3242 = vmatpush1.msra.mxu0 0.0
  %3243 = vmatprep.subr.mxu0 0.0
  %3244 = vmatpush1.msra.mxu0 0.0
  %3245 = vmatprep.subr.mxu0 0.0
  %3246 = vmatpush1.msra.mxu0 0.0
  %3247 = vmatprep.subr.mxu0 0.0
  %3248 = vmatpush1.msra.mxu0 0.0
  %3249 = vmatprep.subr.mxu0 0.0
  %3250 = vmatpush1.msra.mxu0 0.0
  %3251 = vmatprep.subr.mxu0 0.0
  %3252 = vmatpush1.msra.mxu0 0.0
  %3253 = vmatprep.subr.mxu0 0.0
  %3254 = vmatpush1.msra.mxu0 0.0
  %3255 = vmatprep.subr.mxu0 0.0
  %3256 = vmatpush1.msra.mxu0 0.0
  %3257 = vmatprep.subr.mxu0 0.0
  %3258 = vmatpush1.msra.mxu0 0.0
  %3259 = vmatprep.subr.mxu0 0.0
  %3260 = vmatpush1.msra.mxu0 0.0
  %3261 = vmatprep.subr.mxu0 0.0
  %3262 = vmatpush1.msra.mxu0 0.0
  %3263 = vmatprep.subr.mxu0 0.0
  %3264 = vmatpush1.msra.mxu0 0.0
  %3265 = vmatprep.subr.mxu0 0.0
  %3266 = vmatpush1.msra.mxu0 0.0
  %3267 = vmatprep.subr.mxu0 0.0
  %3268 = vmatpush1.msra.mxu0 0.0
  %3269 = vmatprep.subr.mxu0 0.0
  %3270 = vmatpush1.msra.mxu0 0.0
  %3271 = vmatprep.subr.mxu0 0.0
  %3272 = vmatpush1.msra.mxu0 0.0
  %3273 = vmatprep.subr.mxu0 0.0
  %3274 = vmatpush1.msra.mxu0 0.0
  %3275 = vmatprep.subr.mxu0 0.0
  %3276 = vmatpush1.msra.mxu0 0.0
  %3277 = vmatprep.subr.mxu0 0.0
  %3278 = vmatpush1.msra.mxu0 0.0
  %3279 = vmatprep.subr.mxu0 0.0
  %3280 = vmatpush1.msra.mxu0 0.0
  %3281 = vmatprep.mubr.f32.mxu0 0.0
  %3282 = vmatmul.mubr.f32.gmra.mrb[0].mxu0 %v3170
  %v3283 = vpop.f32.mrb[0].mxu0
  %v3284 = vadd.f32 0.0, %v3283
  %v3285 = vpop.f32.mrb[0].mxu0
  %3286 = vmatprep.mubr.f32.mxu0 0.0
  %3287 = vmatmul.mubr.f32.gmra.mrb[0].mxu0 %v3173
  %v3288 = vpop.f32.mrb[0].mxu0
  %v3289 = vadd.f32 0.0, %v3288
  %v3290 = vpop.f32.mrb[0].mxu0
  %3291 = vmatprep.mubr.f32.mxu0 0.0
  %3292 = vmatmul.mubr.f32.gmra.mrb[0].mxu0 %v3176
  %v3293 = vpop.f32.mrb[0].mxu0
  %v3294 = vadd.f32 0.0, %v3293
  %v3295 = vpop.f32.mrb[0].mxu0
  %3296 = vmatprep.mubr.f32.mxu0 0.0
  %3297 = vmatmul.mubr.f32.gmra.mrb[0].mxu0 %v3179
  %v3298 = vpop.f32.mrb[0].mxu0
  %v3299 = vadd.f32 0.0, %v3298
  %v3300 = vpop.f32.mrb[0].mxu0
  %3301 = vmatprep.mubr.f32.mxu0 0.0
  %3302 = vmatmul.mubr.f32.gmra.mrb[0].mxu0 %v3182
  %v3303 = vpop.f32.mrb[0].mxu0
  %v3304 = vadd.f32 0.0, %v3303
  %v3305 = vpop.f32.mrb[0].mxu0
  %3306 = vmatprep.mubr.f32.mxu0 0.0
  %3307 = vmatmul.mubr.f32.gmra.mrb[0].mxu0 %v3185
  %v3308 = vpop.f32.mrb[0].mxu0
  %v3309 = vadd.f32 0.0, %v3308
  %v3310 = vpop.f32.mrb[0].mxu0
  %3311 = vmatprep.mubr.f32.mxu0 0.0
  %3312 = vmatmul.mubr.f32.gmra.mrb[0].mxu0 %v3188
  %v3313 = vpop.f32.mrb[0].mxu0
  %v3314 = vadd.f32 0.0, %v3313
  %v3315 = vpop.f32.mrb[0].mxu0
  %3316 = vmatprep.mubr.f32.mxu0 0.0
  %3317 = vmatmul.mubr.f32.gmra.mrb[0].mxu0 %v3191
  %v3318 = vpop.f32.mrb[0].mxu0
  %v3319 = vadd.f32 0.0, %v3318
  %v3320 = vpop.f32.mrb[0].mxu0
  %3321 = vmatprep.mubr.f32.mxu0 0.0
  %3322 = vmatmul.mubr.f32.gmra.mrb[0].mxu0 %v3194
  %v3323 = vpop.f32.mrb[0].mxu0
  %v3324 = vadd.f32 0.0, %v3323
  %v3325 = vpop.f32.mrb[0].mxu0
  %3326 = vmatprep.mubr.f32.mxu0 0.0
  %3327 = vmatmul.mubr.f32.gmra.mrb[0].mxu0 %v3197
  %v3328 = vpop.f32.mrb[0].mxu0
  %v3329 = vadd.f32 0.0, %v3328
  %v3330 = vpop.f32.mrb[0].mxu0
  %3331 = vmatprep.mubr.f32.mxu0 0.0
  %3332 = vmatmul.mubr.f32.gmra.mrb[0].mxu0 %v3200
  %v3333 = vpop.f32.mrb[0].mxu0
  %v3334 = vadd.f32 0.0, %v3333
  %v3335 = vpop.f32.mrb[0].mxu0
  %3336 = vmatprep.mubr.f32.mxu0 0.0
  %3337 = vmatmul.mubr.f32.gmra.mrb[0].mxu0 %v3203
  %v3338 = vpop.f32.mrb[0].mxu0
  %v3339 = vadd.f32 0.0, %v3338
  %v3340 = vpop.f32.mrb[0].mxu0
  %3341 = vmatprep.mubr.f32.mxu0 0.0
  %3342 = vmatmul.mubr.f32.gmra.mrb[0].mxu0 %v3206
  %v3343 = vpop.f32.mrb[0].mxu0
  %v3344 = vadd.f32 0.0, %v3343
  %v3345 = vpop.f32.mrb[0].mxu0
  %3346 = vmatprep.mubr.f32.mxu0 0.0
  %3347 = vmatmul.mubr.f32.gmra.mrb[0].mxu0 %v3209
  %v3348 = vpop.f32.mrb[0].mxu0
  %v3349 = vadd.f32 0.0, %v3348
  %v3350 = vpop.f32.mrb[0].mxu0
  %3351 = vmatprep.mubr.f32.mxu0 0.0
  %3352 = vmatmul.mubr.f32.gmra.mrb[0].mxu0 %v3212
  %v3353 = vpop.f32.mrb[0].mxu0
  %v3354 = vadd.f32 0.0, %v3353
  %v3355 = vpop.f32.mrb[0].mxu0
  %3356 = vmatprep.mubr.f32.mxu0 0.0
  %3357 = vmatmul.mubr.f32.gmra.mrb[0].mxu0 %v3215
  %v3358 = vpop.f32.mrb[0].mxu0
  %v3359 = vadd.f32 0.0, %v3358
  %v3360 = vpop.f32.mrb[0].mxu0
  %3361 = vdwg.mxu0
  %v3362 = vadd.f32 %v3128, %v3284
  %v3363 = vadd.f32 %v3129, %v3289
  %v3364 = vadd.f32 %v3130, %v3294
  %v3365 = vadd.f32 %v3131, %v3299
  %v3366 = vadd.f32 %v3132, %v3304
  %v3367 = vadd.f32 %v3133, %v3309
  %v3368 = vadd.f32 %v3134, %v3314
  %v3369 = vadd.f32 %v3135, %v3319
  %v3370 = vadd.f32 %v3136, %v3324
  %v3371 = vadd.f32 %v3137, %v3329
  %v3372 = vadd.f32 %v3138, %v3334
  %v3373 = vadd.f32 %v3139, %v3339
  %v3374 = vadd.f32 %v3140, %v3344
  %v3375 = vadd.f32 %v3141, %v3349
  %v3376 = vadd.f32 %v3142, %v3354
  %v3377 = vadd.f32 %v3143, %v3359
  %v3378 = vld [vmem:[%s2458 + $0x1] sm:$0xff]
  %v3379 = vld [vmem:[%s2458 + $0x11] sm:$0xff]
  %v3380 = vld [vmem:[%s2458 + $0x21] sm:$0xff]
  %v3381 = vld [vmem:[%s2458 + $0x31] sm:$0xff]
  %v3382 = vld [vmem:[%s2458 + $0x41] sm:$0xff]
  %v3383 = vld [vmem:[%s2458 + $0x51] sm:$0xff]
  %v3384 = vld [vmem:[%s2458 + $0x61] sm:$0xff]
  %v3385 = vld [vmem:[%s2458 + $0x71] sm:$0xff]
  %v3386 = vld [vmem:[%s2458 + $0xa1] sm:$0xff]
  %v3387 = vld [vmem:[%s2458 + $0xb1] sm:$0xff]
  %v3388 = vld [vmem:[%s2458 + $0xc1] sm:$0xff]
  %v3389 = vld [vmem:[%s2458 + $0xd1] sm:$0xff]
  %v3390 = vld [vmem:[%s2458 + $0xe1] sm:$0xff]
  %v3391 = vld [vmem:[%s2458 + $0xf1] sm:$0xff]
  %v3392 = vld [vmem:[%s2458 + $0x101] sm:$0xff]
  %v3393 = vld [vmem:[%s2458 + $0x111] sm:$0xff]
  %s3394 = scalar_lea.vmem %s2, 256
  %v3395 = vld [vmem:[%s3394] sm:$0xff]
  %v3396 = vld [vmem:[%s3394 + $0x8] sm:$0xff]
  %v3397 = vld [vmem:[%s3394 + $0x10] sm:$0xff]
  %v3398 = vld [vmem:[%s3394 + $0x18] sm:$0xff]
  %v3399 = vld [vmem:[%s3394 + $0x20] sm:$0xff]
  %v3400 = vld [vmem:[%s3394 + $0x28] sm:$0xff]
  %v3401 = vld [vmem:[%s3394 + $0x30] sm:$0xff]
  %v3402 = vld [vmem:[%s3394 + $0x38] sm:$0xff]
  %v3404 = vsel %vm2087, %v3378, 0
  %v3407 = vsel %vm2087, %v3379, 0
  %v3410 = vsel %vm2087, %v3380, 0
  %v3413 = vsel %vm2087, %v3381, 0
  %v3416 = vsel %vm2087, %v3382, 0
  %v3419 = vsel %vm2087, %v3383, 0
  %v3422 = vsel %vm2087, %v3384, 0
  %v3425 = vsel %vm2087, %v3385, 0
  %v3428 = vsel %vm2087, %v3386, 0
  %v3431 = vsel %vm2087, %v3387, 0
  %v3434 = vsel %vm2087, %v3388, 0
  %v3437 = vsel %vm2087, %v3389, 0
  %v3440 = vsel %vm2087, %v3390, 0
  %v3443 = vsel %vm2087, %v3391, 0
  %v3446 = vsel %vm2087, %v3392, 0
  %v3449 = vsel %vm2087, %v3393, 0
  %3451 = vmatprep.subr.mxu0 0.0
  %3452 = vmatpush1.msra.mxu0 %v3395
  %3453 = vmatprep.subr.mxu0 0.0
  %3454 = vmatpush1.msra.mxu0 %v3396
  %3455 = vmatprep.subr.mxu0 0.0
  %3456 = vmatpush1.msra.mxu0 %v3397
  %3457 = vmatprep.subr.mxu0 0.0
  %3458 = vmatpush1.msra.mxu0 %v3398
  %3459 = vmatprep.subr.mxu0 0.0
  %3460 = vmatpush1.msra.mxu0 %v3399
  %3461 = vmatprep.subr.mxu0 0.0
  %3462 = vmatpush1.msra.mxu0 %v3400
  %3463 = vmatprep.subr.mxu0 0.0
  %3464 = vmatpush1.msra.mxu0 %v3401
  %3465 = vmatprep.subr.mxu0 0.0
  %3466 = vmatpush1.msra.mxu0 %v3402
  %3467 = vmatprep.subr.mxu0 0.0
  %3468 = vmatpush1.msra.mxu0 0.0
  %3469 = vmatprep.subr.mxu0 0.0
  %3470 = vmatpush1.msra.mxu0 0.0
  %3471 = vmatprep.subr.mxu0 0.0
  %3472 = vmatpush1.msra.mxu0 0.0
  %3473 = vmatprep.subr.mxu0 0.0
  %3474 = vmatpush1.msra.mxu0 0.0
  %3475 = vmatprep.subr.mxu0 0.0
  %3476 = vmatpush1.msra.mxu0 0.0
  %3477 = vmatprep.subr.mxu0 0.0
  %3478 = vmatpush1.msra.mxu0 0.0
  %3479 = vmatprep.subr.mxu0 0.0
  %3480 = vmatpush1.msra.mxu0 0.0
  %3481 = vmatprep.subr.mxu0 0.0
  %3482 = vmatpush1.msra.mxu0 0.0
  %3483 = vmatprep.subr.mxu0 0.0
  %3484 = vmatpush1.msra.mxu0 0.0
  %3485 = vmatprep.subr.mxu0 0.0
  %3486 = vmatpush1.msra.mxu0 0.0
  %3487 = vmatprep.subr.mxu0 0.0
  %3488 = vmatpush1.msra.mxu0 0.0
  %3489 = vmatprep.subr.mxu0 0.0
  %3490 = vmatpush1.msra.mxu0 0.0
  %3491 = vmatprep.subr.mxu0 0.0
  %3492 = vmatpush1.msra.mxu0 0.0
  %3493 = vmatprep.subr.mxu0 0.0
  %3494 = vmatpush1.msra.mxu0 0.0
  %3495 = vmatprep.subr.mxu0 0.0
  %3496 = vmatpush1.msra.mxu0 0.0
  %3497 = vmatprep.subr.mxu0 0.0
  %3498 = vmatpush1.msra.mxu0 0.0
  %3499 = vmatprep.subr.mxu0 0.0
  %3500 = vmatpush1.msra.mxu0 0.0
  %3501 = vmatprep.subr.mxu0 0.0
  %3502 = vmatpush1.msra.mxu0 0.0
  %3503 = vmatprep.subr.mxu0 0.0
  %3504 = vmatpush1.msra.mxu0 0.0
  %3505 = vmatprep.subr.mxu0 0.0
  %3506 = vmatpush1.msra.mxu0 0.0
  %3507 = vmatprep.subr.mxu0 0.0
  %3508 = vmatpush1.msra.mxu0 0.0
  %3509 = vmatprep.subr.mxu0 0.0
  %3510 = vmatpush1.msra.mxu0 0.0
  %3511 = vmatprep.subr.mxu0 0.0
  %3512 = vmatpush1.msra.mxu0 0.0
  %3513 = vmatprep.subr.mxu0 0.0
  %3514 = vmatpush1.msra.mxu0 0.0
  %3515 = vmatprep.mubr.f32.mxu0 0.0
  %3516 = vmatmul.mubr.f32.gmra.mrb[0].mxu0 %v3404
  %v3517 = vpop.f32.mrb[0].mxu0
  %v3518 = vadd.f32 0.0, %v3517
  %v3519 = vpop.f32.mrb[0].mxu0
  %3520 = vmatprep.mubr.f32.mxu0 0.0
  %3521 = vmatmul.mubr.f32.gmra.mrb[0].mxu0 %v3407
  %v3522 = vpop.f32.mrb[0].mxu0
  %v3523 = vadd.f32 0.0, %v3522
  %v3524 = vpop.f32.mrb[0].mxu0
  %3525 = vmatprep.mubr.f32.mxu0 0.0
  %3526 = vmatmul.mubr.f32.gmra.mrb[0].mxu0 %v3410
  %v3527 = vpop.f32.mrb[0].mxu0
  %v3528 = vadd.f32 0.0, %v3527
  %v3529 = vpop.f32.mrb[0].mxu0
  %3530 = vmatprep.mubr.f32.mxu0 0.0
  %3531 = vmatmul.mubr.f32.gmra.mrb[0].mxu0 %v3413
  %v3532 = vpop.f32.mrb[0].mxu0
  %v3533 = vadd.f32 0.0, %v3532
  %v3534 = vpop.f32.mrb[0].mxu0
  %3535 = vmatprep.mubr.f32.mxu0 0.0
  %3536 = vmatmul.mubr.f32.gmra.mrb[0].mxu0 %v3416
  %v3537 = vpop.f32.mrb[0].mxu0
  %v3538 = vadd.f32 0.0, %v3537
  %v3539 = vpop.f32.mrb[0].mxu0
  %3540 = vmatprep.mubr.f32.mxu0 0.0
  %3541 = vmatmul.mubr.f32.gmra.mrb[0].mxu0 %v3419
  %v3542 = vpop.f32.mrb[0].mxu0
  %v3543 = vadd.f32 0.0, %v3542
  %v3544 = vpop.f32.mrb[0].mxu0
  %3545 = vmatprep.mubr.f32.mxu0 0.0
  %3546 = vmatmul.mubr.f32.gmra.mrb[0].mxu0 %v3422
  %v3547 = vpop.f32.mrb[0].mxu0
  %v3548 = vadd.f32 0.0, %v3547
  %v3549 = vpop.f32.mrb[0].mxu0
  %3550 = vmatprep.mubr.f32.mxu0 0.0
  %3551 = vmatmul.mubr.f32.gmra.mrb[0].mxu0 %v3425
  %v3552 = vpop.f32.mrb[0].mxu0
  %v3553 = vadd.f32 0.0, %v3552
  %v3554 = vpop.f32.mrb[0].mxu0
  %3555 = vmatprep.mubr.f32.mxu0 0.0
  %3556 = vmatmul.mubr.f32.gmra.mrb[0].mxu0 %v3428
  %v3557 = vpop.f32.mrb[0].mxu0
  %v3558 = vadd.f32 0.0, %v3557
  %v3559 = vpop.f32.mrb[0].mxu0
  %3560 = vmatprep.mubr.f32.mxu0 0.0
  %3561 = vmatmul.mubr.f32.gmra.mrb[0].mxu0 %v3431
  %v3562 = vpop.f32.mrb[0].mxu0
  %v3563 = vadd.f32 0.0, %v3562
  %v3564 = vpop.f32.mrb[0].mxu0
  %3565 = vmatprep.mubr.f32.mxu0 0.0
  %3566 = vmatmul.mubr.f32.gmra.mrb[0].mxu0 %v3434
  %v3567 = vpop.f32.mrb[0].mxu0
  %v3568 = vadd.f32 0.0, %v3567
  %v3569 = vpop.f32.mrb[0].mxu0
  %3570 = vmatprep.mubr.f32.mxu0 0.0
  %3571 = vmatmul.mubr.f32.gmra.mrb[0].mxu0 %v3437
  %v3572 = vpop.f32.mrb[0].mxu0
  %v3573 = vadd.f32 0.0, %v3572
  %v3574 = vpop.f32.mrb[0].mxu0
  %3575 = vmatprep.mubr.f32.mxu0 0.0
  %3576 = vmatmul.mubr.f32.gmra.mrb[0].mxu0 %v3440
  %v3577 = vpop.f32.mrb[0].mxu0
  %v3578 = vadd.f32 0.0, %v3577
  %v3579 = vpop.f32.mrb[0].mxu0
  %3580 = vmatprep.mubr.f32.mxu0 0.0
  %3581 = vmatmul.mubr.f32.gmra.mrb[0].mxu0 %v3443
  %v3582 = vpop.f32.mrb[0].mxu0
  %v3583 = vadd.f32 0.0, %v3582
  %v3584 = vpop.f32.mrb[0].mxu0
  %3585 = vmatprep.mubr.f32.mxu0 0.0
  %3586 = vmatmul.mubr.f32.gmra.mrb[0].mxu0 %v3446
  %v3587 = vpop.f32.mrb[0].mxu0
  %v3588 = vadd.f32 0.0, %v3587
  %v3589 = vpop.f32.mrb[0].mxu0
  %3590 = vmatprep.mubr.f32.mxu0 0.0
  %3591 = vmatmul.mubr.f32.gmra.mrb[0].mxu0 %v3449
  %v3592 = vpop.f32.mrb[0].mxu0
  %v3593 = vadd.f32 0.0, %v3592
  %v3594 = vpop.f32.mrb[0].mxu0
  %3595 = vdwg.mxu0
  %v3596 = vadd.f32 %v3362, %v3518
  %v3597 = vadd.f32 %v3363, %v3523
  %v3598 = vadd.f32 %v3364, %v3528
  %v3599 = vadd.f32 %v3365, %v3533
  %v3600 = vadd.f32 %v3366, %v3538
  %v3601 = vadd.f32 %v3367, %v3543
  %v3602 = vadd.f32 %v3368, %v3548
  %v3603 = vadd.f32 %v3369, %v3553
  %v3604 = vadd.f32 %v3370, %v3558
  %v3605 = vadd.f32 %v3371, %v3563
  %v3606 = vadd.f32 %v3372, %v3568
  %v3607 = vadd.f32 %v3373, %v3573
  %v3608 = vadd.f32 %v3374, %v3578
  %v3609 = vadd.f32 %v3375, %v3583
  %v3610 = vadd.f32 %v3376, %v3588
  %v3611 = vadd.f32 %v3377, %v3593
  %v3612 = vld [vmem:[%s2458 + $0x2] sm:$0xff]
  %v3613 = vld [vmem:[%s2458 + $0x12] sm:$0xff]
  %v3614 = vld [vmem:[%s2458 + $0x22] sm:$0xff]
  %v3615 = vld [vmem:[%s2458 + $0x32] sm:$0xff]
  %v3616 = vld [vmem:[%s2458 + $0x42] sm:$0xff]
  %v3617 = vld [vmem:[%s2458 + $0x52] sm:$0xff]
  %v3618 = vld [vmem:[%s2458 + $0x62] sm:$0xff]
  %v3619 = vld [vmem:[%s2458 + $0x72] sm:$0xff]
  %v3620 = vld [vmem:[%s2458 + $0xa2] sm:$0xff]
  %v3621 = vld [vmem:[%s2458 + $0xb2] sm:$0xff]
  %v3622 = vld [vmem:[%s2458 + $0xc2] sm:$0xff]
  %v3623 = vld [vmem:[%s2458 + $0xd2] sm:$0xff]
  %v3624 = vld [vmem:[%s2458 + $0xe2] sm:$0xff]
  %v3625 = vld [vmem:[%s2458 + $0xf2] sm:$0xff]
  %v3626 = vld [vmem:[%s2458 + $0x102] sm:$0xff]
  %v3627 = vld [vmem:[%s2458 + $0x112] sm:$0xff]
  %s3628 = scalar_lea.vmem %s2, 320
  %v3629 = vld [vmem:[%s3628] sm:$0xff]
  %v3630 = vld [vmem:[%s3628 + $0x8] sm:$0xff]
  %v3631 = vld [vmem:[%s3628 + $0x10] sm:$0xff]
  %v3632 = vld [vmem:[%s3628 + $0x18] sm:$0xff]
  %v3633 = vld [vmem:[%s3628 + $0x20] sm:$0xff]
  %v3634 = vld [vmem:[%s3628 + $0x28] sm:$0xff]
  %v3635 = vld [vmem:[%s3628 + $0x30] sm:$0xff]
  %v3636 = vld [vmem:[%s3628 + $0x38] sm:$0xff]
  %v3638 = vsel %vm2087, %v3612, 0
  %v3641 = vsel %vm2087, %v3613, 0
  %v3644 = vsel %vm2087, %v3614, 0
  %v3647 = vsel %vm2087, %v3615, 0
  %v3650 = vsel %vm2087, %v3616, 0
  %v3653 = vsel %vm2087, %v3617, 0
  %v3656 = vsel %vm2087, %v3618, 0
  %v3659 = vsel %vm2087, %v3619, 0
  %v3662 = vsel %vm2087, %v3620, 0
  %v3665 = vsel %vm2087, %v3621, 0
  %v3668 = vsel %vm2087, %v3622, 0
  %v3671 = vsel %vm2087, %v3623, 0
  %v3674 = vsel %vm2087, %v3624, 0
  %v3677 = vsel %vm2087, %v3625, 0
  %v3680 = vsel %vm2087, %v3626, 0
  %v3683 = vsel %vm2087, %v3627, 0
  %3685 = vmatprep.subr.mxu0 0.0
  %3686 = vmatpush1.msra.mxu0 %v3629
  %3687 = vmatprep.subr.mxu0 0.0
  %3688 = vmatpush1.msra.mxu0 %v3630
  %3689 = vmatprep.subr.mxu0 0.0
  %3690 = vmatpush1.msra.mxu0 %v3631
  %3691 = vmatprep.subr.mxu0 0.0
  %3692 = vmatpush1.msra.mxu0 %v3632
  %3693 = vmatprep.subr.mxu0 0.0
  %3694 = vmatpush1.msra.mxu0 %v3633
  %3695 = vmatprep.subr.mxu0 0.0
  %3696 = vmatpush1.msra.mxu0 %v3634
  %3697 = vmatprep.subr.mxu0 0.0
  %3698 = vmatpush1.msra.mxu0 %v3635
  %3699 = vmatprep.subr.mxu0 0.0
  %3700 = vmatpush1.msra.mxu0 %v3636
  %3701 = vmatprep.subr.mxu0 0.0
  %3702 = vmatpush1.msra.mxu0 0.0
  %3703 = vmatprep.subr.mxu0 0.0
  %3704 = vmatpush1.msra.mxu0 0.0
  %3705 = vmatprep.subr.mxu0 0.0
  %3706 = vmatpush1.msra.mxu0 0.0
  %3707 = vmatprep.subr.mxu0 0.0
  %3708 = vmatpush1.msra.mxu0 0.0
  %3709 = vmatprep.subr.mxu0 0.0
  %3710 = vmatpush1.msra.mxu0 0.0
  %3711 = vmatprep.subr.mxu0 0.0
  %3712 = vmatpush1.msra.mxu0 0.0
  %3713 = vmatprep.subr.mxu0 0.0
  %3714 = vmatpush1.msra.mxu0 0.0
  %3715 = vmatprep.subr.mxu0 0.0
  %3716 = vmatpush1.msra.mxu0 0.0
  %3717 = vmatprep.subr.mxu0 0.0
  %3718 = vmatpush1.msra.mxu0 0.0
  %3719 = vmatprep.subr.mxu0 0.0
  %3720 = vmatpush1.msra.mxu0 0.0
  %3721 = vmatprep.subr.mxu0 0.0
  %3722 = vmatpush1.msra.mxu0 0.0
  %3723 = vmatprep.subr.mxu0 0.0
  %3724 = vmatpush1.msra.mxu0 0.0
  %3725 = vmatprep.subr.mxu0 0.0
  %3726 = vmatpush1.msra.mxu0 0.0
  %3727 = vmatprep.subr.mxu0 0.0
  %3728 = vmatpush1.msra.mxu0 0.0
  %3729 = vmatprep.subr.mxu0 0.0
  %3730 = vmatpush1.msra.mxu0 0.0
  %3731 = vmatprep.subr.mxu0 0.0
  %3732 = vmatpush1.msra.mxu0 0.0
  %3733 = vmatprep.subr.mxu0 0.0
  %3734 = vmatpush1.msra.mxu0 0.0
  %3735 = vmatprep.subr.mxu0 0.0
  %3736 = vmatpush1.msra.mxu0 0.0
  %3737 = vmatprep.subr.mxu0 0.0
  %3738 = vmatpush1.msra.mxu0 0.0
  %3739 = vmatprep.subr.mxu0 0.0
  %3740 = vmatpush1.msra.mxu0 0.0
  %3741 = vmatprep.subr.mxu0 0.0
  %3742 = vmatpush1.msra.mxu0 0.0
  %3743 = vmatprep.subr.mxu0 0.0
  %3744 = vmatpush1.msra.mxu0 0.0
  %3745 = vmatprep.subr.mxu0 0.0
  %3746 = vmatpush1.msra.mxu0 0.0
  %3747 = vmatprep.subr.mxu0 0.0
  %3748 = vmatpush1.msra.mxu0 0.0
  %3749 = vmatprep.mubr.f32.mxu0 0.0
  %3750 = vmatmul.mubr.f32.gmra.mrb[0].mxu0 %v3638
  %v3751 = vpop.f32.mrb[0].mxu0
  %v3752 = vadd.f32 0.0, %v3751
  %v3753 = vpop.f32.mrb[0].mxu0
  %3754 = vmatprep.mubr.f32.mxu0 0.0
  %3755 = vmatmul.mubr.f32.gmra.mrb[0].mxu0 %v3641
  %v3756 = vpop.f32.mrb[0].mxu0
  %v3757 = vadd.f32 0.0, %v3756
  %v3758 = vpop.f32.mrb[0].mxu0
  %3759 = vmatprep.mubr.f32.mxu0 0.0
  %3760 = vmatmul.mubr.f32.gmra.mrb[0].mxu0 %v3644
  %v3761 = vpop.f32.mrb[0].mxu0
  %v3762 = vadd.f32 0.0, %v3761
  %v3763 = vpop.f32.mrb[0].mxu0
  %3764 = vmatprep.mubr.f32.mxu0 0.0
  %3765 = vmatmul.mubr.f32.gmra.mrb[0].mxu0 %v3647
  %v3766 = vpop.f32.mrb[0].mxu0
  %v3767 = vadd.f32 0.0, %v3766
  %v3768 = vpop.f32.mrb[0].mxu0
  %3769 = vmatprep.mubr.f32.mxu0 0.0
  %3770 = vmatmul.mubr.f32.gmra.mrb[0].mxu0 %v3650
  %v3771 = vpop.f32.mrb[0].mxu0
  %v3772 = vadd.f32 0.0, %v3771
  %v3773 = vpop.f32.mrb[0].mxu0
  %3774 = vmatprep.mubr.f32.mxu0 0.0
  %3775 = vmatmul.mubr.f32.gmra.mrb[0].mxu0 %v3653
  %v3776 = vpop.f32.mrb[0].mxu0
  %v3777 = vadd.f32 0.0, %v3776
  %v3778 = vpop.f32.mrb[0].mxu0
  %3779 = vmatprep.mubr.f32.mxu0 0.0
  %3780 = vmatmul.mubr.f32.gmra.mrb[0].mxu0 %v3656
  %v3781 = vpop.f32.mrb[0].mxu0
  %v3782 = vadd.f32 0.0, %v3781
  %v3783 = vpop.f32.mrb[0].mxu0
  %3784 = vmatprep.mubr.f32.mxu0 0.0
  %3785 = vmatmul.mubr.f32.gmra.mrb[0].mxu0 %v3659
  %v3786 = vpop.f32.mrb[0].mxu0
  %v3787 = vadd.f32 0.0, %v3786
  %v3788 = vpop.f32.mrb[0].mxu0
  %3789 = vmatprep.mubr.f32.mxu0 0.0
  %3790 = vmatmul.mubr.f32.gmra.mrb[0].mxu0 %v3662
  %v3791 = vpop.f32.mrb[0].mxu0
  %v3792 = vadd.f32 0.0, %v3791
  %v3793 = vpop.f32.mrb[0].mxu0
  %3794 = vmatprep.mubr.f32.mxu0 0.0
  %3795 = vmatmul.mubr.f32.gmra.mrb[0].mxu0 %v3665
  %v3796 = vpop.f32.mrb[0].mxu0
  %v3797 = vadd.f32 0.0, %v3796
  %v3798 = vpop.f32.mrb[0].mxu0
  %3799 = vmatprep.mubr.f32.mxu0 0.0
  %3800 = vmatmul.mubr.f32.gmra.mrb[0].mxu0 %v3668
  %v3801 = vpop.f32.mrb[0].mxu0
  %v3802 = vadd.f32 0.0, %v3801
  %v3803 = vpop.f32.mrb[0].mxu0
  %3804 = vmatprep.mubr.f32.mxu0 0.0
  %3805 = vmatmul.mubr.f32.gmra.mrb[0].mxu0 %v3671
  %v3806 = vpop.f32.mrb[0].mxu0
  %v3807 = vadd.f32 0.0, %v3806
  %v3808 = vpop.f32.mrb[0].mxu0
  %3809 = vmatprep.mubr.f32.mxu0 0.0
  %3810 = vmatmul.mubr.f32.gmra.mrb[0].mxu0 %v3674
  %v3811 = vpop.f32.mrb[0].mxu0
  %v3812 = vadd.f32 0.0, %v3811
  %v3813 = vpop.f32.mrb[0].mxu0
  %3814 = vmatprep.mubr.f32.mxu0 0.0
  %3815 = vmatmul.mubr.f32.gmra.mrb[0].mxu0 %v3677
  %v3816 = vpop.f32.mrb[0].mxu0
  %v3817 = vadd.f32 0.0, %v3816
  %v3818 = vpop.f32.mrb[0].mxu0
  %3819 = vmatprep.mubr.f32.mxu0 0.0
  %3820 = vmatmul.mubr.f32.gmra.mrb[0].mxu0 %v3680
  %v3821 = vpop.f32.mrb[0].mxu0
  %v3822 = vadd.f32 0.0, %v3821
  %v3823 = vpop.f32.mrb[0].mxu0
  %3824 = vmatprep.mubr.f32.mxu0 0.0
  %3825 = vmatmul.mubr.f32.gmra.mrb[0].mxu0 %v3683
  %v3826 = vpop.f32.mrb[0].mxu0
  %v3827 = vadd.f32 0.0, %v3826
  %v3828 = vpop.f32.mrb[0].mxu0
  %3829 = vdwg.mxu0
  %v3830 = vadd.f32 %v3596, %v3752
  %v3831 = vadd.f32 %v3597, %v3757
  %v3832 = vadd.f32 %v3598, %v3762
  %v3833 = vadd.f32 %v3599, %v3767
  %v3834 = vadd.f32 %v3600, %v3772
  %v3835 = vadd.f32 %v3601, %v3777
  %v3836 = vadd.f32 %v3602, %v3782
  %v3837 = vadd.f32 %v3603, %v3787
  %v3838 = vadd.f32 %v3604, %v3792
  %v3839 = vadd.f32 %v3605, %v3797
  %v3840 = vadd.f32 %v3606, %v3802
  %v3841 = vadd.f32 %v3607, %v3807
  %v3842 = vadd.f32 %v3608, %v3812
  %v3843 = vadd.f32 %v3609, %v3817
  %v3844 = vadd.f32 %v3610, %v3822
  %v3845 = vadd.f32 %v3611, %v3827
  %s3846 = scalar_lea.vmem [#allocation2], 32
  %v3847 = vld [vmem:[%s3846] sm:$0xff]
  %v3848 = vld [vmem:[%s3846 + $0x10] sm:$0xff]
  %v3849 = vld [vmem:[%s3846 + $0x20] sm:$0xff]
  %v3850 = vld [vmem:[%s3846 + $0x30] sm:$0xff]
  %v3851 = vld [vmem:[%s3846 + $0x40] sm:$0xff]
  %v3852 = vld [vmem:[%s3846 + $0x50] sm:$0xff]
  %v3853 = vld [vmem:[%s3846 + $0x60] sm:$0xff]
  %v3854 = vld [vmem:[%s3846 + $0x70] sm:$0xff]
  %v3855 = vld [vmem:[%s3846 + $0xa0] sm:$0xff]
  %v3856 = vld [vmem:[%s3846 + $0xb0] sm:$0xff]
  %v3857 = vld [vmem:[%s3846 + $0xc0] sm:$0xff]
  %v3858 = vld [vmem:[%s3846 + $0xd0] sm:$0xff]
  %v3859 = vld [vmem:[%s3846 + $0xe0] sm:$0xff]
  %v3860 = vld [vmem:[%s3846 + $0xf0] sm:$0xff]
  %v3861 = vld [vmem:[%s3846 + $0x100] sm:$0xff]
  %v3862 = vld [vmem:[%s3846 + $0x110] sm:$0xff]
  %s3863 = scalar_lea.vmem %s2, 384
  %v3864 = vld [vmem:[%s3863] sm:$0xff]
  %v3865 = vld [vmem:[%s3863 + $0x8] sm:$0xff]
  %v3866 = vld [vmem:[%s3863 + $0x10] sm:$0xff]
  %v3867 = vld [vmem:[%s3863 + $0x18] sm:$0xff]
  %v3868 = vld [vmem:[%s3863 + $0x20] sm:$0xff]
  %v3869 = vld [vmem:[%s3863 + $0x28] sm:$0xff]
  %v3870 = vld [vmem:[%s3863 + $0x30] sm:$0xff]
  %v3871 = vld [vmem:[%s3863 + $0x38] sm:$0xff]
  %v3873 = vsel %vm2087, %v3847, 0
  %v3876 = vsel %vm2087, %v3848, 0
  %v3879 = vsel %vm2087, %v3849, 0
  %v3882 = vsel %vm2087, %v3850, 0
  %v3885 = vsel %vm2087, %v3851, 0
  %v3888 = vsel %vm2087, %v3852, 0
  %v3891 = vsel %vm2087, %v3853, 0
  %v3894 = vsel %vm2087, %v3854, 0
  %v3897 = vsel %vm2087, %v3855, 0
  %v3900 = vsel %vm2087, %v3856, 0
  %v3903 = vsel %vm2087, %v3857, 0
  %v3906 = vsel %vm2087, %v3858, 0
  %v3909 = vsel %vm2087, %v3859, 0
  %v3912 = vsel %vm2087, %v3860, 0
  %v3915 = vsel %vm2087, %v3861, 0
  %v3918 = vsel %vm2087, %v3862, 0
  %3920 = vmatprep.subr.mxu0 0.0
  %3921 = vmatpush1.msra.mxu0 %v3864
  %3922 = vmatprep.subr.mxu0 0.0
  %3923 = vmatpush1.msra.mxu0 %v3865
  %3924 = vmatprep.subr.mxu0 0.0
  %3925 = vmatpush1.msra.mxu0 %v3866
  %3926 = vmatprep.subr.mxu0 0.0
  %3927 = vmatpush1.msra.mxu0 %v3867
  %3928 = vmatprep.subr.mxu0 0.0
  %3929 = vmatpush1.msra.mxu0 %v3868
  %3930 = vmatprep.subr.mxu0 0.0
  %3931 = vmatpush1.msra.mxu0 %v3869
  %3932 = vmatprep.subr.mxu0 0.0
  %3933 = vmatpush1.msra.mxu0 %v3870
  %3934 = vmatprep.subr.mxu0 0.0
  %3935 = vmatpush1.msra.mxu0 %v3871
  %3936 = vmatprep.subr.mxu0 0.0
  %3937 = vmatpush1.msra.mxu0 0.0
  %3938 = vmatprep.subr.mxu0 0.0
  %3939 = vmatpush1.msra.mxu0 0.0
  %3940 = vmatprep.subr.mxu0 0.0
  %3941 = vmatpush1.msra.mxu0 0.0
  %3942 = vmatprep.subr.mxu0 0.0
  %3943 = vmatpush1.msra.mxu0 0.0
  %3944 = vmatprep.subr.mxu0 0.0
  %3945 = vmatpush1.msra.mxu0 0.0
  %3946 = vmatprep.subr.mxu0 0.0
  %3947 = vmatpush1.msra.mxu0 0.0
  %3948 = vmatprep.subr.mxu0 0.0
  %3949 = vmatpush1.msra.mxu0 0.0
  %3950 = vmatprep.subr.mxu0 0.0
  %3951 = vmatpush1.msra.mxu0 0.0
  %3952 = vmatprep.subr.mxu0 0.0
  %3953 = vmatpush1.msra.mxu0 0.0
  %3954 = vmatprep.subr.mxu0 0.0
  %3955 = vmatpush1.msra.mxu0 0.0
  %3956 = vmatprep.subr.mxu0 0.0
  %3957 = vmatpush1.msra.mxu0 0.0
  %3958 = vmatprep.subr.mxu0 0.0
  %3959 = vmatpush1.msra.mxu0 0.0
  %3960 = vmatprep.subr.mxu0 0.0
  %3961 = vmatpush1.msra.mxu0 0.0
  %3962 = vmatprep.subr.mxu0 0.0
  %3963 = vmatpush1.msra.mxu0 0.0
  %3964 = vmatprep.subr.mxu0 0.0
  %3965 = vmatpush1.msra.mxu0 0.0
  %3966 = vmatprep.subr.mxu0 0.0
  %3967 = vmatpush1.msra.mxu0 0.0
  %3968 = vmatprep.subr.mxu0 0.0
  %3969 = vmatpush1.msra.mxu0 0.0
  %3970 = vmatprep.subr.mxu0 0.0
  %3971 = vmatpush1.msra.mxu0 0.0
  %3972 = vmatprep.subr.mxu0 0.0
  %3973 = vmatpush1.msra.mxu0 0.0
  %3974 = vmatprep.subr.mxu0 0.0
  %3975 = vmatpush1.msra.mxu0 0.0
  %3976 = vmatprep.subr.mxu0 0.0
  %3977 = vmatpush1.msra.mxu0 0.0
  %3978 = vmatprep.subr.mxu0 0.0
  %3979 = vmatpush1.msra.mxu0 0.0
  %3980 = vmatprep.subr.mxu0 0.0
  %3981 = vmatpush1.msra.mxu0 0.0
  %3982 = vmatprep.subr.mxu0 0.0
  %3983 = vmatpush1.msra.mxu0 0.0
  %3984 = vmatprep.mubr.f32.mxu0 0.0
  %3985 = vmatmul.mubr.f32.gmra.mrb[0].mxu0 %v3873
  %v3986 = vpop.f32.mrb[0].mxu0
  %v3987 = vadd.f32 0.0, %v3986
  %v3988 = vpop.f32.mrb[0].mxu0
  %3989 = vmatprep.mubr.f32.mxu0 0.0
  %3990 = vmatmul.mubr.f32.gmra.mrb[0].mxu0 %v3876
  %v3991 = vpop.f32.mrb[0].mxu0
  %v3992 = vadd.f32 0.0, %v3991
  %v3993 = vpop.f32.mrb[0].mxu0
  %3994 = vmatprep.mubr.f32.mxu0 0.0
  %3995 = vmatmul.mubr.f32.gmra.mrb[0].mxu0 %v3879
  %v3996 = vpop.f32.mrb[0].mxu0
  %v3997 = vadd.f32 0.0, %v3996
  %v3998 = vpop.f32.mrb[0].mxu0
  %3999 = vmatprep.mubr.f32.mxu0 0.0
  %4000 = vmatmul.mubr.f32.gmra.mrb[0].mxu0 %v3882
  %v4001 = vpop.f32.mrb[0].mxu0
  %v4002 = vadd.f32 0.0, %v4001
  %v4003 = vpop.f32.mrb[0].mxu0
  %4004 = vmatprep.mubr.f32.mxu0 0.0
  %4005 = vmatmul.mubr.f32.gmra.mrb[0].mxu0 %v3885
  %v4006 = vpop.f32.mrb[0].mxu0
  %v4007 = vadd.f32 0.0, %v4006
  %v4008 = vpop.f32.mrb[0].mxu0
  %4009 = vmatprep.mubr.f32.mxu0 0.0
  %4010 = vmatmul.mubr.f32.gmra.mrb[0].mxu0 %v3888
  %v4011 = vpop.f32.mrb[0].mxu0
  %v4012 = vadd.f32 0.0, %v4011
  %v4013 = vpop.f32.mrb[0].mxu0
  %4014 = vmatprep.mubr.f32.mxu0 0.0
  %4015 = vmatmul.mubr.f32.gmra.mrb[0].mxu0 %v3891
  %v4016 = vpop.f32.mrb[0].mxu0
  %v4017 = vadd.f32 0.0, %v4016
  %v4018 = vpop.f32.mrb[0].mxu0
  %4019 = vmatprep.mubr.f32.mxu0 0.0
  %4020 = vmatmul.mubr.f32.gmra.mrb[0].mxu0 %v3894
  %v4021 = vpop.f32.mrb[0].mxu0
  %v4022 = vadd.f32 0.0, %v4021
  %v4023 = vpop.f32.mrb[0].mxu0
  %4024 = vmatprep.mubr.f32.mxu0 0.0
  %4025 = vmatmul.mubr.f32.gmra.mrb[0].mxu0 %v3897
  %v4026 = vpop.f32.mrb[0].mxu0
  %v4027 = vadd.f32 0.0, %v4026
  %v4028 = vpop.f32.mrb[0].mxu0
  %4029 = vmatprep.mubr.f32.mxu0 0.0
  %4030 = vmatmul.mubr.f32.gmra.mrb[0].mxu0 %v3900
  %v4031 = vpop.f32.mrb[0].mxu0
  %v4032 = vadd.f32 0.0, %v4031
  %v4033 = vpop.f32.mrb[0].mxu0
  %4034 = vmatprep.mubr.f32.mxu0 0.0
  %4035 = vmatmul.mubr.f32.gmra.mrb[0].mxu0 %v3903
  %v4036 = vpop.f32.mrb[0].mxu0
  %v4037 = vadd.f32 0.0, %v4036
  %v4038 = vpop.f32.mrb[0].mxu0
  %4039 = vmatprep.mubr.f32.mxu0 0.0
  %4040 = vmatmul.mubr.f32.gmra.mrb[0].mxu0 %v3906
  %v4041 = vpop.f32.mrb[0].mxu0
  %v4042 = vadd.f32 0.0, %v4041
  %v4043 = vpop.f32.mrb[0].mxu0
  %4044 = vmatprep.mubr.f32.mxu0 0.0
  %4045 = vmatmul.mubr.f32.gmra.mrb[0].mxu0 %v3909
  %v4046 = vpop.f32.mrb[0].mxu0
  %v4047 = vadd.f32 0.0, %v4046
  %v4048 = vpop.f32.mrb[0].mxu0
  %4049 = vmatprep.mubr.f32.mxu0 0.0
  %4050 = vmatmul.mubr.f32.gmra.mrb[0].mxu0 %v3912
  %v4051 = vpop.f32.mrb[0].mxu0
  %v4052 = vadd.f32 0.0, %v4051
  %v4053 = vpop.f32.mrb[0].mxu0
  %4054 = vmatprep.mubr.f32.mxu0 0.0
  %4055 = vmatmul.mubr.f32.gmra.mrb[0].mxu0 %v3915
  %v4056 = vpop.f32.mrb[0].mxu0
  %v4057 = vadd.f32 0.0, %v4056
  %v4058 = vpop.f32.mrb[0].mxu0
  %4059 = vmatprep.mubr.f32.mxu0 0.0
  %4060 = vmatmul.mubr.f32.gmra.mrb[0].mxu0 %v3918
  %v4061 = vpop.f32.mrb[0].mxu0
  %v4062 = vadd.f32 0.0, %v4061
  %v4063 = vpop.f32.mrb[0].mxu0
  %4064 = vdwg.mxu0
  %v4065 = vadd.f32 %v3830, %v3987
  %v4066 = vadd.f32 %v3831, %v3992
  %v4067 = vadd.f32 %v3832, %v3997
  %v4068 = vadd.f32 %v3833, %v4002
  %v4069 = vadd.f32 %v3834, %v4007
  %v4070 = vadd.f32 %v3835, %v4012
  %v4071 = vadd.f32 %v3836, %v4017
  %v4072 = vadd.f32 %v3837, %v4022
  %v4073 = vadd.f32 %v3838, %v4027
  %v4074 = vadd.f32 %v3839, %v4032
  %v4075 = vadd.f32 %v3840, %v4037
  %v4076 = vadd.f32 %v3841, %v4042
  %v4077 = vadd.f32 %v3842, %v4047
  %v4078 = vadd.f32 %v3843, %v4052
  %v4079 = vadd.f32 %v3844, %v4057
  %v4080 = vadd.f32 %v3845, %v4062
  %v4081 = vld [vmem:[%s3846 + $0x1] sm:$0xff]
  %v4082 = vld [vmem:[%s3846 + $0x11] sm:$0xff]
  %v4083 = vld [vmem:[%s3846 + $0x21] sm:$0xff]
  %v4084 = vld [vmem:[%s3846 + $0x31] sm:$0xff]
  %v4085 = vld [vmem:[%s3846 + $0x41] sm:$0xff]
  %v4086 = vld [vmem:[%s3846 + $0x51] sm:$0xff]
  %v4087 = vld [vmem:[%s3846 + $0x61] sm:$0xff]
  %v4088 = vld [vmem:[%s3846 + $0x71] sm:$0xff]
  %v4089 = vld [vmem:[%s3846 + $0xa1] sm:$0xff]
  %v4090 = vld [vmem:[%s3846 + $0xb1] sm:$0xff]
  %v4091 = vld [vmem:[%s3846 + $0xc1] sm:$0xff]
  %v4092 = vld [vmem:[%s3846 + $0xd1] sm:$0xff]
  %v4093 = vld [vmem:[%s3846 + $0xe1] sm:$0xff]
  %v4094 = vld [vmem:[%s3846 + $0xf1] sm:$0xff]
  %v4095 = vld [vmem:[%s3846 + $0x101] sm:$0xff]
  %v4096 = vld [vmem:[%s3846 + $0x111] sm:$0xff]
  %s4097 = scalar_lea.vmem %s2, 448
  %v4098 = vld [vmem:[%s4097] sm:$0xff]
  %v4099 = vld [vmem:[%s4097 + $0x8] sm:$0xff]
  %v4100 = vld [vmem:[%s4097 + $0x10] sm:$0xff]
  %v4101 = vld [vmem:[%s4097 + $0x18] sm:$0xff]
  %v4102 = vld [vmem:[%s4097 + $0x20] sm:$0xff]
  %v4103 = vld [vmem:[%s4097 + $0x28] sm:$0xff]
  %v4104 = vld [vmem:[%s4097 + $0x30] sm:$0xff]
  %v4105 = vld [vmem:[%s4097 + $0x38] sm:$0xff]
  %v4107 = vsel %vm2087, %v4081, 0
  %v4110 = vsel %vm2087, %v4082, 0
  %v4113 = vsel %vm2087, %v4083, 0
  %v4116 = vsel %vm2087, %v4084, 0
  %v4119 = vsel %vm2087, %v4085, 0
  %v4122 = vsel %vm2087, %v4086, 0
  %v4125 = vsel %vm2087, %v4087, 0
  %v4128 = vsel %vm2087, %v4088, 0
  %v4131 = vsel %vm2087, %v4089, 0
  %v4134 = vsel %vm2087, %v4090, 0
  %v4137 = vsel %vm2087, %v4091, 0
  %v4140 = vsel %vm2087, %v4092, 0
  %v4143 = vsel %vm2087, %v4093, 0
  %v4146 = vsel %vm2087, %v4094, 0
  %v4149 = vsel %vm2087, %v4095, 0
  %v4152 = vsel %vm2087, %v4096, 0
  %4154 = vmatprep.subr.mxu0 0.0
  %4155 = vmatpush1.msra.mxu0 %v4098
  %4156 = vmatprep.subr.mxu0 0.0
  %4157 = vmatpush1.msra.mxu0 %v4099
  %4158 = vmatprep.subr.mxu0 0.0
  %4159 = vmatpush1.msra.mxu0 %v4100
  %4160 = vmatprep.subr.mxu0 0.0
  %4161 = vmatpush1.msra.mxu0 %v4101
  %4162 = vmatprep.subr.mxu0 0.0
  %4163 = vmatpush1.msra.mxu0 %v4102
  %4164 = vmatprep.subr.mxu0 0.0
  %4165 = vmatpush1.msra.mxu0 %v4103
  %4166 = vmatprep.subr.mxu0 0.0
  %4167 = vmatpush1.msra.mxu0 %v4104
  %4168 = vmatprep.subr.mxu0 0.0
  %4169 = vmatpush1.msra.mxu0 %v4105
  %4170 = vmatprep.subr.mxu0 0.0
  %4171 = vmatpush1.msra.mxu0 0.0
  %4172 = vmatprep.subr.mxu0 0.0
  %4173 = vmatpush1.msra.mxu0 0.0
  %4174 = vmatprep.subr.mxu0 0.0
  %4175 = vmatpush1.msra.mxu0 0.0
  %4176 = vmatprep.subr.mxu0 0.0
  %4177 = vmatpush1.msra.mxu0 0.0
  %4178 = vmatprep.subr.mxu0 0.0
  %4179 = vmatpush1.msra.mxu0 0.0
  %4180 = vmatprep.subr.mxu0 0.0
  %4181 = vmatpush1.msra.mxu0 0.0
  %4182 = vmatprep.subr.mxu0 0.0
  %4183 = vmatpush1.msra.mxu0 0.0
  %4184 = vmatprep.subr.mxu0 0.0
  %4185 = vmatpush1.msra.mxu0 0.0
  %4186 = vmatprep.subr.mxu0 0.0
  %4187 = vmatpush1.msra.mxu0 0.0
  %4188 = vmatprep.subr.mxu0 0.0
  %4189 = vmatpush1.msra.mxu0 0.0
  %4190 = vmatprep.subr.mxu0 0.0
  %4191 = vmatpush1.msra.mxu0 0.0
  %4192 = vmatprep.subr.mxu0 0.0
  %4193 = vmatpush1.msra.mxu0 0.0
  %4194 = vmatprep.subr.mxu0 0.0
  %4195 = vmatpush1.msra.mxu0 0.0
  %4196 = vmatprep.subr.mxu0 0.0
  %4197 = vmatpush1.msra.mxu0 0.0
  %4198 = vmatprep.subr.mxu0 0.0
  %4199 = vmatpush1.msra.mxu0 0.0
  %4200 = vmatprep.subr.mxu0 0.0
  %4201 = vmatpush1.msra.mxu0 0.0
  %4202 = vmatprep.subr.mxu0 0.0
  %4203 = vmatpush1.msra.mxu0 0.0
  %4204 = vmatprep.subr.mxu0 0.0
  %4205 = vmatpush1.msra.mxu0 0.0
  %4206 = vmatprep.subr.mxu0 0.0
  %4207 = vmatpush1.msra.mxu0 0.0
  %4208 = vmatprep.subr.mxu0 0.0
  %4209 = vmatpush1.msra.mxu0 0.0
  %4210 = vmatprep.subr.mxu0 0.0
  %4211 = vmatpush1.msra.mxu0 0.0
  %4212 = vmatprep.subr.mxu0 0.0
  %4213 = vmatpush1.msra.mxu0 0.0
  %4214 = vmatprep.subr.mxu0 0.0
  %4215 = vmatpush1.msra.mxu0 0.0
  %4216 = vmatprep.subr.mxu0 0.0
  %4217 = vmatpush1.msra.mxu0 0.0
  %4218 = vmatprep.mubr.f32.mxu0 0.0
  %4219 = vmatmul.mubr.f32.gmra.mrb[0].mxu0 %v4107
  %v4220 = vpop.f32.mrb[0].mxu0
  %v4221 = vadd.f32 0.0, %v4220
  %v4222 = vpop.f32.mrb[0].mxu0
  %4223 = vmatprep.mubr.f32.mxu0 0.0
  %4224 = vmatmul.mubr.f32.gmra.mrb[0].mxu0 %v4110
  %v4225 = vpop.f32.mrb[0].mxu0
  %v4226 = vadd.f32 0.0, %v4225
  %v4227 = vpop.f32.mrb[0].mxu0
  %4228 = vmatprep.mubr.f32.mxu0 0.0
  %4229 = vmatmul.mubr.f32.gmra.mrb[0].mxu0 %v4113
  %v4230 = vpop.f32.mrb[0].mxu0
  %v4231 = vadd.f32 0.0, %v4230
  %v4232 = vpop.f32.mrb[0].mxu0
  %4233 = vmatprep.mubr.f32.mxu0 0.0
  %4234 = vmatmul.mubr.f32.gmra.mrb[0].mxu0 %v4116
  %v4235 = vpop.f32.mrb[0].mxu0
  %v4236 = vadd.f32 0.0, %v4235
  %v4237 = vpop.f32.mrb[0].mxu0
  %4238 = vmatprep.mubr.f32.mxu0 0.0
  %4239 = vmatmul.mubr.f32.gmra.mrb[0].mxu0 %v4119
  %v4240 = vpop.f32.mrb[0].mxu0
  %v4241 = vadd.f32 0.0, %v4240
  %v4242 = vpop.f32.mrb[0].mxu0
  %4243 = vmatprep.mubr.f32.mxu0 0.0
  %4244 = vmatmul.mubr.f32.gmra.mrb[0].mxu0 %v4122
  %v4245 = vpop.f32.mrb[0].mxu0
  %v4246 = vadd.f32 0.0, %v4245
  %v4247 = vpop.f32.mrb[0].mxu0
  %4248 = vmatprep.mubr.f32.mxu0 0.0
  %4249 = vmatmul.mubr.f32.gmra.mrb[0].mxu0 %v4125
  %v4250 = vpop.f32.mrb[0].mxu0
  %v4251 = vadd.f32 0.0, %v4250
  %v4252 = vpop.f32.mrb[0].mxu0
  %4253 = vmatprep.mubr.f32.mxu0 0.0
  %4254 = vmatmul.mubr.f32.gmra.mrb[0].mxu0 %v4128
  %v4255 = vpop.f32.mrb[0].mxu0
  %v4256 = vadd.f32 0.0, %v4255
  %v4257 = vpop.f32.mrb[0].mxu0
  %4258 = vmatprep.mubr.f32.mxu0 0.0
  %4259 = vmatmul.mubr.f32.gmra.mrb[0].mxu0 %v4131
  %v4260 = vpop.f32.mrb[0].mxu0
  %v4261 = vadd.f32 0.0, %v4260
  %v4262 = vpop.f32.mrb[0].mxu0
  %4263 = vmatprep.mubr.f32.mxu0 0.0
  %4264 = vmatmul.mubr.f32.gmra.mrb[0].mxu0 %v4134
  %v4265 = vpop.f32.mrb[0].mxu0
  %v4266 = vadd.f32 0.0, %v4265
  %v4267 = vpop.f32.mrb[0].mxu0
  %4268 = vmatprep.mubr.f32.mxu0 0.0
  %4269 = vmatmul.mubr.f32.gmra.mrb[0].mxu0 %v4137
  %v4270 = vpop.f32.mrb[0].mxu0
  %v4271 = vadd.f32 0.0, %v4270
  %v4272 = vpop.f32.mrb[0].mxu0
  %4273 = vmatprep.mubr.f32.mxu0 0.0
  %4274 = vmatmul.mubr.f32.gmra.mrb[0].mxu0 %v4140
  %v4275 = vpop.f32.mrb[0].mxu0
  %v4276 = vadd.f32 0.0, %v4275
  %v4277 = vpop.f32.mrb[0].mxu0
  %4278 = vmatprep.mubr.f32.mxu0 0.0
  %4279 = vmatmul.mubr.f32.gmra.mrb[0].mxu0 %v4143
  %v4280 = vpop.f32.mrb[0].mxu0
  %v4281 = vadd.f32 0.0, %v4280
  %v4282 = vpop.f32.mrb[0].mxu0
  %4283 = vmatprep.mubr.f32.mxu0 0.0
  %4284 = vmatmul.mubr.f32.gmra.mrb[0].mxu0 %v4146
  %v4285 = vpop.f32.mrb[0].mxu0
  %v4286 = vadd.f32 0.0, %v4285
  %v4287 = vpop.f32.mrb[0].mxu0
  %4288 = vmatprep.mubr.f32.mxu0 0.0
  %4289 = vmatmul.mubr.f32.gmra.mrb[0].mxu0 %v4149
  %v4290 = vpop.f32.mrb[0].mxu0
  %v4291 = vadd.f32 0.0, %v4290
  %v4292 = vpop.f32.mrb[0].mxu0
  %4293 = vmatprep.mubr.f32.mxu0 0.0
  %4294 = vmatmul.mubr.f32.gmra.mrb[0].mxu0 %v4152
  %v4295 = vpop.f32.mrb[0].mxu0
  %v4296 = vadd.f32 0.0, %v4295
  %v4297 = vpop.f32.mrb[0].mxu0
  %4298 = vdwg.mxu0
  %v4299 = vadd.f32 %v4065, %v4221
  %v4300 = vadd.f32 %v4066, %v4226
  %v4301 = vadd.f32 %v4067, %v4231
  %v4302 = vadd.f32 %v4068, %v4236
  %v4303 = vadd.f32 %v4069, %v4241
  %v4304 = vadd.f32 %v4070, %v4246
  %v4305 = vadd.f32 %v4071, %v4251
  %v4306 = vadd.f32 %v4072, %v4256
  %v4307 = vadd.f32 %v4073, %v4261
  %v4308 = vadd.f32 %v4074, %v4266
  %v4309 = vadd.f32 %v4075, %v4271
  %v4310 = vadd.f32 %v4076, %v4276
  %v4311 = vadd.f32 %v4077, %v4281
  %v4312 = vadd.f32 %v4078, %v4286
  %v4313 = vadd.f32 %v4079, %v4291
  %v4314 = vadd.f32 %v4080, %v4296
  %v4315 = vld [vmem:[%s3846 + $0x2] sm:$0xff]
  %v4316 = vld [vmem:[%s3846 + $0x12] sm:$0xff]
  %v4317 = vld [vmem:[%s3846 + $0x22] sm:$0xff]
  %v4318 = vld [vmem:[%s3846 + $0x32] sm:$0xff]
  %v4319 = vld [vmem:[%s3846 + $0x42] sm:$0xff]
  %v4320 = vld [vmem:[%s3846 + $0x52] sm:$0xff]
  %v4321 = vld [vmem:[%s3846 + $0x62] sm:$0xff]
  %v4322 = vld [vmem:[%s3846 + $0x72] sm:$0xff]
  %v4323 = vld [vmem:[%s3846 + $0xa2] sm:$0xff]
  %v4324 = vld [vmem:[%s3846 + $0xb2] sm:$0xff]
  %v4325 = vld [vmem:[%s3846 + $0xc2] sm:$0xff]
  %v4326 = vld [vmem:[%s3846 + $0xd2] sm:$0xff]
  %v4327 = vld [vmem:[%s3846 + $0xe2] sm:$0xff]
  %v4328 = vld [vmem:[%s3846 + $0xf2] sm:$0xff]
  %v4329 = vld [vmem:[%s3846 + $0x102] sm:$0xff]
  %v4330 = vld [vmem:[%s3846 + $0x112] sm:$0xff]
  %s4331 = scalar_lea.vmem %s2, 512
  %v4332 = vld [vmem:[%s4331] sm:$0xff]
  %v4333 = vld [vmem:[%s4331 + $0x8] sm:$0xff]
  %v4334 = vld [vmem:[%s4331 + $0x10] sm:$0xff]
  %v4335 = vld [vmem:[%s4331 + $0x18] sm:$0xff]
  %v4336 = vld [vmem:[%s4331 + $0x20] sm:$0xff]
  %v4337 = vld [vmem:[%s4331 + $0x28] sm:$0xff]
  %v4338 = vld [vmem:[%s4331 + $0x30] sm:$0xff]
  %v4339 = vld [vmem:[%s4331 + $0x38] sm:$0xff]
  %v4341 = vsel %vm2087, %v4315, 0
  %v4344 = vsel %vm2087, %v4316, 0
  %v4347 = vsel %vm2087, %v4317, 0
  %v4350 = vsel %vm2087, %v4318, 0
  %v4353 = vsel %vm2087, %v4319, 0
  %v4356 = vsel %vm2087, %v4320, 0
  %v4359 = vsel %vm2087, %v4321, 0
  %v4362 = vsel %vm2087, %v4322, 0
  %v4365 = vsel %vm2087, %v4323, 0
  %v4368 = vsel %vm2087, %v4324, 0
  %v4371 = vsel %vm2087, %v4325, 0
  %v4374 = vsel %vm2087, %v4326, 0
  %v4377 = vsel %vm2087, %v4327, 0
  %v4380 = vsel %vm2087, %v4328, 0
  %v4383 = vsel %vm2087, %v4329, 0
  %v4386 = vsel %vm2087, %v4330, 0
  %4388 = vmatprep.subr.mxu0 0.0
  %4389 = vmatpush1.msra.mxu0 %v4332
  %4390 = vmatprep.subr.mxu0 0.0
  %4391 = vmatpush1.msra.mxu0 %v4333
  %4392 = vmatprep.subr.mxu0 0.0
  %4393 = vmatpush1.msra.mxu0 %v4334
  %4394 = vmatprep.subr.mxu0 0.0
  %4395 = vmatpush1.msra.mxu0 %v4335
  %4396 = vmatprep.subr.mxu0 0.0
  %4397 = vmatpush1.msra.mxu0 %v4336
  %4398 = vmatprep.subr.mxu0 0.0
  %4399 = vmatpush1.msra.mxu0 %v4337
  %4400 = vmatprep.subr.mxu0 0.0
  %4401 = vmatpush1.msra.mxu0 %v4338
  %4402 = vmatprep.subr.mxu0 0.0
  %4403 = vmatpush1.msra.mxu0 %v4339
  %4404 = vmatprep.subr.mxu0 0.0
  %4405 = vmatpush1.msra.mxu0 0.0
  %4406 = vmatprep.subr.mxu0 0.0
  %4407 = vmatpush1.msra.mxu0 0.0
  %4408 = vmatprep.subr.mxu0 0.0
  %4409 = vmatpush1.msra.mxu0 0.0
  %4410 = vmatprep.subr.mxu0 0.0
  %4411 = vmatpush1.msra.mxu0 0.0
  %4412 = vmatprep.subr.mxu0 0.0
  %4413 = vmatpush1.msra.mxu0 0.0
  %4414 = vmatprep.subr.mxu0 0.0
  %4415 = vmatpush1.msra.mxu0 0.0
  %4416 = vmatprep.subr.mxu0 0.0
  %4417 = vmatpush1.msra.mxu0 0.0
  %4418 = vmatprep.subr.mxu0 0.0
  %4419 = vmatpush1.msra.mxu0 0.0
  %4420 = vmatprep.subr.mxu0 0.0
  %4421 = vmatpush1.msra.mxu0 0.0
  %4422 = vmatprep.subr.mxu0 0.0
  %4423 = vmatpush1.msra.mxu0 0.0
  %4424 = vmatprep.subr.mxu0 0.0
  %4425 = vmatpush1.msra.mxu0 0.0
  %4426 = vmatprep.subr.mxu0 0.0
  %4427 = vmatpush1.msra.mxu0 0.0
  %4428 = vmatprep.subr.mxu0 0.0
  %4429 = vmatpush1.msra.mxu0 0.0
  %4430 = vmatprep.subr.mxu0 0.0
  %4431 = vmatpush1.msra.mxu0 0.0
  %4432 = vmatprep.subr.mxu0 0.0
  %4433 = vmatpush1.msra.mxu0 0.0
  %4434 = vmatprep.subr.mxu0 0.0
  %4435 = vmatpush1.msra.mxu0 0.0
  %4436 = vmatprep.subr.mxu0 0.0
  %4437 = vmatpush1.msra.mxu0 0.0
  %4438 = vmatprep.subr.mxu0 0.0
  %4439 = vmatpush1.msra.mxu0 0.0
  %4440 = vmatprep.subr.mxu0 0.0
  %4441 = vmatpush1.msra.mxu0 0.0
  %4442 = vmatprep.subr.mxu0 0.0
  %4443 = vmatpush1.msra.mxu0 0.0
  %4444 = vmatprep.subr.mxu0 0.0
  %4445 = vmatpush1.msra.mxu0 0.0
  %4446 = vmatprep.subr.mxu0 0.0
  %4447 = vmatpush1.msra.mxu0 0.0
  %4448 = vmatprep.subr.mxu0 0.0
  %4449 = vmatpush1.msra.mxu0 0.0
  %4450 = vmatprep.subr.mxu0 0.0
  %4451 = vmatpush1.msra.mxu0 0.0
  %4452 = vmatprep.mubr.f32.mxu0 0.0
  %4453 = vmatmul.mubr.f32.gmra.mrb[0].mxu0 %v4341
  %v4454 = vpop.f32.mrb[0].mxu0
  %v4455 = vadd.f32 0.0, %v4454
  %v4456 = vpop.f32.mrb[0].mxu0
  %4457 = vmatprep.mubr.f32.mxu0 0.0
  %4458 = vmatmul.mubr.f32.gmra.mrb[0].mxu0 %v4344
  %v4459 = vpop.f32.mrb[0].mxu0
  %v4460 = vadd.f32 0.0, %v4459
  %v4461 = vpop.f32.mrb[0].mxu0
  %4462 = vmatprep.mubr.f32.mxu0 0.0
  %4463 = vmatmul.mubr.f32.gmra.mrb[0].mxu0 %v4347
  %v4464 = vpop.f32.mrb[0].mxu0
  %v4465 = vadd.f32 0.0, %v4464
  %v4466 = vpop.f32.mrb[0].mxu0
  %4467 = vmatprep.mubr.f32.mxu0 0.0
  %4468 = vmatmul.mubr.f32.gmra.mrb[0].mxu0 %v4350
  %v4469 = vpop.f32.mrb[0].mxu0
  %v4470 = vadd.f32 0.0, %v4469
  %v4471 = vpop.f32.mrb[0].mxu0
  %4472 = vmatprep.mubr.f32.mxu0 0.0
  %4473 = vmatmul.mubr.f32.gmra.mrb[0].mxu0 %v4353
  %v4474 = vpop.f32.mrb[0].mxu0
  %v4475 = vadd.f32 0.0, %v4474
  %v4476 = vpop.f32.mrb[0].mxu0
  %4477 = vmatprep.mubr.f32.mxu0 0.0
  %4478 = vmatmul.mubr.f32.gmra.mrb[0].mxu0 %v4356
  %v4479 = vpop.f32.mrb[0].mxu0
  %v4480 = vadd.f32 0.0, %v4479
  %v4481 = vpop.f32.mrb[0].mxu0
  %4482 = vmatprep.mubr.f32.mxu0 0.0
  %4483 = vmatmul.mubr.f32.gmra.mrb[0].mxu0 %v4359
  %v4484 = vpop.f32.mrb[0].mxu0
  %v4485 = vadd.f32 0.0, %v4484
  %v4486 = vpop.f32.mrb[0].mxu0
  %4487 = vmatprep.mubr.f32.mxu0 0.0
  %4488 = vmatmul.mubr.f32.gmra.mrb[0].mxu0 %v4362
  %v4489 = vpop.f32.mrb[0].mxu0
  %v4490 = vadd.f32 0.0, %v4489
  %v4491 = vpop.f32.mrb[0].mxu0
  %4492 = vmatprep.mubr.f32.mxu0 0.0
  %4493 = vmatmul.mubr.f32.gmra.mrb[0].mxu0 %v4365
  %v4494 = vpop.f32.mrb[0].mxu0
  %v4495 = vadd.f32 0.0, %v4494
  %v4496 = vpop.f32.mrb[0].mxu0
  %4497 = vmatprep.mubr.f32.mxu0 0.0
  %4498 = vmatmul.mubr.f32.gmra.mrb[0].mxu0 %v4368
  %v4499 = vpop.f32.mrb[0].mxu0
  %v4500 = vadd.f32 0.0, %v4499
  %v4501 = vpop.f32.mrb[0].mxu0
  %4502 = vmatprep.mubr.f32.mxu0 0.0
  %4503 = vmatmul.mubr.f32.gmra.mrb[0].mxu0 %v4371
  %v4504 = vpop.f32.mrb[0].mxu0
  %v4505 = vadd.f32 0.0, %v4504
  %v4506 = vpop.f32.mrb[0].mxu0
  %4507 = vmatprep.mubr.f32.mxu0 0.0
  %4508 = vmatmul.mubr.f32.gmra.mrb[0].mxu0 %v4374
  %v4509 = vpop.f32.mrb[0].mxu0
  %v4510 = vadd.f32 0.0, %v4509
  %v4511 = vpop.f32.mrb[0].mxu0
  %4512 = vmatprep.mubr.f32.mxu0 0.0
  %4513 = vmatmul.mubr.f32.gmra.mrb[0].mxu0 %v4377
  %v4514 = vpop.f32.mrb[0].mxu0
  %v4515 = vadd.f32 0.0, %v4514
  %v4516 = vpop.f32.mrb[0].mxu0
  %4517 = vmatprep.mubr.f32.mxu0 0.0
  %4518 = vmatmul.mubr.f32.gmra.mrb[0].mxu0 %v4380
  %v4519 = vpop.f32.mrb[0].mxu0
  %v4520 = vadd.f32 0.0, %v4519
  %v4521 = vpop.f32.mrb[0].mxu0
  %4522 = vmatprep.mubr.f32.mxu0 0.0
  %4523 = vmatmul.mubr.f32.gmra.mrb[0].mxu0 %v4383
  %v4524 = vpop.f32.mrb[0].mxu0
  %v4525 = vadd.f32 0.0, %v4524
  %v4526 = vpop.f32.mrb[0].mxu0
  %4527 = vmatprep.mubr.f32.mxu0 0.0
  %4528 = vmatmul.mubr.f32.gmra.mrb[0].mxu0 %v4386
  %v4529 = vpop.f32.mrb[0].mxu0
  %v4530 = vadd.f32 0.0, %v4529
  %v4531 = vpop.f32.mrb[0].mxu0
  %4532 = vdwg.mxu0
  %v4533 = vadd.f32 %v4299, %v4455
  %v4534 = vadd.f32 %v4300, %v4460
  %v4535 = vadd.f32 %v4301, %v4465
  %v4536 = vadd.f32 %v4302, %v4470
  %v4537 = vadd.f32 %v4303, %v4475
  %v4538 = vadd.f32 %v4304, %v4480
  %v4539 = vadd.f32 %v4305, %v4485
  %v4540 = vadd.f32 %v4306, %v4490
  %v4541 = vadd.f32 %v4307, %v4495
  %v4542 = vadd.f32 %v4308, %v4500
  %v4543 = vadd.f32 %v4309, %v4505
  %v4544 = vadd.f32 %v4310, %v4510
  %v4545 = vadd.f32 %v4311, %v4515
  %v4546 = vadd.f32 %v4312, %v4520
  %v4547 = vadd.f32 %v4313, %v4525
  %v4548 = vadd.f32 %v4314, %v4530
  %v4549 = vld [vmem:[%s4] sm:$0x1]
  %v4550 = vlaneseq
  %v4551 = vshrl.u32 %v4550, 7
  %v4552 = vsub.s32 0, %v4551
  %v4553 = vrot.slane %v4549, %v4552
  %v4554 = vadd.f32 %v4533, %v4553
  %v4555 = vadd.f32 %v4534, %v4553
  %v4556 = vadd.f32 %v4535, %v4553
  %v4557 = vadd.f32 %v4536, %v4553
  %v4558 = vadd.f32 %v4537, %v4553
  %v4559 = vadd.f32 %v4538, %v4553
  %v4560 = vadd.f32 %v4539, %v4553
  %v4561 = vadd.f32 %v4540, %v4553
  %v4562 = vadd.f32 %v4541, %v4553
  %v4563 = vadd.f32 %v4542, %v4553
  %v4564 = vadd.f32 %v4543, %v4553
  %v4565 = vadd.f32 %v4544, %v4553
  %v4566 = vadd.f32 %v4545, %v4553
  %v4567 = vadd.f32 %v4546, %v4553
  %v4568 = vadd.f32 %v4547, %v4553
  %v4569 = vadd.f32 %v4548, %v4553
  %v4570 = vsel %vm2087, %v4554, 0.0
  %v4571 = vsel %vm2087, %v4555, 0.0
  %v4572 = vadd.f32 %v4570, %v4571
  %v4573 = vsel %vm2087, %v4556, 0.0
  %v4574 = vadd.f32 %v4572, %v4573
  %v4575 = vsel %vm2087, %v4557, 0.0
  %v4576 = vadd.f32 %v4574, %v4575
  %v4577 = vsel %vm2087, %v4558, 0.0
  %v4578 = vadd.f32 %v4576, %v4577
  %v4579 = vsel %vm2087, %v4559, 0.0
  %v4580 = vadd.f32 %v4578, %v4579
  %v4581 = vsel %vm2087, %v4560, 0.0
  %v4582 = vadd.f32 %v4580, %v4581
  %v4583 = vsel %vm2087, %v4561, 0.0
  %v4584 = vadd.f32 %v4582, %v4583
  %v4585 = vsel %vm2087, %v4562, 0.0
  %v4586 = vadd.f32 %v4584, %v4585
  %v4587 = vsel %vm2087, %v4563, 0.0
  %v4588 = vadd.f32 %v4586, %v4587
  %v4589 = vsel %vm2087, %v4564, 0.0
  %v4590 = vadd.f32 %v4588, %v4589
  %v4591 = vsel %vm2087, %v4565, 0.0
  %v4592 = vadd.f32 %v4590, %v4591
  %v4593 = vsel %vm2087, %v4566, 0.0
  %v4594 = vadd.f32 %v4592, %v4593
  %v4595 = vsel %vm2087, %v4567, 0.0
  %v4596 = vadd.f32 %v4594, %v4595
  %v4597 = vsel %vm2087, %v4568, 0.0
  %v4598 = vadd.f32 %v4596, %v4597
  %v4599 = vsel %vm2087, %v4569, 0.0
  %v4600 = vadd.f32 %v4598, %v4599
  %v4601 = vrot.slane %v4600, 4
  %v4602 = vadd.f32 %v4600, %v4601
  %v4603 = vrot.slane %v4602, 2
  %v4604 = vadd.f32 %v4602, %v4603
  %v4605 = vrot.slane %v4604, 1
  %v4606 = vadd.f32 %v4604, %v4605
  %v4607 = vmul.f32 %v4606, 0.0078125
  %v4608 = vmul.f32 %v4554, %v4554
  %v4609 = vmul.f32 %v4555, %v4555
  %v4610 = vmul.f32 %v4556, %v4556
  %v4611 = vmul.f32 %v4557, %v4557
  %v4612 = vmul.f32 %v4558, %v4558
  %v4613 = vmul.f32 %v4559, %v4559
  %v4614 = vmul.f32 %v4560, %v4560
  %v4615 = vmul.f32 %v4561, %v4561
  %v4616 = vmul.f32 %v4562, %v4562
  %v4617 = vmul.f32 %v4563, %v4563
  %v4618 = vmul.f32 %v4564, %v4564
  %v4619 = vmul.f32 %v4565, %v4565
  %v4620 = vmul.f32 %v4566, %v4566
  %v4621 = vmul.f32 %v4567, %v4567
  %v4622 = vmul.f32 %v4568, %v4568
  %v4623 = vmul.f32 %v4569, %v4569
  %v4624 = vsel %vm2087, %v4608, 0.0
  %v4625 = vsel %vm2087, %v4609, 0.0
  %v4626 = vadd.f32 %v4624, %v4625
  %v4627 = vsel %vm2087, %v4610, 0.0
  %v4628 = vadd.f32 %v4626, %v4627
  %v4629 = vsel %vm2087, %v4611, 0.0
  %v4630 = vadd.f32 %v4628, %v4629
  %v4631 = vsel %vm2087, %v4612, 0.0
  %v4632 = vadd.f32 %v4630, %v4631
  %v4633 = vsel %vm2087, %v4613, 0.0
  %v4634 = vadd.f32 %v4632, %v4633
  %v4635 = vsel %vm2087, %v4614, 0.0
  %v4636 = vadd.f32 %v4634, %v4635
  %v4637 = vsel %vm2087, %v4615, 0.0
  %v4638 = vadd.f32 %v4636, %v4637
  %v4639 = vsel %vm2087, %v4616, 0.0
  %v4640 = vadd.f32 %v4638, %v4639
  %v4641 = vsel %vm2087, %v4617, 0.0
  %v4642 = vadd.f32 %v4640, %v4641
  %v4643 = vsel %vm2087, %v4618, 0.0
  %v4644 = vadd.f32 %v4642, %v4643
  %v4645 = vsel %vm2087, %v4619, 0.0
  %v4646 = vadd.f32 %v4644, %v4645
  %v4647 = vsel %vm2087, %v4620, 0.0
  %v4648 = vadd.f32 %v4646, %v4647
  %v4649 = vsel %vm2087, %v4621, 0.0
  %v4650 = vadd.f32 %v4648, %v4649
  %v4651 = vsel %vm2087, %v4622, 0.0
  %v4652 = vadd.f32 %v4650, %v4651
  %v4653 = vsel %vm2087, %v4623, 0.0
  %v4654 = vadd.f32 %v4652, %v4653
  %v4655 = vrot.slane %v4654, 4
  %v4656 = vadd.f32 %v4654, %v4655
  %v4657 = vrot.slane %v4656, 2
  %v4658 = vadd.f32 %v4656, %v4657
  %v4659 = vrot.slane %v4658, 1
  %v4660 = vadd.f32 %v4658, %v4659
  %v4661 = vmul.f32 %v4660, 0.0078125
  %v4662 = vld [vmem:[%s6] sm:$0xff]
  %v4663 = vld [vmem:[%s6 + $0x8] sm:$0xff]
  %v4664 = vld [vmem:[%s6 + $0x10] sm:$0xff]
  %v4665 = vld [vmem:[%s6 + $0x18] sm:$0xff]
  %v4666 = vld [vmem:[%s6 + $0x20] sm:$0xff]
  %v4667 = vld [vmem:[%s6 + $0x28] sm:$0xff]
  %v4668 = vld [vmem:[%s6 + $0x30] sm:$0xff]
  %v4669 = vld [vmem:[%s6 + $0x38] sm:$0xff]
  %v4671 = vsel %vm2087, %v4607, 0
  %4673 = vmatprep.subr.mxu0 0.0
  %4674 = vmatpush1.msra.mxu0 %v4662
  %4675 = vmatprep.subr.mxu0 0.0
  %4676 = vmatpush1.msra.mxu0 %v4663
  %4677 = vmatprep.subr.mxu0 0.0
  %4678 = vmatpush1.msra.mxu0 %v4664
  %4679 = vmatprep.subr.mxu0 0.0
  %4680 = vmatpush1.msra.mxu0 %v4665
  %4681 = vmatprep.subr.mxu0 0.0
  %4682 = vmatpush1.msra.mxu0 %v4666
  %4683 = vmatprep.subr.mxu0 0.0
  %4684 = vmatpush1.msra.mxu0 %v4667
  %4685 = vmatprep.subr.mxu0 0.0
  %4686 = vmatpush1.msra.mxu0 %v4668
  %4687 = vmatprep.subr.mxu0 0.0
  %4688 = vmatpush1.msra.mxu0 %v4669
  %4689 = vmatprep.subr.mxu0 0.0
  %4690 = vmatpush1.msra.mxu0 0.0
  %4691 = vmatprep.subr.mxu0 0.0
  %4692 = vmatpush1.msra.mxu0 0.0
  %4693 = vmatprep.subr.mxu0 0.0
  %4694 = vmatpush1.msra.mxu0 0.0
  %4695 = vmatprep.subr.mxu0 0.0
  %4696 = vmatpush1.msra.mxu0 0.0
  %4697 = vmatprep.subr.mxu0 0.0
  %4698 = vmatpush1.msra.mxu0 0.0
  %4699 = vmatprep.subr.mxu0 0.0
  %4700 = vmatpush1.msra.mxu0 0.0
  %4701 = vmatprep.subr.mxu0 0.0
  %4702 = vmatpush1.msra.mxu0 0.0
  %4703 = vmatprep.subr.mxu0 0.0
  %4704 = vmatpush1.msra.mxu0 0.0
  %4705 = vmatprep.subr.mxu0 0.0
  %4706 = vmatpush1.msra.mxu0 0.0
  %4707 = vmatprep.subr.mxu0 0.0
  %4708 = vmatpush1.msra.mxu0 0.0
  %4709 = vmatprep.subr.mxu0 0.0
  %4710 = vmatpush1.msra.mxu0 0.0
  %4711 = vmatprep.subr.mxu0 0.0
  %4712 = vmatpush1.msra.mxu0 0.0
  %4713 = vmatprep.subr.mxu0 0.0
  %4714 = vmatpush1.msra.mxu0 0.0
  %4715 = vmatprep.subr.mxu0 0.0
  %4716 = vmatpush1.msra.mxu0 0.0
  %4717 = vmatprep.subr.mxu0 0.0
  %4718 = vmatpush1.msra.mxu0 0.0
  %4719 = vmatprep.subr.mxu0 0.0
  %4720 = vmatpush1.msra.mxu0 0.0
  %4721 = vmatprep.subr.mxu0 0.0
  %4722 = vmatpush1.msra.mxu0 0.0
  %4723 = vmatprep.subr.mxu0 0.0
  %4724 = vmatpush1.msra.mxu0 0.0
  %4725 = vmatprep.subr.mxu0 0.0
  %4726 = vmatpush1.msra.mxu0 0.0
  %4727 = vmatprep.subr.mxu0 0.0
  %4728 = vmatpush1.msra.mxu0 0.0
  %4729 = vmatprep.subr.mxu0 0.0
  %4730 = vmatpush1.msra.mxu0 0.0
  %4731 = vmatprep.subr.mxu0 0.0
  %4732 = vmatpush1.msra.mxu0 0.0
  %4733 = vmatprep.subr.mxu0 0.0
  %4734 = vmatpush1.msra.mxu0 0.0
  %4735 = vmatprep.subr.mxu0 0.0
  %4736 = vmatpush1.msra.mxu0 0.0
  %4737 = vmatprep.mubr.f32.mxu0 0.0
  %4738 = vmatmul.mubr.f32.gmra.mrb[0].mxu0 %v4671
  %v4739 = vpop.f32.mrb[0].mxu0
  %v4740 = vadd.f32 0.0, %v4739
  %v4741 = vpop.f32.mrb[0].mxu0
  %4742 = vdwg.mxu0
  %v4744 = vsel %vm2087, %v4661, 0
  %4746 = vmatprep.subr.mxu0 0.0
  %4747 = vmatpush1.msra.mxu0 %v4662
  %4748 = vmatprep.subr.mxu0 0.0
  %4749 = vmatpush1.msra.mxu0 %v4663
  %4750 = vmatprep.subr.mxu0 0.0
  %4751 = vmatpush1.msra.mxu0 %v4664
  %4752 = vmatprep.subr.mxu0 0.0
  %4753 = vmatpush1.msra.mxu0 %v4665
  %4754 = vmatprep.subr.mxu0 0.0
  %4755 = vmatpush1.msra.mxu0 %v4666
  %4756 = vmatprep.subr.mxu0 0.0
  %4757 = vmatpush1.msra.mxu0 %v4667
  %4758 = vmatprep.subr.mxu0 0.0
  %4759 = vmatpush1.msra.mxu0 %v4668
  %4760 = vmatprep.subr.mxu0 0.0
  %4761 = vmatpush1.msra.mxu0 %v4669
  %4762 = vmatprep.subr.mxu0 0.0
  %4763 = vmatpush1.msra.mxu0 0.0
  %4764 = vmatprep.subr.mxu0 0.0
  %4765 = vmatpush1.msra.mxu0 0.0
  %4766 = vmatprep.subr.mxu0 0.0
  %4767 = vmatpush1.msra.mxu0 0.0
  %4768 = vmatprep.subr.mxu0 0.0
  %4769 = vmatpush1.msra.mxu0 0.0
  %4770 = vmatprep.subr.mxu0 0.0
  %4771 = vmatpush1.msra.mxu0 0.0
  %4772 = vmatprep.subr.mxu0 0.0
  %4773 = vmatpush1.msra.mxu0 0.0
  %4774 = vmatprep.subr.mxu0 0.0
  %4775 = vmatpush1.msra.mxu0 0.0
  %4776 = vmatprep.subr.mxu0 0.0
  %4777 = vmatpush1.msra.mxu0 0.0
  %4778 = vmatprep.subr.mxu0 0.0
  %4779 = vmatpush1.msra.mxu0 0.0
  %4780 = vmatprep.subr.mxu0 0.0
  %4781 = vmatpush1.msra.mxu0 0.0
  %4782 = vmatprep.subr.mxu0 0.0
  %4783 = vmatpush1.msra.mxu0 0.0
  %4784 = vmatprep.subr.mxu0 0.0
  %4785 = vmatpush1.msra.mxu0 0.0
  %4786 = vmatprep.subr.mxu0 0.0
  %4787 = vmatpush1.msra.mxu0 0.0
  %4788 = vmatprep.subr.mxu0 0.0
  %4789 = vmatpush1.msra.mxu0 0.0
  %4790 = vmatprep.subr.mxu0 0.0
  %4791 = vmatpush1.msra.mxu0 0.0
  %4792 = vmatprep.subr.mxu0 0.0
  %4793 = vmatpush1.msra.mxu0 0.0
  %4794 = vmatprep.subr.mxu0 0.0
  %4795 = vmatpush1.msra.mxu0 0.0
  %4796 = vmatprep.subr.mxu0 0.0
  %4797 = vmatpush1.msra.mxu0 0.0
  %4798 = vmatprep.subr.mxu0 0.0
  %4799 = vmatpush1.msra.mxu0 0.0
  %4800 = vmatprep.subr.mxu0 0.0
  %4801 = vmatpush1.msra.mxu0 0.0
  %4802 = vmatprep.subr.mxu0 0.0
  %4803 = vmatpush1.msra.mxu0 0.0
  %4804 = vmatprep.subr.mxu0 0.0
  %4805 = vmatpush1.msra.mxu0 0.0
  %4806 = vmatprep.subr.mxu0 0.0
  %4807 = vmatpush1.msra.mxu0 0.0
  %4808 = vmatprep.subr.mxu0 0.0
  %4809 = vmatpush1.msra.mxu0 0.0
  %4810 = vmatprep.mubr.f32.mxu0 0.0
  %4811 = vmatmul.mubr.f32.gmra.mrb[0].mxu0 %v4744
  %v4812 = vpop.f32.mrb[0].mxu0
  %v4813 = vadd.f32 0.0, %v4812
  %v4814 = vpop.f32.mrb[0].mxu0
  %4815 = vdwg.mxu0
  %v4816 = vmul.f32 %v4740, %v4740
  %v4817 = vsub.f32 %v4813, %v4816
  %v4818 = vlaneseq
  %v4819 = vshrl.u32 %v4818, 7
  %v4820 = vsub.s32 0, %v4819
  %v4821 = vrot.slane %v4740, %v4820
  %v4822 = vsub.f32 %v4554, %v4821
  %v4823 = vsub.f32 %v4555, %v4821
  %v4824 = vsub.f32 %v4556, %v4821
  %v4825 = vsub.f32 %v4557, %v4821
  %v4826 = vsub.f32 %v4558, %v4821
  %v4827 = vsub.f32 %v4559, %v4821
  %v4828 = vsub.f32 %v4560, %v4821
  %v4829 = vsub.f32 %v4561, %v4821
  %v4830 = vsub.f32 %v4562, %v4821
  %v4831 = vsub.f32 %v4563, %v4821
  %v4832 = vsub.f32 %v4564, %v4821
  %v4833 = vsub.f32 %v4565, %v4821
  %v4834 = vsub.f32 %v4566, %v4821
  %v4835 = vsub.f32 %v4567, %v4821
  %v4836 = vsub.f32 %v4568, %v4821
  %v4837 = vsub.f32 %v4569, %v4821
  %v4838 = vld [vmem:[%s4 + $0x1] sm:$0x1]
  %v4839 = vadd.f32 %v4817, 1e-05
  %v4840 = vrsqrt.pop %v4839
  %v4841 = vmul.f32 %v4838, %v4840
  %v4842 = vlaneseq
  %v4843 = vshrl.u32 %v4842, 7
  %v4844 = vsub.s32 0, %v4843
  %v4845 = vrot.slane %v4841, %v4844
  %v4846 = vmul.f32 %v4822, %v4845
  %v4847 = vmul.f32 %v4823, %v4845
  %v4848 = vmul.f32 %v4824, %v4845
  %v4849 = vmul.f32 %v4825, %v4845
  %v4850 = vmul.f32 %v4826, %v4845
  %v4851 = vmul.f32 %v4827, %v4845
  %v4852 = vmul.f32 %v4828, %v4845
  %v4853 = vmul.f32 %v4829, %v4845
  %v4854 = vmul.f32 %v4830, %v4845
  %v4855 = vmul.f32 %v4831, %v4845
  %v4856 = vmul.f32 %v4832, %v4845
  %v4857 = vmul.f32 %v4833, %v4845
  %v4858 = vmul.f32 %v4834, %v4845
  %v4859 = vmul.f32 %v4835, %v4845
  %v4860 = vmul.f32 %v4836, %v4845
  %v4861 = vmul.f32 %v4837, %v4845
  %v4862 = vld [vmem:[%s4 + $0x2] sm:$0x1]
  %v4863 = vlaneseq
  %v4864 = vshrl.u32 %v4863, 7
  %v4865 = vsub.s32 0, %v4864
  %v4866 = vrot.slane %v4862, %v4865
  %v4867 = vadd.f32 %v4846, %v4866
  %v4868 = vadd.f32 %v4847, %v4866
  %v4869 = vadd.f32 %v4848, %v4866
  %v4870 = vadd.f32 %v4849, %v4866
  %v4871 = vadd.f32 %v4850, %v4866
  %v4872 = vadd.f32 %v4851, %v4866
  %v4873 = vadd.f32 %v4852, %v4866
  %v4874 = vadd.f32 %v4853, %v4866
  %v4875 = vadd.f32 %v4854, %v4866
  %v4876 = vadd.f32 %v4855, %v4866
  %v4877 = vadd.f32 %v4856, %v4866
  %v4878 = vadd.f32 %v4857, %v4866
  %v4879 = vadd.f32 %v4858, %v4866
  %v4880 = vadd.f32 %v4859, %v4866
  %v4881 = vadd.f32 %v4860, %v4866
  %v4882 = vadd.f32 %v4861, %v4866
  %v4883 = vmax.f32 %v4867, 0.0
  %v4884 = vmax.f32 %v4868, 0.0
  %v4885 = vmax.f32 %v4869, 0.0
  %v4886 = vmax.f32 %v4870, 0.0
  %v4887 = vmax.f32 %v4871, 0.0
  %v4888 = vmax.f32 %v4872, 0.0
  %v4889 = vmax.f32 %v4873, 0.0
  %v4890 = vmax.f32 %v4874, 0.0
  %v4891 = vmax.f32 %v4875, 0.0
  %v4892 = vmax.f32 %v4876, 0.0
  %v4893 = vmax.f32 %v4877, 0.0
  %v4894 = vmax.f32 %v4878, 0.0
  %v4895 = vmax.f32 %v4879, 0.0
  %v4896 = vmax.f32 %v4880, 0.0
  %v4897 = vmax.f32 %v4881, 0.0
  %v4898 = vmax.f32 %v4882, 0.0
  %4899 = vst.msk [vmem:[%s7] sm:$0xff] %vm2087, %v4883
  %4900 = vst.msk [vmem:[%s7 + $0x8] sm:$0xff] %vm2087, %v4884
  %4901 = vst.msk [vmem:[%s7 + $0x10] sm:$0xff] %vm2087, %v4885
  %4902 = vst.msk [vmem:[%s7 + $0x18] sm:$0xff] %vm2087, %v4886
  %4903 = vst.msk [vmem:[%s7 + $0x20] sm:$0xff] %vm2087, %v4887
  %4904 = vst.msk [vmem:[%s7 + $0x28] sm:$0xff] %vm2087, %v4888
  %4905 = vst.msk [vmem:[%s7 + $0x30] sm:$0xff] %vm2087, %v4889
  %4906 = vst.msk [vmem:[%s7 + $0x38] sm:$0xff] %vm2087, %v4890
  %4907 = vst.msk [vmem:[%s7 + $0x40] sm:$0xff] %vm2087, %v4891
  %4908 = vst.msk [vmem:[%s7 + $0x48] sm:$0xff] %vm2087, %v4892
  %4909 = vst.msk [vmem:[%s7 + $0x50] sm:$0xff] %vm2087, %v4893
  %4910 = vst.msk [vmem:[%s7 + $0x58] sm:$0xff] %vm2087, %v4894
  %4911 = vst.msk [vmem:[%s7 + $0x60] sm:$0xff] %vm2087, %v4895
  %4912 = vst.msk [vmem:[%s7 + $0x68] sm:$0xff] %vm2087, %v4896
  %4913 = vst.msk [vmem:[%s7 + $0x70] sm:$0xff] %vm2087, %v4897
  %4914 = vst.msk [vmem:[%s7 + $0x78] sm:$0xff] %vm2087, %v4898
  // Predicated region
  $region30: #{downblock_forward.1} parent=0 // pred_check
    _
  $region31: #{downblock_forward.1} parent=0 // pred_check_branch
    %4916 = sbr.rel (0) target = $region33
  $region32: #{downblock_forward.1} parent=0 // pred_region
    _
  $region33: #{downblock_forward.1} parent=0 // pred_fallthru
    _
  // Predicated region
  $region34: #{downblock_forward.1} parent=0 // pred_check
    _
  $region35: #{downblock_forward.1} parent=0 // pred_check_branch
    %4918 = sbr.rel (0) target = $region37
  $region36: #{downblock_forward.1} parent=0 // pred_region
    _
  $region37: #{downblock_forward.1} parent=0 // pred_fallthru
    _

</llo_original>
